<compile_context>
chip_gen: v7x
topology: tpu7x:2x2x1
jax: 0.10.0
libtpu: 0.0.40
codegen_flags: <defaults>
</compile_context>

<pallas_src>
import jax
import jax.numpy as jnp
from jax import lax
from jax.experimental import pallas as pl
from jax.experimental.pallas import tpu as pltpu


# ------------------------------ fused kernel -------------------------------

def _make_fused_kernel(H, W, Ho, Wo, stride, Cin, D, has_sc_conv):
    """Whole bottleneck_IR_SE block for one image (grid iterates over batch)."""
    f32 = jnp.float32
    bf16 = jnp.bfloat16

    def kernel(*args):
        if has_sc_conv:
            (x_ref, xs_ref, bn1_s_ref, bn1_b_ref, w1_ref, alpha_ref, w2_ref,
             bn2_s_ref, bn2_b_ref, sew1_ref, sew2_ref,
             scw_ref, scs_ref, scb_ref,
             o_ref, xp_ref, yp_ref) = args
        else:
            (x_ref, xs_ref, bn1_s_ref, bn1_b_ref, w1_ref, alpha_ref, w2_ref,
             bn2_s_ref, bn2_b_ref, sew1_ref, sew2_ref,
             o_ref, xp_ref, yp_ref) = args

        # ---- BN1 (eval-mode affine) written into a zero-padded VMEM scratch.
        #      Padding stays exactly zero because the bias is applied before
        #      padding (matches PyTorch: pad happens inside the conv). ----
        xp_ref[...] = jnp.zeros_like(xp_ref)
        xp_ref[1:H + 1, 1:W + 1, :] = (
            x_ref[0] * bn1_s_ref[...] + bn1_b_ref[...])          # (H, W, Cin)

        # ---- conv1: 3x3, stride 1, as 9 shifted-slice matmuls.
        #      bf16 operands on the MXU, f32 accumulation. ----
        acc1 = jnp.zeros((H * W, D), f32)
        for kh in range(3):
            for kw in range(3):
                a = xp_ref[kh:kh + H, kw:kw + W, :].reshape(H * W, Cin)
                acc1 = acc1 + jnp.dot(a.astype(bf16), w1_ref[kh * 3 + kw],
                                      preferred_element_type=f32)

        # ---- PReLU (per-channel), f32 epilogue on the VPU ----
        alpha = alpha_ref[...]                                   # (1, D)
        y = jnp.where(acc1 > 0, acc1, acc1 * alpha)

        # ---- stage conv1 output in a zero-padded VMEM scratch (never HBM) ----
        yp_ref[...] = jnp.zeros_like(yp_ref)
        yp_ref[1:H + 1, 1:W + 1, :] = y.reshape(H, W, D)

        # ---- conv2: 3x3 with `stride`, as 9 (strided-)slice matmuls ----
        acc2 = jnp.zeros((Ho * Wo, D), f32)
        for kh in range(3):
            for kw in range(3):
                if stride == 1:
                    b = yp_ref[kh:kh + Ho, kw:kw + Wo, :]
                else:
                    # static strided read: rows kh, kh+s, ... / cols kw, kw+s, ...
                    b = yp_ref[pl.ds(kh, Ho, stride),
                               pl.ds(kw, Wo, stride), :]
                acc2 = acc2 + jnp.dot(b.reshape(Ho * Wo, D).astype(bf16),
                                      w2_ref[kh * 3 + kw],
                                      preferred_element_type=f32)

        # ---- BN2 affine (f32) ----
        z = acc2 * bn2_s_ref[...] + bn2_b_ref[...]               # (Ho*Wo, D)

        # ---- SE: global avg-pool -> fc1 -> relu -> fc2 -> sigmoid -> scale ----
        pooled = jnp.mean(z, axis=0, keepdims=True)              # (1, D)
        h = jnp.maximum(
            jnp.dot(pooled, sew1_ref[...], preferred_element_type=f32), 0.0)
        s = jax.nn.sigmoid(
            jnp.dot(h, sew2_ref[...], preferred_element_type=f32))   # (1, D)

        # ---- shortcut branch (fused) + residual add ----
        if has_sc_conv:
            xs = xs_ref[0].reshape(Ho * Wo, Cin)
            sc = jnp.dot(xs.astype(bf16), scw_ref[...],
                         preferred_element_type=f32)
            sc = sc * scs_ref[...] + scb_ref[...]
        else:   # in_channel == depth: MaxPool2d(1, stride) == strided pick
            sc = xs_ref[0].reshape(Ho * Wo, D)

        o_ref[...] = (z * s + sc).reshape(1, Ho, Wo, D)

    return kernel


# ----------------------------- wrapper (glue) ------------------------------

def _const_spec(shape):
    nd = len(shape)
    return pl.BlockSpec(shape, lambda *_: (0,) * nd)


def bottleneck_ir_se_forward(x_nchw, params, stride):
    """Forward pass of bottleneck_IR_SE.  Input/output are NCHW (PyTorch)."""
    x = jnp.transpose(x_nchw, (0, 2, 3, 1)).astype(jnp.float32)   # NHWC
    N, H, W, Cin = x.shape
    D = params['conv1_w'].shape[-1]
    Ho = (H + 2 - 3) // stride + 1
    Wo = (W + 2 - 3) // stride + 1

    # Strided spatial pick feeding the shortcut (MaxPool2d(1,stride) pick, or
    # the input of the strided 1x1 conv).  Tiny XLA slice; the 1x1 conv + BN
    # themselves run inside the kernel.
    xs = x[:, 0:(Ho - 1) * stride + 1:stride,
           0:(Wo - 1) * stride + 1:stride, :]

    has_sc_conv = params['shortcut_conv_w'] is not None

    w1 = params['conv1_w'].reshape(9, Cin, D).astype(jnp.bfloat16)
    w2 = params['conv2_w'].reshape(9, D, D).astype(jnp.bfloat16)
    cr = params['se_w1'].shape[1]

    inputs = [
        x, xs,
        params['bn1_scale'].reshape(1, Cin),
        params['bn1_bias'].reshape(1, Cin),
        w1,
        params['prelu_alpha'].reshape(1, D),
        w2,
        params['bn2_scale'].reshape(1, D),
        params['bn2_bias'].reshape(1, D),
        params['se_w1'],
        params['se_w2'],
    ]
    in_specs = [
        pl.BlockSpec((1, H, W, Cin), lambda n: (n, 0, 0, 0)),
        pl.BlockSpec((1, Ho, Wo, Cin), lambda n: (n, 0, 0, 0)),
        _const_spec((1, Cin)), _const_spec((1, Cin)),
        _const_spec((9, Cin, D)),
        _const_spec((1, D)),
        _const_spec((9, D, D)),
        _const_spec((1, D)), _const_spec((1, D)),
        _const_spec((D, cr)), _const_spec((cr, D)),
    ]
    if has_sc_conv:
        inputs += [
            params['shortcut_conv_w'].astype(jnp.bfloat16),
            params['sc_bn_scale'].reshape(1, D),
            params['sc_bn_bias'].reshape(1, D),
        ]
        in_specs += [_const_spec((Cin, D)),
                     _const_spec((1, D)), _const_spec((1, D))]

    out = pl.pallas_call(
        _make_fused_kernel(H, W, Ho, Wo, stride, Cin, D, has_sc_conv),
        grid=(N,),
        in_specs=in_specs,
        out_specs=pl.BlockSpec((1, Ho, Wo, D), lambda n: (n, 0, 0, 0)),
        out_shape=jax.ShapeDtypeStruct((N, Ho, Wo, D), jnp.float32),
        scratch_shapes=[pltpu.VMEM((H + 2, W + 2, Cin), jnp.float32),
                        pltpu.VMEM((H + 2, W + 2, D), jnp.float32)],
        compiler_params=pltpu.CompilerParams(
            dimension_semantics=("parallel",)),
    )(*inputs)

    return jnp.transpose(out, (0, 3, 1, 2))                      # back to NCHW


# ------------------------- deterministic parameters -------------------------

def make_params(key, in_channel, depth, reduction=16, eps=1e-5):
    ks = list(jax.random.split(key, 24))

    def nxt():
        return ks.pop()

    def bn_fold(c):
        gamma = 1.0 + 0.1 * jax.random.normal(nxt(), (c,), jnp.float32)
        beta = 0.1 * jax.random.normal(nxt(), (c,), jnp.float32)
        mean = 0.1 * jax.random.normal(nxt(), (c,), jnp.float32)
        var = 0.5 + jax.nn.softplus(jax.random.normal(nxt(), (c,), jnp.float32))
        scale = gamma * lax.rsqrt(var + eps)
        bias = beta - mean * scale
        return scale, bias

    p = {}
    p['bn1_scale'], p['bn1_bias'] = bn_fold(in_channel)
    p['conv1_w'] = 0.05 * jax.random.normal(nxt(), (3, 3, in_channel, depth), jnp.float32)
    p['prelu_alpha'] = jnp.full((depth,), 0.25, jnp.float32)   # PyTorch PReLU default
    p['conv2_w'] = 0.05 * jax.random.normal(nxt(), (3, 3, depth, depth), jnp.float32)
    p['bn2_scale'], p['bn2_bias'] = bn_fold(depth)
    cr = depth // reduction
    p['se_w1'] = 0.2 * jax.random.normal(nxt(), (depth, cr), jnp.float32)
    p['se_w2'] = 0.2 * jax.random.normal(nxt(), (cr, depth), jnp.float32)
    if in_channel == depth:
        p['shortcut_conv_w'] = None
        p['sc_bn_scale'] = None
        p['sc_bn_bias'] = None
    else:
        p['shortcut_conv_w'] = 0.1 * jax.random.normal(
            nxt(), (in_channel, depth), jnp.float32)
        p['sc_bn_scale'], p['sc_bn_bias'] = bn_fold(depth)
    return p


# ------------------------- pure-JAX reference (check) ------------------------

def reference_forward(x_nchw, params, stride, in_channel, depth):
    def affine(x, s, b):
        return x * s.reshape(1, -1, 1, 1) + b.reshape(1, -1, 1, 1)

    def conv(x, w_hwio, s, pad):
        w_oihw = jnp.transpose(w_hwio, (3, 2, 0, 1))
        return lax.conv_general_dilated(
            x, w_oihw, (s, s), [(pad, pad), (pad, pad)],
            dimension_numbers=('NCHW', 'OIHW', 'NCHW'),
            precision=lax.Precision.HIGHEST)

    if params['shortcut_conv_w'] is None:
        sc = x_nchw[:, :, ::stride, ::stride]
    else:
        w_hwio = params['shortcut_conv_w'].reshape(1, 1, in_channel, depth)
        sc = affine(conv(x_nchw, w_hwio, stride, 0),
                    params['sc_bn_scale'], params['sc_bn_bias'])

    y = affine(x_nchw, params['bn1_scale'], params['bn1_bias'])
    y = conv(y, params['conv1_w'], 1, 1)
    a = params['prelu_alpha'].reshape(1, -1, 1, 1)
    y = jnp.where(y > 0, y, y * a)
    y = conv(y, params['conv2_w'], stride, 1)
    y = affine(y, params['bn2_scale'], params['bn2_bias'])
    p = jnp.mean(y, axis=(2, 3))
    h = jnp.maximum(jnp.dot(p, params['se_w1'], precision=lax.Precision.HIGHEST), 0.0)
    s = jax.nn.sigmoid(jnp.dot(h, params['se_w2'], precision=lax.Precision.HIGHEST))
    return y * s[:, :, None, None] + sc


# ----------------------------------- main -----------------------------------

def _run_case(key, in_channel, depth, stride, N, H, W):
    kx, kp = jax.random.split(key)
    x = jax.random.normal(kx, (N, in_channel, H, W), jnp.float32)
    params = make_params(kp, in_channel, depth)

    fwd = jax.jit(lambda xx: bottleneck_ir_se_forward(xx, params, stride))
    out = jax.block_until_ready(fwd(x))

    ref = reference_forward(x, params, stride, in_channel, depth)
    Ho = (H + 2 - 3) // stride + 1
    Wo = (W + 2 - 3) // stride + 1
    assert out.shape == ref.shape == (N, depth, Ho, Wo), out.shape
    rel_err = float(jnp.max(jnp.abs(out - ref)) / (jnp.max(jnp.abs(ref)) + 1e-6))
    assert rel_err < 3e-2, f"relative error too large: {rel_err}"


if __name__ == "__main__":
    key = jax.random.PRNGKey(0)
    k1, k2 = jax.random.split(key)
    # projection-shortcut case (in_channel != depth), strided
    _run_case(k1, in_channel=32, depth=64, stride=2, N=2, H=16, W=16)
    # identity-shortcut case (in_channel == depth), stride 1
    _run_case(k2, in_channel=64, depth=64, stride=1, N=2, H=16, W=16)
    print("KERNEL_OK")
</pallas_src>

<mosaic_0001>
module attributes {stable_mosaic.version = 11 : i64} {
  func.func @kernel(%arg0: i32, %arg1: memref<1x16x16x32xf32, #tpu.memory_space<vmem>>, %arg2: memref<1x8x8x32xf32, #tpu.memory_space<vmem>>, %arg3: memref<1x32xf32, #tpu.memory_space<vmem>>, %arg4: memref<1x32xf32, #tpu.memory_space<vmem>>, %arg5: memref<9x32x64xbf16, #tpu.memory_space<vmem>>, %arg6: memref<1x64xf32, #tpu.memory_space<vmem>>, %arg7: memref<9x64x64xbf16, #tpu.memory_space<vmem>>, %arg8: memref<1x64xf32, #tpu.memory_space<vmem>>, %arg9: memref<1x64xf32, #tpu.memory_space<vmem>>, %arg10: memref<64x4xf32, #tpu.memory_space<vmem>>, %arg11: memref<4x64xf32, #tpu.memory_space<vmem>>, %arg12: memref<32x64xbf16, #tpu.memory_space<vmem>>, %arg13: memref<1x64xf32, #tpu.memory_space<vmem>>, %arg14: memref<1x64xf32, #tpu.memory_space<vmem>>, %arg15: memref<1x8x8x64xf32, #tpu.memory_space<vmem>>, %arg16: memref<18x18x32xf32, #tpu.memory_space<vmem>>, %arg17: memref<18x18x64xf32, #tpu.memory_space<vmem>>) attributes {dimension_semantics = [#tpu.dimension_semantics<parallel>], iteration_bounds = array<i64: 2>, scalar_prefetch = 0 : i64, scratch_operands = 2 : i64, tpu.core_type = #tpu.core_type<tc>, window_params = [{transform_indices = @transform_0, window_bounds = array<i64: 1, 16, 16, 32>}, {transform_indices = @transform_1, window_bounds = array<i64: 1, 8, 8, 32>}, {pipeline_mode = #tpu.pipeline_mode<synchronous>, transform_indices = @transform_2, window_bounds = array<i64: 1, 32>}, {pipeline_mode = #tpu.pipeline_mode<synchronous>, transform_indices = @transform_3, window_bounds = array<i64: 1, 32>}, {pipeline_mode = #tpu.pipeline_mode<synchronous>, transform_indices = @transform_4, window_bounds = array<i64: 9, 32, 64>}, {pipeline_mode = #tpu.pipeline_mode<synchronous>, transform_indices = @transform_5, window_bounds = array<i64: 1, 64>}, {pipeline_mode = #tpu.pipeline_mode<synchronous>, transform_indices = @transform_6, window_bounds = array<i64: 9, 64, 64>}, {pipeline_mode = #tpu.pipeline_mode<synchronous>, transform_indices = @transform_7, window_bounds = array<i64: 1, 64>}, {pipeline_mode = #tpu.pipeline_mode<synchronous>, transform_indices = @transform_8, window_bounds = array<i64: 1, 64>}, {pipeline_mode = #tpu.pipeline_mode<synchronous>, transform_indices = @transform_9, window_bounds = array<i64: 64, 4>}, {pipeline_mode = #tpu.pipeline_mode<synchronous>, transform_indices = @transform_10, window_bounds = array<i64: 4, 64>}, {pipeline_mode = #tpu.pipeline_mode<synchronous>, transform_indices = @transform_11, window_bounds = array<i64: 32, 64>}, {pipeline_mode = #tpu.pipeline_mode<synchronous>, transform_indices = @transform_12, window_bounds = array<i64: 1, 64>}, {pipeline_mode = #tpu.pipeline_mode<synchronous>, transform_indices = @transform_13, window_bounds = array<i64: 1, 64>}, {transform_indices = @transform_14, window_bounds = array<i64: 1, 8, 8, 64>}]} {
    %cst = arith.constant 0.000000e+00 : f32
    %0 = vector.broadcast %cst : f32 to vector<18x18x32xf32>
    %c0 = arith.constant 0 : index
    %c0_0 = arith.constant 0 : index
    %c0_1 = arith.constant 0 : index
    %1 = vector.load %arg16[%c0, %c0_0, %c0_1] : memref<18x18x32xf32, #tpu.memory_space<vmem>>, vector<18x18x32xf32>
    tpu.vector_store %arg16[%c0, %c0_0, %c0_1], %0 {strides = array<i32>} : memref<18x18x32xf32, #tpu.memory_space<vmem>>, vector<18x18x32xf32>,
    %c0_2 = arith.constant 0 : index
    %c0_3 = arith.constant 0 : index
    %c0_4 = arith.constant 0 : index
    %c0_5 = arith.constant 0 : index
    %2 = vector.load %arg1[%c0_2, %c0_3, %c0_4, %c0_5] : memref<1x16x16x32xf32, #tpu.memory_space<vmem>>, vector<1x16x16x32xf32>
    %3 = vector.shape_cast %2 : vector<1x16x16x32xf32> to vector<16x16x32xf32>
    %c0_6 = arith.constant 0 : index
    %c0_7 = arith.constant 0 : index
    %4 = vector.load %arg3[%c0_6, %c0_7] : memref<1x32xf32, #tpu.memory_space<vmem>>, vector<1x32xf32>
    %5 = vector.shape_cast %4 : vector<1x32xf32> to vector<1x1x32xf32>
    %6 = vector.broadcast %5 : vector<1x1x32xf32> to vector<16x16x32xf32>
    %7 = arith.mulf %3, %6 : vector<16x16x32xf32>
    %c0_8 = arith.constant 0 : index
    %c0_9 = arith.constant 0 : index
    %8 = vector.load %arg4[%c0_8, %c0_9] : memref<1x32xf32, #tpu.memory_space<vmem>>, vector<1x32xf32>
    %9 = vector.shape_cast %8 : vector<1x32xf32> to vector<1x1x32xf32>
    %10 = vector.broadcast %9 : vector<1x1x32xf32> to vector<16x16x32xf32>
    %11 = arith.addf %7, %10 : vector<16x16x32xf32>
    %c1 = arith.constant 1 : index
    %c1_10 = arith.constant 1 : index
    %c0_11 = arith.constant 0 : index
    %12 = vector.load %arg16[%c1, %c1_10, %c0_11] : memref<18x18x32xf32, #tpu.memory_space<vmem>>, vector<16x16x32xf32>
    tpu.vector_store %arg16[%c1, %c1_10, %c0_11], %11 {strides = array<i32>} : memref<18x18x32xf32, #tpu.memory_space<vmem>>, vector<16x16x32xf32>,
    %cst_12 = arith.constant 0.000000e+00 : f32
    %13 = vector.broadcast %cst_12 : f32 to vector<256x64xf32>
    %c0_13 = arith.constant 0 : index
    %c0_14 = arith.constant 0 : index
    %c0_15 = arith.constant 0 : index
    %14 = vector.load %arg16[%c0_13, %c0_14, %c0_15] : memref<18x18x32xf32, #tpu.memory_space<vmem>>, vector<16x16x32xf32>
    %15 = vector.shape_cast %14 : vector<16x16x32xf32> to vector<256x32xf32>
    %16 = arith.truncf %15 : vector<256x32xf32> to vector<256x32xbf16>
    %c0_16 = arith.constant 0 : index
    %c0_17 = arith.constant 0 : index
    %c0_18 = arith.constant 0 : index
    %17 = vector.load %arg5[%c0_16, %c0_17, %c0_18] : memref<9x32x64xbf16, #tpu.memory_space<vmem>>, vector<1x32x64xbf16>
    %18 = vector.shape_cast %17 : vector<1x32x64xbf16> to vector<32x64xbf16>
    %cst_19 = arith.constant dense<0.000000e+00> : vector<256x64xf32>
    %19 = tpu.matmul %16, %18, %cst_19 {dimension_numbers = #tpu.dot_dimension_numbers<[1], [0], [0], [1], [0, 0, 1, 1], [], []>} : vector<256x32xbf16>, vector<32x64xbf16>, vector<256x64xf32> -> vector<256x64xf32>
    %20 = arith.addf %13, %19 : vector<256x64xf32>
    %c0_20 = arith.constant 0 : index
    %c1_21 = arith.constant 1 : index
    %c0_22 = arith.constant 0 : index
    %21 = vector.load %arg16[%c0_20, %c1_21, %c0_22] : memref<18x18x32xf32, #tpu.memory_space<vmem>>, vector<16x16x32xf32>
    %22 = vector.shape_cast %21 : vector<16x16x32xf32> to vector<256x32xf32>
    %23 = arith.truncf %22 : vector<256x32xf32> to vector<256x32xbf16>
    %c1_23 = arith.constant 1 : index
    %c0_24 = arith.constant 0 : index
    %c0_25 = arith.constant 0 : index
    %24 = vector.load %arg5[%c1_23, %c0_24, %c0_25] : memref<9x32x64xbf16, #tpu.memory_space<vmem>>, vector<1x32x64xbf16>
    %25 = vector.shape_cast %24 : vector<1x32x64xbf16> to vector<32x64xbf16>
    %cst_26 = arith.constant dense<0.000000e+00> : vector<256x64xf32>
    %26 = tpu.matmul %23, %25, %cst_26 {dimension_numbers = #tpu.dot_dimension_numbers<[1], [0], [0], [1], [0, 0, 1, 1], [], []>} : vector<256x32xbf16>, vector<32x64xbf16>, vector<256x64xf32> -> vector<256x64xf32>
    %27 = arith.addf %20, %26 : vector<256x64xf32>
    %c0_27 = arith.constant 0 : index
    %c2 = arith.constant 2 : index
    %c0_28 = arith.constant 0 : index
    %28 = vector.load %arg16[%c0_27, %c2, %c0_28] : memref<18x18x32xf32, #tpu.memory_space<vmem>>, vector<16x16x32xf32>
    %29 = vector.shape_cast %28 : vector<16x16x32xf32> to vector<256x32xf32>
    %30 = arith.truncf %29 : vector<256x32xf32> to vector<256x32xbf16>
    %c2_29 = arith.constant 2 : index
    %c0_30 = arith.constant 0 : index
    %c0_31 = arith.constant 0 : index
    %31 = vector.load %arg5[%c2_29, %c0_30, %c0_31] : memref<9x32x64xbf16, #tpu.memory_space<vmem>>, vector<1x32x64xbf16>
    %32 = vector.shape_cast %31 : vector<1x32x64xbf16> to vector<32x64xbf16>
    %cst_32 = arith.constant dense<0.000000e+00> : vector<256x64xf32>
    %33 = tpu.matmul %30, %32, %cst_32 {dimension_numbers = #tpu.dot_dimension_numbers<[1], [0], [0], [1], [0, 0, 1, 1], [], []>} : vector<256x32xbf16>, vector<32x64xbf16>, vector<256x64xf32> -> vector<256x64xf32>
    %34 = arith.addf %27, %33 : vector<256x64xf32>
    %c1_33 = arith.constant 1 : index
    %c0_34 = arith.constant 0 : index
    %c0_35 = arith.constant 0 : index
    %35 = vector.load %arg16[%c1_33, %c0_34, %c0_35] : memref<18x18x32xf32, #tpu.memory_space<vmem>>, vector<16x16x32xf32>
    %36 = vector.shape_cast %35 : vector<16x16x32xf32> to vector<256x32xf32>
    %37 = arith.truncf %36 : vector<256x32xf32> to vector<256x32xbf16>
    %c3 = arith.constant 3 : index
    %c0_36 = arith.constant 0 : index
    %c0_37 = arith.constant 0 : index
    %38 = vector.load %arg5[%c3, %c0_36, %c0_37] : memref<9x32x64xbf16, #tpu.memory_space<vmem>>, vector<1x32x64xbf16>
    %39 = vector.shape_cast %38 : vector<1x32x64xbf16> to vector<32x64xbf16>
    %cst_38 = arith.constant dense<0.000000e+00> : vector<256x64xf32>
    %40 = tpu.matmul %37, %39, %cst_38 {dimension_numbers = #tpu.dot_dimension_numbers<[1], [0], [0], [1], [0, 0, 1, 1], [], []>} : vector<256x32xbf16>, vector<32x64xbf16>, vector<256x64xf32> -> vector<256x64xf32>
    %41 = arith.addf %34, %40 : vector<256x64xf32>
    %c1_39 = arith.constant 1 : index
    %c1_40 = arith.constant 1 : index
    %c0_41 = arith.constant 0 : index
    %42 = vector.load %arg16[%c1_39, %c1_40, %c0_41] : memref<18x18x32xf32, #tpu.memory_space<vmem>>, vector<16x16x32xf32>
    %43 = vector.shape_cast %42 : vector<16x16x32xf32> to vector<256x32xf32>
    %44 = arith.truncf %43 : vector<256x32xf32> to vector<256x32xbf16>
    %c4 = arith.constant 4 : index
    %c0_42 = arith.constant 0 : index
    %c0_43 = arith.constant 0 : index
    %45 = vector.load %arg5[%c4, %c0_42, %c0_43] : memref<9x32x64xbf16, #tpu.memory_space<vmem>>, vector<1x32x64xbf16>
    %46 = vector.shape_cast %45 : vector<1x32x64xbf16> to vector<32x64xbf16>
    %cst_44 = arith.constant dense<0.000000e+00> : vector<256x64xf32>
    %47 = tpu.matmul %44, %46, %cst_44 {dimension_numbers = #tpu.dot_dimension_numbers<[1], [0], [0], [1], [0, 0, 1, 1], [], []>} : vector<256x32xbf16>, vector<32x64xbf16>, vector<256x64xf32> -> vector<256x64xf32>
    %48 = arith.addf %41, %47 : vector<256x64xf32>
    %c1_45 = arith.constant 1 : index
    %c2_46 = arith.constant 2 : index
    %c0_47 = arith.constant 0 : index
    %49 = vector.load %arg16[%c1_45, %c2_46, %c0_47] : memref<18x18x32xf32, #tpu.memory_space<vmem>>, vector<16x16x32xf32>
    %50 = vector.shape_cast %49 : vector<16x16x32xf32> to vector<256x32xf32>
    %51 = arith.truncf %50 : vector<256x32xf32> to vector<256x32xbf16>
    %c5 = arith.constant 5 : index
    %c0_48 = arith.constant 0 : index
    %c0_49 = arith.constant 0 : index
    %52 = vector.load %arg5[%c5, %c0_48, %c0_49] : memref<9x32x64xbf16, #tpu.memory_space<vmem>>, vector<1x32x64xbf16>
    %53 = vector.shape_cast %52 : vector<1x32x64xbf16> to vector<32x64xbf16>
    %cst_50 = arith.constant dense<0.000000e+00> : vector<256x64xf32>
    %54 = tpu.matmul %51, %53, %cst_50 {dimension_numbers = #tpu.dot_dimension_numbers<[1], [0], [0], [1], [0, 0, 1, 1], [], []>} : vector<256x32xbf16>, vector<32x64xbf16>, vector<256x64xf32> -> vector<256x64xf32>
    %55 = arith.addf %48, %54 : vector<256x64xf32>
    %c2_51 = arith.constant 2 : index
    %c0_52 = arith.constant 0 : index
    %c0_53 = arith.constant 0 : index
    %56 = vector.load %arg16[%c2_51, %c0_52, %c0_53] : memref<18x18x32xf32, #tpu.memory_space<vmem>>, vector<16x16x32xf32>
    %57 = vector.shape_cast %56 : vector<16x16x32xf32> to vector<256x32xf32>
    %58 = arith.truncf %57 : vector<256x32xf32> to vector<256x32xbf16>
    %c6 = arith.constant 6 : index
    %c0_54 = arith.constant 0 : index
    %c0_55 = arith.constant 0 : index
    %59 = vector.load %arg5[%c6, %c0_54, %c0_55] : memref<9x32x64xbf16, #tpu.memory_space<vmem>>, vector<1x32x64xbf16>
    %60 = vector.shape_cast %59 : vector<1x32x64xbf16> to vector<32x64xbf16>
    %cst_56 = arith.constant dense<0.000000e+00> : vector<256x64xf32>
    %61 = tpu.matmul %58, %60, %cst_56 {dimension_numbers = #tpu.dot_dimension_numbers<[1], [0], [0], [1], [0, 0, 1, 1], [], []>} : vector<256x32xbf16>, vector<32x64xbf16>, vector<256x64xf32> -> vector<256x64xf32>
    %62 = arith.addf %55, %61 : vector<256x64xf32>
    %c2_57 = arith.constant 2 : index
    %c1_58 = arith.constant 1 : index
    %c0_59 = arith.constant 0 : index
    %63 = vector.load %arg16[%c2_57, %c1_58, %c0_59] : memref<18x18x32xf32, #tpu.memory_space<vmem>>, vector<16x16x32xf32>
    %64 = vector.shape_cast %63 : vector<16x16x32xf32> to vector<256x32xf32>
    %65 = arith.truncf %64 : vector<256x32xf32> to vector<256x32xbf16>
    %c7 = arith.constant 7 : index
    %c0_60 = arith.constant 0 : index
    %c0_61 = arith.constant 0 : index
    %66 = vector.load %arg5[%c7, %c0_60, %c0_61] : memref<9x32x64xbf16, #tpu.memory_space<vmem>>, vector<1x32x64xbf16>
    %67 = vector.shape_cast %66 : vector<1x32x64xbf16> to vector<32x64xbf16>
    %cst_62 = arith.constant dense<0.000000e+00> : vector<256x64xf32>
    %68 = tpu.matmul %65, %67, %cst_62 {dimension_numbers = #tpu.dot_dimension_numbers<[1], [0], [0], [1], [0, 0, 1, 1], [], []>} : vector<256x32xbf16>, vector<32x64xbf16>, vector<256x64xf32> -> vector<256x64xf32>
    %69 = arith.addf %62, %68 : vector<256x64xf32>
    %c2_63 = arith.constant 2 : index
    %c2_64 = arith.constant 2 : index
    %c0_65 = arith.constant 0 : index
    %70 = vector.load %arg16[%c2_63, %c2_64, %c0_65] : memref<18x18x32xf32, #tpu.memory_space<vmem>>, vector<16x16x32xf32>
    %71 = vector.shape_cast %70 : vector<16x16x32xf32> to vector<256x32xf32>
    %72 = arith.truncf %71 : vector<256x32xf32> to vector<256x32xbf16>
    %c8 = arith.constant 8 : index
    %c0_66 = arith.constant 0 : index
    %c0_67 = arith.constant 0 : index
    %73 = vector.load %arg5[%c8, %c0_66, %c0_67] : memref<9x32x64xbf16, #tpu.memory_space<vmem>>, vector<1x32x64xbf16>
    %74 = vector.shape_cast %73 : vector<1x32x64xbf16> to vector<32x64xbf16>
    %cst_68 = arith.constant dense<0.000000e+00> : vector<256x64xf32>
    %75 = tpu.matmul %72, %74, %cst_68 {dimension_numbers = #tpu.dot_dimension_numbers<[1], [0], [0], [1], [0, 0, 1, 1], [], []>} : vector<256x32xbf16>, vector<32x64xbf16>, vector<256x64xf32> -> vector<256x64xf32>
    %76 = arith.addf %69, %75 : vector<256x64xf32>
    %c0_69 = arith.constant 0 : index
    %c0_70 = arith.constant 0 : index
    %77 = vector.load %arg6[%c0_69, %c0_70] : memref<1x64xf32, #tpu.memory_space<vmem>>, vector<1x64xf32>
    %cst_71 = arith.constant 0.000000e+00 : f32
    %78 = vector.broadcast %cst_71 : f32 to vector<256x64xf32>
    %79 = arith.cmpf ogt, %76, %78 : vector<256x64xf32>
    %80 = vector.broadcast %77 : vector<1x64xf32> to vector<256x64xf32>
    %81 = arith.mulf %76, %80 : vector<256x64xf32>
    %82 = arith.select %79, %76, %81 : vector<256x64xi1>, vector<256x64xf32>
    %cst_72 = arith.constant 0.000000e+00 : f32
    %83 = vector.broadcast %cst_72 : f32 to vector<18x18x64xf32>
    %c0_73 = arith.constant 0 : index
    %c0_74 = arith.constant 0 : index
    %c0_75 = arith.constant 0 : index
    %84 = vector.load %arg17[%c0_73, %c0_74, %c0_75] : memref<18x18x64xf32, #tpu.memory_space<vmem>>, vector<18x18x64xf32>
    tpu.vector_store %arg17[%c0_73, %c0_74, %c0_75], %83 {strides = array<i32>} : memref<18x18x64xf32, #tpu.memory_space<vmem>>, vector<18x18x64xf32>,
    %85 = vector.shape_cast %82 : vector<256x64xf32> to vector<16x16x64xf32>
    %c1_76 = arith.constant 1 : index
    %c1_77 = arith.constant 1 : index
    %c0_78 = arith.constant 0 : index
    %86 = vector.load %arg17[%c1_76, %c1_77, %c0_78] : memref<18x18x64xf32, #tpu.memory_space<vmem>>, vector<16x16x64xf32>
    tpu.vector_store %arg17[%c1_76, %c1_77, %c0_78], %85 {strides = array<i32>} : memref<18x18x64xf32, #tpu.memory_space<vmem>>, vector<16x16x64xf32>,
    %cst_79 = arith.constant 0.000000e+00 : f32
    %87 = vector.broadcast %cst_79 : f32 to vector<64x64xf32>
    %c0_80 = arith.constant 0 : index
    %c0_81 = arith.constant 0 : index
    %c0_82 = arith.constant 0 : index
    %88 = tpu.strided_load %arg17[%c0_80, %c0_81, %c0_82] {strides = array<i32: 2, 2, 1>} : memref<18x18x64xf32, #tpu.memory_space<vmem>>, vector<8x8x64xf32>
    %89 = vector.shape_cast %88 : vector<8x8x64xf32> to vector<64x64xf32>
    %90 = arith.truncf %89 : vector<64x64xf32> to vector<64x64xbf16>
    %c0_83 = arith.constant 0 : index
    %c0_84 = arith.constant 0 : index
    %c0_85 = arith.constant 0 : index
    %91 = vector.load %arg7[%c0_83, %c0_84, %c0_85] : memref<9x64x64xbf16, #tpu.memory_space<vmem>>, vector<1x64x64xbf16>
    %92 = vector.shape_cast %91 : vector<1x64x64xbf16> to vector<64x64xbf16>
    %cst_86 = arith.constant dense<0.000000e+00> : vector<64x64xf32>
    %93 = tpu.matmul %90, %92, %cst_86 {dimension_numbers = #tpu.dot_dimension_numbers<[1], [0], [0], [1], [0, 0, 1, 1], [], []>} : vector<64x64xbf16>, vector<64x64xbf16>, vector<64x64xf32> -> vector<64x64xf32>
    %94 = arith.addf %87, %93 : vector<64x64xf32>
    %c0_87 = arith.constant 0 : index
    %c1_88 = arith.constant 1 : index
    %c0_89 = arith.constant 0 : index
    %95 = tpu.strided_load %arg17[%c0_87, %c1_88, %c0_89] {strides = array<i32: 2, 2, 1>} : memref<18x18x64xf32, #tpu.memory_space<vmem>>, vector<8x8x64xf32>
    %96 = vector.shape_cast %95 : vector<8x8x64xf32> to vector<64x64xf32>
    %97 = arith.truncf %96 : vector<64x64xf32> to vector<64x64xbf16>
    %c1_90 = arith.constant 1 : index
    %c0_91 = arith.constant 0 : index
    %c0_92 = arith.constant 0 : index
    %98 = vector.load %arg7[%c1_90, %c0_91, %c0_92] : memref<9x64x64xbf16, #tpu.memory_space<vmem>>, vector<1x64x64xbf16>
    %99 = vector.shape_cast %98 : vector<1x64x64xbf16> to vector<64x64xbf16>
    %cst_93 = arith.constant dense<0.000000e+00> : vector<64x64xf32>
    %100 = tpu.matmul %97, %99, %cst_93 {dimension_numbers = #tpu.dot_dimension_numbers<[1], [0], [0], [1], [0, 0, 1, 1], [], []>} : vector<64x64xbf16>, vector<64x64xbf16>, vector<64x64xf32> -> vector<64x64xf32>
    %101 = arith.addf %94, %100 : vector<64x64xf32>
    %c0_94 = arith.constant 0 : index
    %c2_95 = arith.constant 2 : index
    %c0_96 = arith.constant 0 : index
    %102 = tpu.strided_load %arg17[%c0_94, %c2_95, %c0_96] {strides = array<i32: 2, 2, 1>} : memref<18x18x64xf32, #tpu.memory_space<vmem>>, vector<8x8x64xf32>
    %103 = vector.shape_cast %102 : vector<8x8x64xf32> to vector<64x64xf32>
    %104 = arith.truncf %103 : vector<64x64xf32> to vector<64x64xbf16>
    %c2_97 = arith.constant 2 : index
    %c0_98 = arith.constant 0 : index
    %c0_99 = arith.constant 0 : index
    %105 = vector.load %arg7[%c2_97, %c0_98, %c0_99] : memref<9x64x64xbf16, #tpu.memory_space<vmem>>, vector<1x64x64xbf16>
    %106 = vector.shape_cast %105 : vector<1x64x64xbf16> to vector<64x64xbf16>
    %cst_100 = arith.constant dense<0.000000e+00> : vector<64x64xf32>
    %107 = tpu.matmul %104, %106, %cst_100 {dimension_numbers = #tpu.dot_dimension_numbers<[1], [0], [0], [1], [0, 0, 1, 1], [], []>} : vector<64x64xbf16>, vector<64x64xbf16>, vector<64x64xf32> -> vector<64x64xf32>
    %108 = arith.addf %101, %107 : vector<64x64xf32>
    %c1_101 = arith.constant 1 : index
    %c0_102 = arith.constant 0 : index
    %c0_103 = arith.constant 0 : index
    %109 = tpu.strided_load %arg17[%c1_101, %c0_102, %c0_103] {strides = array<i32: 2, 2, 1>} : memref<18x18x64xf32, #tpu.memory_space<vmem>>, vector<8x8x64xf32>
    %110 = vector.shape_cast %109 : vector<8x8x64xf32> to vector<64x64xf32>
    %111 = arith.truncf %110 : vector<64x64xf32> to vector<64x64xbf16>
    %c3_104 = arith.constant 3 : index
    %c0_105 = arith.constant 0 : index
    %c0_106 = arith.constant 0 : index
    %112 = vector.load %arg7[%c3_104, %c0_105, %c0_106] : memref<9x64x64xbf16, #tpu.memory_space<vmem>>, vector<1x64x64xbf16>
    %113 = vector.shape_cast %112 : vector<1x64x64xbf16> to vector<64x64xbf16>
    %cst_107 = arith.constant dense<0.000000e+00> : vector<64x64xf32>
    %114 = tpu.matmul %111, %113, %cst_107 {dimension_numbers = #tpu.dot_dimension_numbers<[1], [0], [0], [1], [0, 0, 1, 1], [], []>} : vector<64x64xbf16>, vector<64x64xbf16>, vector<64x64xf32> -> vector<64x64xf32>
    %115 = arith.addf %108, %114 : vector<64x64xf32>
    %c1_108 = arith.constant 1 : index
    %c1_109 = arith.constant 1 : index
    %c0_110 = arith.constant 0 : index
    %116 = tpu.strided_load %arg17[%c1_108, %c1_109, %c0_110] {strides = array<i32: 2, 2, 1>} : memref<18x18x64xf32, #tpu.memory_space<vmem>>, vector<8x8x64xf32>
    %117 = vector.shape_cast %116 : vector<8x8x64xf32> to vector<64x64xf32>
    %118 = arith.truncf %117 : vector<64x64xf32> to vector<64x64xbf16>
    %c4_111 = arith.constant 4 : index
    %c0_112 = arith.constant 0 : index
    %c0_113 = arith.constant 0 : index
    %119 = vector.load %arg7[%c4_111, %c0_112, %c0_113] : memref<9x64x64xbf16, #tpu.memory_space<vmem>>, vector<1x64x64xbf16>
    %120 = vector.shape_cast %119 : vector<1x64x64xbf16> to vector<64x64xbf16>
    %cst_114 = arith.constant dense<0.000000e+00> : vector<64x64xf32>
    %121 = tpu.matmul %118, %120, %cst_114 {dimension_numbers = #tpu.dot_dimension_numbers<[1], [0], [0], [1], [0, 0, 1, 1], [], []>} : vector<64x64xbf16>, vector<64x64xbf16>, vector<64x64xf32> -> vector<64x64xf32>
    %122 = arith.addf %115, %121 : vector<64x64xf32>
    %c1_115 = arith.constant 1 : index
    %c2_116 = arith.constant 2 : index
    %c0_117 = arith.constant 0 : index
    %123 = tpu.strided_load %arg17[%c1_115, %c2_116, %c0_117] {strides = array<i32: 2, 2, 1>} : memref<18x18x64xf32, #tpu.memory_space<vmem>>, vector<8x8x64xf32>
    %124 = vector.shape_cast %123 : vector<8x8x64xf32> to vector<64x64xf32>
    %125 = arith.truncf %124 : vector<64x64xf32> to vector<64x64xbf16>
    %c5_118 = arith.constant 5 : index
    %c0_119 = arith.constant 0 : index
    %c0_120 = arith.constant 0 : index
    %126 = vector.load %arg7[%c5_118, %c0_119, %c0_120] : memref<9x64x64xbf16, #tpu.memory_space<vmem>>, vector<1x64x64xbf16>
    %127 = vector.shape_cast %126 : vector<1x64x64xbf16> to vector<64x64xbf16>
    %cst_121 = arith.constant dense<0.000000e+00> : vector<64x64xf32>
    %128 = tpu.matmul %125, %127, %cst_121 {dimension_numbers = #tpu.dot_dimension_numbers<[1], [0], [0], [1], [0, 0, 1, 1], [], []>} : vector<64x64xbf16>, vector<64x64xbf16>, vector<64x64xf32> -> vector<64x64xf32>
    %129 = arith.addf %122, %128 : vector<64x64xf32>
    %c2_122 = arith.constant 2 : index
    %c0_123 = arith.constant 0 : index
    %c0_124 = arith.constant 0 : index
    %130 = tpu.strided_load %arg17[%c2_122, %c0_123, %c0_124] {strides = array<i32: 2, 2, 1>} : memref<18x18x64xf32, #tpu.memory_space<vmem>>, vector<8x8x64xf32>
    %131 = vector.shape_cast %130 : vector<8x8x64xf32> to vector<64x64xf32>
    %132 = arith.truncf %131 : vector<64x64xf32> to vector<64x64xbf16>
    %c6_125 = arith.constant 6 : index
    %c0_126 = arith.constant 0 : index
    %c0_127 = arith.constant 0 : index
    %133 = vector.load %arg7[%c6_125, %c0_126, %c0_127] : memref<9x64x64xbf16, #tpu.memory_space<vmem>>, vector<1x64x64xbf16>
    %134 = vector.shape_cast %133 : vector<1x64x64xbf16> to vector<64x64xbf16>
    %cst_128 = arith.constant dense<0.000000e+00> : vector<64x64xf32>
    %135 = tpu.matmul %132, %134, %cst_128 {dimension_numbers = #tpu.dot_dimension_numbers<[1], [0], [0], [1], [0, 0, 1, 1], [], []>} : vector<64x64xbf16>, vector<64x64xbf16>, vector<64x64xf32> -> vector<64x64xf32>
    %136 = arith.addf %129, %135 : vector<64x64xf32>
    %c2_129 = arith.constant 2 : index
    %c1_130 = arith.constant 1 : index
    %c0_131 = arith.constant 0 : index
    %137 = tpu.strided_load %arg17[%c2_129, %c1_130, %c0_131] {strides = array<i32: 2, 2, 1>} : memref<18x18x64xf32, #tpu.memory_space<vmem>>, vector<8x8x64xf32>
    %138 = vector.shape_cast %137 : vector<8x8x64xf32> to vector<64x64xf32>
    %139 = arith.truncf %138 : vector<64x64xf32> to vector<64x64xbf16>
    %c7_132 = arith.constant 7 : index
    %c0_133 = arith.constant 0 : index
    %c0_134 = arith.constant 0 : index
    %140 = vector.load %arg7[%c7_132, %c0_133, %c0_134] : memref<9x64x64xbf16, #tpu.memory_space<vmem>>, vector<1x64x64xbf16>
    %141 = vector.shape_cast %140 : vector<1x64x64xbf16> to vector<64x64xbf16>
    %cst_135 = arith.constant dense<0.000000e+00> : vector<64x64xf32>
    %142 = tpu.matmul %139, %141, %cst_135 {dimension_numbers = #tpu.dot_dimension_numbers<[1], [0], [0], [1], [0, 0, 1, 1], [], []>} : vector<64x64xbf16>, vector<64x64xbf16>, vector<64x64xf32> -> vector<64x64xf32>
    %143 = arith.addf %136, %142 : vector<64x64xf32>
    %c2_136 = arith.constant 2 : index
    %c2_137 = arith.constant 2 : index
    %c0_138 = arith.constant 0 : index
    %144 = tpu.strided_load %arg17[%c2_136, %c2_137, %c0_138] {strides = array<i32: 2, 2, 1>} : memref<18x18x64xf32, #tpu.memory_space<vmem>>, vector<8x8x64xf32>
    %145 = vector.shape_cast %144 : vector<8x8x64xf32> to vector<64x64xf32>
    %146 = arith.truncf %145 : vector<64x64xf32> to vector<64x64xbf16>
    %c8_139 = arith.constant 8 : index
    %c0_140 = arith.constant 0 : index
    %c0_141 = arith.constant 0 : index
    %147 = vector.load %arg7[%c8_139, %c0_140, %c0_141] : memref<9x64x64xbf16, #tpu.memory_space<vmem>>, vector<1x64x64xbf16>
    %148 = vector.shape_cast %147 : vector<1x64x64xbf16> to vector<64x64xbf16>
    %cst_142 = arith.constant dense<0.000000e+00> : vector<64x64xf32>
    %149 = tpu.matmul %146, %148, %cst_142 {dimension_numbers = #tpu.dot_dimension_numbers<[1], [0], [0], [1], [0, 0, 1, 1], [], []>} : vector<64x64xbf16>, vector<64x64xbf16>, vector<64x64xf32> -> vector<64x64xf32>
    %150 = arith.addf %143, %149 : vector<64x64xf32>
    %c0_143 = arith.constant 0 : index
    %c0_144 = arith.constant 0 : index
    %151 = vector.load %arg8[%c0_143, %c0_144] : memref<1x64xf32, #tpu.memory_space<vmem>>, vector<1x64xf32>
    %152 = vector.broadcast %151 : vector<1x64xf32> to vector<64x64xf32>
    %153 = arith.mulf %150, %152 : vector<64x64xf32>
    %c0_145 = arith.constant 0 : index
    %c0_146 = arith.constant 0 : index
    %154 = vector.load %arg9[%c0_145, %c0_146] : memref<1x64xf32, #tpu.memory_space<vmem>>, vector<1x64xf32>
    %155 = vector.broadcast %154 : vector<1x64xf32> to vector<64x64xf32>
    %156 = arith.addf %153, %155 : vector<64x64xf32>
    %cst_147 = arith.constant dense<0.000000e+00> : vector<64xf32>
    %157 = vector.multi_reduction <add>, %156, %cst_147 [0] : vector<64x64xf32> to vector<64xf32>
    %158 = vector.shape_cast %157 : vector<64xf32> to vector<1x64xf32>
    %cst_148 = arith.constant 6.400000e+01 : f32
    %159 = vector.broadcast %cst_148 : f32 to vector<1x64xf32>
    %160 = arith.divf %158, %159 : vector<1x64xf32>
    %c0_149 = arith.constant 0 : index
    %c0_150 = arith.constant 0 : index
    %161 = vector.load %arg10[%c0_149, %c0_150] : memref<64x4xf32, #tpu.memory_space<vmem>>, vector<64x4xf32>
    %cst_151 = arith.constant dense<0.000000e+00> : vector<1x4xf32>
    %162 = tpu.matmul %160, %161, %cst_151 {dimension_numbers = #tpu.dot_dimension_numbers<[1], [0], [0], [1], [0, 0, 1, 1], [], []>} : vector<1x64xf32>, vector<64x4xf32>, vector<1x4xf32> -> vector<1x4xf32>
    %cst_152 = arith.constant 0.000000e+00 : f32
    %163 = vector.broadcast %cst_152 : f32 to vector<1x4xf32>
    %164 = arith.maximumf %162, %163 : vector<1x4xf32>
    %c0_153 = arith.constant 0 : index
    %c0_154 = arith.constant 0 : index
    %165 = vector.load %arg11[%c0_153, %c0_154] : memref<4x64xf32, #tpu.memory_space<vmem>>, vector<4x64xf32>
    %cst_155 = arith.constant dense<0.000000e+00> : vector<1x64xf32>
    %166 = tpu.matmul %164, %165, %cst_155 {dimension_numbers = #tpu.dot_dimension_numbers<[1], [0], [0], [1], [0, 0, 1, 1], [], []>} : vector<1x4xf32>, vector<4x64xf32>, vector<1x64xf32> -> vector<1x64xf32>
    %167 = arith.negf %166 : vector<1x64xf32>
    %168 = math.exp %167 : vector<1x64xf32>
    %cst_156 = arith.constant 1.000000e+00 : f32
    %169 = vector.broadcast %cst_156 : f32 to vector<1x64xf32>
    %170 = arith.addf %169, %168 : vector<1x64xf32>
    %171 = arith.divf %169, %170 : vector<1x64xf32>
    %c0_157 = arith.constant 0 : index
    %c0_158 = arith.constant 0 : index
    %c0_159 = arith.constant 0 : index
    %c0_160 = arith.constant 0 : index
    %172 = vector.load %arg2[%c0_157, %c0_158, %c0_159, %c0_160] : memref<1x8x8x32xf32, #tpu.memory_space<vmem>>, vector<1x8x8x32xf32>
    %173 = vector.shape_cast %172 : vector<1x8x8x32xf32> to vector<8x8x32xf32>
    %174 = vector.shape_cast %173 : vector<8x8x32xf32> to vector<64x32xf32>
    %175 = arith.truncf %174 : vector<64x32xf32> to vector<64x32xbf16>
    %c0_161 = arith.constant 0 : index
    %c0_162 = arith.constant 0 : index
    %176 = vector.load %arg12[%c0_161, %c0_162] : memref<32x64xbf16, #tpu.memory_space<vmem>>, vector<32x64xbf16>
    %cst_163 = arith.constant dense<0.000000e+00> : vector<64x64xf32>
    %177 = tpu.matmul %175, %176, %cst_163 {dimension_numbers = #tpu.dot_dimension_numbers<[1], [0], [0], [1], [0, 0, 1, 1], [], []>} : vector<64x32xbf16>, vector<32x64xbf16>, vector<64x64xf32> -> vector<64x64xf32>
    %c0_164 = arith.constant 0 : index
    %c0_165 = arith.constant 0 : index
    %178 = vector.load %arg13[%c0_164, %c0_165] : memref<1x64xf32, #tpu.memory_space<vmem>>, vector<1x64xf32>
    %179 = vector.broadcast %178 : vector<1x64xf32> to vector<64x64xf32>
    %180 = arith.mulf %177, %179 : vector<64x64xf32>
    %c0_166 = arith.constant 0 : index
    %c0_167 = arith.constant 0 : index
    %181 = vector.load %arg14[%c0_166, %c0_167] : memref<1x64xf32, #tpu.memory_space<vmem>>, vector<1x64xf32>
    %182 = vector.broadcast %181 : vector<1x64xf32> to vector<64x64xf32>
    %183 = arith.addf %180, %182 : vector<64x64xf32>
    %184 = vector.broadcast %171 : vector<1x64xf32> to vector<64x64xf32>
    %185 = arith.mulf %156, %184 : vector<64x64xf32>
    %186 = arith.addf %185, %183 : vector<64x64xf32>
    %187 = vector.shape_cast %186 : vector<64x64xf32> to vector<1x8x8x64xf32>
    %c0_168 = arith.constant 0 : index
    %c0_169 = arith.constant 0 : index
    %c0_170 = arith.constant 0 : index
    %c0_171 = arith.constant 0 : index
    %188 = vector.load %arg15[%c0_168, %c0_169, %c0_170, %c0_171] : memref<1x8x8x64xf32, #tpu.memory_space<vmem>>, vector<1x8x8x64xf32>
    tpu.vector_store %arg15[%c0_168, %c0_169, %c0_170, %c0_171], %187 {strides = array<i32>} : memref<1x8x8x64xf32, #tpu.memory_space<vmem>>, vector<1x8x8x64xf32>,
    return
  }
  func.func @transform_0(%arg0: i32) -> (i32, i32, i32, i32) {
    %c0_i32 = arith.constant 0 : i32
    %c0_i32_0 = arith.constant 0 : i32
    %c0_i32_1 = arith.constant 0 : i32
    %c0_i32_2 = arith.constant 0 : i32
    return %arg0, %c0_i32, %c0_i32_0, %c0_i32_1 : i32, i32, i32, i32
  }
  func.func @transform_1(%arg0: i32) -> (i32, i32, i32, i32) {
    %c0_i32 = arith.constant 0 : i32
    %c0_i32_0 = arith.constant 0 : i32
    %c0_i32_1 = arith.constant 0 : i32
    %c0_i32_2 = arith.constant 0 : i32
    return %arg0, %c0_i32, %c0_i32_0, %c0_i32_1 : i32, i32, i32, i32
  }
  func.func @transform_2(%arg0: i32) -> (i32, i32) {
    %c0_i32 = arith.constant 0 : i32
    %c0_i32_0 = arith.constant 0 : i32
    %c0_i32_1 = arith.constant 0 : i32
    return %c0_i32, %c0_i32_0 : i32, i32
  }
  func.func @transform_3(%arg0: i32) -> (i32, i32) {
    %c0_i32 = arith.constant 0 : i32
    %c0_i32_0 = arith.constant 0 : i32
    %c0_i32_1 = arith.constant 0 : i32
    return %c0_i32, %c0_i32_0 : i32, i32
  }
  func.func @transform_4(%arg0: i32) -> (i32, i32, i32) {
    %c0_i32 = arith.constant 0 : i32
    %c0_i32_0 = arith.constant 0 : i32
    %c0_i32_1 = arith.constant 0 : i32
    %c0_i32_2 = arith.constant 0 : i32
    return %c0_i32, %c0_i32_0, %c0_i32_1 : i32, i32, i32
  }
  func.func @transform_5(%arg0: i32) -> (i32, i32) {
    %c0_i32 = arith.constant 0 : i32
    %c0_i32_0 = arith.constant 0 : i32
    %c0_i32_1 = arith.constant 0 : i32
    return %c0_i32, %c0_i32_0 : i32, i32
  }
  func.func @transform_6(%arg0: i32) -> (i32, i32, i32) {
    %c0_i32 = arith.constant 0 : i32
    %c0_i32_0 = arith.constant 0 : i32
    %c0_i32_1 = arith.constant 0 : i32
    %c0_i32_2 = arith.constant 0 : i32
    return %c0_i32, %c0_i32_0, %c0_i32_1 : i32, i32, i32
  }
  func.func @transform_7(%arg0: i32) -> (i32, i32) {
    %c0_i32 = arith.constant 0 : i32
    %c0_i32_0 = arith.constant 0 : i32
    %c0_i32_1 = arith.constant 0 : i32
    return %c0_i32, %c0_i32_0 : i32, i32
  }
  func.func @transform_8(%arg0: i32) -> (i32, i32) {
    %c0_i32 = arith.constant 0 : i32
    %c0_i32_0 = arith.constant 0 : i32
    %c0_i32_1 = arith.constant 0 : i32
    return %c0_i32, %c0_i32_0 : i32, i32
  }
  func.func @transform_9(%arg0: i32) -> (i32, i32) {
    %c0_i32 = arith.constant 0 : i32
    %c0_i32_0 = arith.constant 0 : i32
    %c0_i32_1 = arith.constant 0 : i32
    return %c0_i32, %c0_i32_0 : i32, i32
  }
  func.func @transform_10(%arg0: i32) -> (i32, i32) {
    %c0_i32 = arith.constant 0 : i32
    %c0_i32_0 = arith.constant 0 : i32
    %c0_i32_1 = arith.constant 0 : i32
    return %c0_i32, %c0_i32_0 : i32, i32
  }
  func.func @transform_11(%arg0: i32) -> (i32, i32) {
    %c0_i32 = arith.constant 0 : i32
    %c0_i32_0 = arith.constant 0 : i32
    %c0_i32_1 = arith.constant 0 : i32
    return %c0_i32, %c0_i32_0 : i32, i32
  }
  func.func @transform_12(%arg0: i32) -> (i32, i32) {
    %c0_i32 = arith.constant 0 : i32
    %c0_i32_0 = arith.constant 0 : i32
    %c0_i32_1 = arith.constant 0 : i32
    return %c0_i32, %c0_i32_0 : i32, i32
  }
  func.func @transform_13(%arg0: i32) -> (i32, i32) {
    %c0_i32 = arith.constant 0 : i32
    %c0_i32_0 = arith.constant 0 : i32
    %c0_i32_1 = arith.constant 0 : i32
    return %c0_i32, %c0_i32_0 : i32, i32
  }
  func.func @transform_14(%arg0: i32) -> (i32, i32, i32, i32) {
    %c0_i32 = arith.constant 0 : i32
    %c0_i32_0 = arith.constant 0 : i32
    %c0_i32_1 = arith.constant 0 : i32
    %c0_i32_2 = arith.constant 0 : i32
    return %arg0, %c0_i32, %c0_i32_0, %c0_i32_1 : i32, i32, i32, i32
  }
}

</mosaic_0001>

<llo_original>
// kernel: _lambda_.1
$region0: #{_lambda_.1}
  #allocation0 [shape = 'u32[]', space=smem, size = 0x4, offset = 0x4, fixed_abs, tag = 'smem constant byte address 0x4 - core index']
  #allocation1 [shape = 'u32[144,128]{1,0:T(1,128)}', space=vmem, size = 0x12000, scoped, tag = 'internal scratch']
  #allocation2 [shape = 'f32[18,18,32]{2,1,0:T(8,128)}', space=vmem, size = 0x36000, scoped, tag = 'scratch operand']
  #allocation3 [shape = 'f32[18,18,64]{2,1,0:T(8,128)}', space=vmem, size = 0x36000, scoped, tag = 'scratch operand']
  %s0 = inlined_call_operand.hbm [shape: f32[2,16,16,32], index: 0, kind: input, shape index: {}]
  %s1 = inlined_call_operand.vmem [shape: f32[2,8,8,32], index: 1, kind: input, shape index: {}]
  %s2 = inlined_call_operand.vmem [shape: f32[1,32], index: 2, kind: input, shape index: {}]
  %s3 = inlined_call_operand.vmem [shape: f32[1,32], index: 3, kind: input, shape index: {}]
  %s4 = inlined_call_operand.hbm [shape: bf16[9,32,64], index: 4, kind: input, shape index: {}]
  %s5 = inlined_call_operand.vmem [shape: f32[1,64], index: 5, kind: input, shape index: {}]
  %s6 = inlined_call_operand.vmem [shape: bf16[9,64,64], index: 6, kind: input, shape index: {}]
  %s7 = inlined_call_operand.vmem [shape: f32[1,64], index: 7, kind: input, shape index: {}]
  %s8 = inlined_call_operand.vmem [shape: f32[1,64], index: 8, kind: input, shape index: {}]
  %s9 = inlined_call_operand.hbm [shape: f32[64,4], index: 9, kind: input, shape index: {}]
  %s10 = inlined_call_operand.vmem [shape: f32[4,64], index: 10, kind: input, shape index: {}]
  %s11 = inlined_call_operand.vmem [shape: bf16[32,64], index: 11, kind: input, shape index: {}]
  %s12 = inlined_call_operand.vmem [shape: f32[1,64], index: 12, kind: input, shape index: {}]
  %s13 = inlined_call_operand.vmem [shape: f32[1,64], index: 13, kind: input, shape index: {}]
  %s14 = inlined_call_operand.hbm [shape: f32[2,8,8,64], index: 14, kind: output, shape index: {}]
  %s15 = sld [smem:[#allocation0]]
  $region101: #{_lambda_.1} parent=0
    _
  %s17 = ssub.s32 1, %s15
  %s18 = scalar_select 0, %s17, %s15
  $region1: #{_lambda_.1} parent=0
    #allocation4 [shape = 'u8[262144]{0}', space=vmem, size = 0x40000, scoped, tag = 'input window, operand 0']
    #allocation5 [shape = 's32[2]{0}', space=sflag, size = 0x8, scoped, tag = 'scoped memory for _lambda_.1']
    #allocation6 [shape = 's32[2]{0}', space=sflag, size = 0x8, scoped, tag = 'scoped memory for _lambda_.1']
    #allocation7 [shape = 'u8[73728]{0}', space=vmem, size = 0x12000, scoped, tag = 'input window, operand 4, single buffered']
    #allocation8 [shape = 's32[1]{0}', space=sflag, size = 0x4, scoped, tag = 'scoped memory for _lambda_.1']
    #allocation9 [shape = 'u8[32768]{0}', space=vmem, size = 0x8000, scoped, tag = 'input window, operand 9, single buffered']
    #allocation10 [shape = 'u8[65536]{0}', space=vmem, size = 0x10000, scoped, tag = 'output window, operand 0']
    %19 = vsyncpa [#allocation5], 0
    %s20 = scalar_lea.sflag [#allocation5], 1
    %21 = vsyncpa %s20, 0
    %22 = vsyncpa [#allocation8], 0
    %23 = vsyncpa [#allocation6], 0
    %s24 = scalar_lea.sflag [#allocation6], 1
    %25 = vsyncpa %s24, 0
    loop: start=0, step=1, limit=4
    $region2: #{_lambda_.1} parent=1 // loop_pre_header
      _
    $region3: #{_lambda_.1} parent=1 // loop_header
      %s27 = sphi 0, %s31
      %p28 = scmp.ge.s32.totalorder %s27, 4
      %s37 = sphi 0, %s39
      %s40 = sphi 0, %s37
      %s41 = sphi 0, %s40
      %s57 = sphi 0, %s41
      %s63 = sphi 0, %s65
      %s66 = sphi 0, %s63
      %s67 = sphi 0, %s66
      %s83 = sphi 0, %s67
      %s87 = sphi 0, %s87
      %s89 = sphi 0, %s87
      %s90 = sphi 0, %s89
      %s104 = sphi 0, %s90
      %s108 = sphi 0, %s108
      %s110 = sphi 0, %s108
      %s111 = sphi 0, %s110
      %s125 = sphi 0, %s111
      %s129 = sphi 0, %s129
      %s131 = sphi 0, %s129
      %s132 = sphi 0, %s131
      %s146 = sphi 0, %s132
      %s150 = sphi 0, %s150
      %s152 = sphi 0, %s150
      %s153 = sphi 0, %s152
      %s167 = sphi 0, %s153
      %s171 = sphi 0, %s171
      %s173 = sphi 0, %s171
      %s174 = sphi 0, %s173
      %s188 = sphi 0, %s174
      %s192 = sphi 0, %s192
      %s194 = sphi 0, %s192
      %s195 = sphi 0, %s194
      %s209 = sphi 0, %s195
      %s213 = sphi 0, %s213
      %s215 = sphi 0, %s213
      %s216 = sphi 0, %s215
      %s230 = sphi 0, %s216
      %s234 = sphi 0, %s234
      %s236 = sphi 0, %s234
      %s237 = sphi 0, %s236
      %s251 = sphi 0, %s237
      %s255 = sphi 0, %s255
      %s257 = sphi 0, %s255
      %s258 = sphi 0, %s257
      %s272 = sphi 0, %s258
      %s276 = sphi 0, %s276
      %s278 = sphi 0, %s276
      %s279 = sphi 0, %s278
      %s293 = sphi 0, %s279
      %s297 = sphi 0, %s297
      %s299 = sphi 0, %s297
      %s300 = sphi 0, %s299
      %s314 = sphi 0, %s300
      %s318 = sphi 0, %s318
      %s320 = sphi 0, %s318
      %s321 = sphi 0, %s320
      %s335 = sphi 0, %s321
      %s341 = sphi 0, %s343
      %s344 = sphi 0, %s341
      %s345 = sphi 0, %s344
      %s361 = sphi 0, %s345
    $region4: #{_lambda_.1} parent=1 // loop_header_branch
      %30 = sbr.rel (%p28) target = $region8
    $region5: #{_lambda_.1} parent=1 // loop_body
      %s32 = ssub.s32 %s27, 1
      %s33 = ssub.s32 %s27, 2
      %s34 = sadd.s32 %s27, 1
      %s35 = ssub.s32 %s27, %s34
      %p36 = scmp.eq.s32.totalorder %s35, 0
      %s38 = sadd.s32 %s37, 1
      %s39 = scalar_select %p36, %s37, %s38
      %p42 = pneg %p36
      %p43 = scmp.eq.s32.totalorder %s27, 1
      %p44 = por %p42, %p43
      %p45 = scmp.ne.s32.totalorder %s37, %s40
      %p46 = scmp.eq.s32.totalorder %s27, 0
      %p47 = por %p45, %p46
      %p48 = scmp.ne.s32.totalorder %s37, %s40
      %p49 = scmp.eq.s32.totalorder %s32, 1
      %p50 = por %p48, %p49
      %p51 = scmp.ne.s32.totalorder %s40, %s41
      %p52 = scmp.eq.s32.totalorder %s32, 0
      %p53 = por %p51, %p52
      %p54 = scmp.ne.s32.totalorder %s40, %s41
      %p55 = scmp.eq.s32.totalorder %s33, 1
      %p56 = por %p54, %p55
      %p58 = scmp.ne.s32.totalorder %s41, %s57
      %p59 = scmp.eq.s32.totalorder %s33, 0
      %p60 = por %p58, %p59
      %s61 = ssub.s32 %s27, %s34
      %p62 = scmp.eq.s32.totalorder %s61, 0
      %s64 = sadd.s32 %s63, 1
      %s65 = scalar_select %p62, %s63, %s64
      %p68 = pneg %p62
      %p69 = scmp.eq.s32.totalorder %s27, 1
      %p70 = por %p68, %p69
      %p71 = scmp.ne.s32.totalorder %s63, %s66
      %p72 = scmp.eq.s32.totalorder %s27, 0
      %p73 = por %p71, %p72
      %p74 = scmp.ne.s32.totalorder %s63, %s66
      %p75 = scmp.eq.s32.totalorder %s32, 1
      %p76 = por %p74, %p75
      %p77 = scmp.ne.s32.totalorder %s66, %s67
      %p78 = scmp.eq.s32.totalorder %s32, 0
      %p79 = por %p77, %p78
      %p80 = scmp.ne.s32.totalorder %s66, %s67
      %p81 = scmp.eq.s32.totalorder %s33, 1
      %p82 = por %p80, %p81
      %p84 = scmp.ne.s32.totalorder %s67, %s83
      %p85 = scmp.eq.s32.totalorder %s33, 0
      %p86 = por %p84, %p85
      %s88 = sadd.s32 %s87, 1
      %p91 = scmp.eq.s32.totalorder %s27, 1
      %p92 = scmp.ne.s32.totalorder %s87, %s89
      %p93 = scmp.eq.s32.totalorder %s27, 0
      %p94 = por %p92, %p93
      %p95 = scmp.ne.s32.totalorder %s87, %s89
      %p96 = scmp.eq.s32.totalorder %s32, 1
      %p97 = por %p95, %p96
      %p98 = scmp.ne.s32.totalorder %s89, %s90
      %p99 = scmp.eq.s32.totalorder %s32, 0
      %p100 = por %p98, %p99
      %p101 = scmp.ne.s32.totalorder %s89, %s90
      %p102 = scmp.eq.s32.totalorder %s33, 1
      %p103 = por %p101, %p102
      %p105 = scmp.ne.s32.totalorder %s90, %s104
      %p106 = scmp.eq.s32.totalorder %s33, 0
      %p107 = por %p105, %p106
      %s109 = sadd.s32 %s108, 1
      %p112 = scmp.eq.s32.totalorder %s27, 1
      %p113 = scmp.ne.s32.totalorder %s108, %s110
      %p114 = scmp.eq.s32.totalorder %s27, 0
      %p115 = por %p113, %p114
      %p116 = scmp.ne.s32.totalorder %s108, %s110
      %p117 = scmp.eq.s32.totalorder %s32, 1
      %p118 = por %p116, %p117
      %p119 = scmp.ne.s32.totalorder %s110, %s111
      %p120 = scmp.eq.s32.totalorder %s32, 0
      %p121 = por %p119, %p120
      %p122 = scmp.ne.s32.totalorder %s110, %s111
      %p123 = scmp.eq.s32.totalorder %s33, 1
      %p124 = por %p122, %p123
      %p126 = scmp.ne.s32.totalorder %s111, %s125
      %p127 = scmp.eq.s32.totalorder %s33, 0
      %p128 = por %p126, %p127
      %s130 = sadd.s32 %s129, 1
      %p133 = scmp.eq.s32.totalorder %s27, 1
      %p134 = scmp.ne.s32.totalorder %s129, %s131
      %p135 = scmp.eq.s32.totalorder %s27, 0
      %p136 = por %p134, %p135
      %p137 = scmp.ne.s32.totalorder %s129, %s131
      %p138 = scmp.eq.s32.totalorder %s32, 1
      %p139 = por %p137, %p138
      %p140 = scmp.ne.s32.totalorder %s131, %s132
      %p141 = scmp.eq.s32.totalorder %s32, 0
      %p142 = por %p140, %p141
      %p143 = scmp.ne.s32.totalorder %s131, %s132
      %p144 = scmp.eq.s32.totalorder %s33, 1
      %p145 = por %p143, %p144
      %p147 = scmp.ne.s32.totalorder %s132, %s146
      %p148 = scmp.eq.s32.totalorder %s33, 0
      %p149 = por %p147, %p148
      %s151 = sadd.s32 %s150, 1
      %p154 = scmp.eq.s32.totalorder %s27, 1
      %p155 = scmp.ne.s32.totalorder %s150, %s152
      %p156 = scmp.eq.s32.totalorder %s27, 0
      %p157 = por %p155, %p156
      %p158 = scmp.ne.s32.totalorder %s150, %s152
      %p159 = scmp.eq.s32.totalorder %s32, 1
      %p160 = por %p158, %p159
      %p161 = scmp.ne.s32.totalorder %s152, %s153
      %p162 = scmp.eq.s32.totalorder %s32, 0
      %p163 = por %p161, %p162
      %p164 = scmp.ne.s32.totalorder %s152, %s153
      %p165 = scmp.eq.s32.totalorder %s33, 1
      %p166 = por %p164, %p165
      %p168 = scmp.ne.s32.totalorder %s153, %s167
      %p169 = scmp.eq.s32.totalorder %s33, 0
      %p170 = por %p168, %p169
      %s172 = sadd.s32 %s171, 1
      %p175 = scmp.eq.s32.totalorder %s27, 1
      %p176 = scmp.ne.s32.totalorder %s171, %s173
      %p177 = scmp.eq.s32.totalorder %s27, 0
      %p178 = por %p176, %p177
      %p179 = scmp.ne.s32.totalorder %s171, %s173
      %p180 = scmp.eq.s32.totalorder %s32, 1
      %p181 = por %p179, %p180
      %p182 = scmp.ne.s32.totalorder %s173, %s174
      %p183 = scmp.eq.s32.totalorder %s32, 0
      %p184 = por %p182, %p183
      %p185 = scmp.ne.s32.totalorder %s173, %s174
      %p186 = scmp.eq.s32.totalorder %s33, 1
      %p187 = por %p185, %p186
      %p189 = scmp.ne.s32.totalorder %s174, %s188
      %p190 = scmp.eq.s32.totalorder %s33, 0
      %p191 = por %p189, %p190
      %s193 = sadd.s32 %s192, 1
      %p196 = scmp.eq.s32.totalorder %s27, 1
      %p197 = scmp.ne.s32.totalorder %s192, %s194
      %p198 = scmp.eq.s32.totalorder %s27, 0
      %p199 = por %p197, %p198
      %p200 = scmp.ne.s32.totalorder %s192, %s194
      %p201 = scmp.eq.s32.totalorder %s32, 1
      %p202 = por %p200, %p201
      %p203 = scmp.ne.s32.totalorder %s194, %s195
      %p204 = scmp.eq.s32.totalorder %s32, 0
      %p205 = por %p203, %p204
      %p206 = scmp.ne.s32.totalorder %s194, %s195
      %p207 = scmp.eq.s32.totalorder %s33, 1
      %p208 = por %p206, %p207
      %p210 = scmp.ne.s32.totalorder %s195, %s209
      %p211 = scmp.eq.s32.totalorder %s33, 0
      %p212 = por %p210, %p211
      %s214 = sadd.s32 %s213, 1
      %p217 = scmp.eq.s32.totalorder %s27, 1
      %p218 = scmp.ne.s32.totalorder %s213, %s215
      %p219 = scmp.eq.s32.totalorder %s27, 0
      %p220 = por %p218, %p219
      %p221 = scmp.ne.s32.totalorder %s213, %s215
      %p222 = scmp.eq.s32.totalorder %s32, 1
      %p223 = por %p221, %p222
      %p224 = scmp.ne.s32.totalorder %s215, %s216
      %p225 = scmp.eq.s32.totalorder %s32, 0
      %p226 = por %p224, %p225
      %p227 = scmp.ne.s32.totalorder %s215, %s216
      %p228 = scmp.eq.s32.totalorder %s33, 1
      %p229 = por %p227, %p228
      %p231 = scmp.ne.s32.totalorder %s216, %s230
      %p232 = scmp.eq.s32.totalorder %s33, 0
      %p233 = por %p231, %p232
      %s235 = sadd.s32 %s234, 1
      %p238 = scmp.eq.s32.totalorder %s27, 1
      %p239 = scmp.ne.s32.totalorder %s234, %s236
      %p240 = scmp.eq.s32.totalorder %s27, 0
      %p241 = por %p239, %p240
      %p242 = scmp.ne.s32.totalorder %s234, %s236
      %p243 = scmp.eq.s32.totalorder %s32, 1
      %p244 = por %p242, %p243
      %p245 = scmp.ne.s32.totalorder %s236, %s237
      %p246 = scmp.eq.s32.totalorder %s32, 0
      %p247 = por %p245, %p246
      %p248 = scmp.ne.s32.totalorder %s236, %s237
      %p249 = scmp.eq.s32.totalorder %s33, 1
      %p250 = por %p248, %p249
      %p252 = scmp.ne.s32.totalorder %s237, %s251
      %p253 = scmp.eq.s32.totalorder %s33, 0
      %p254 = por %p252, %p253
      %s256 = sadd.s32 %s255, 1
      %p259 = scmp.eq.s32.totalorder %s27, 1
      %p260 = scmp.ne.s32.totalorder %s255, %s257
      %p261 = scmp.eq.s32.totalorder %s27, 0
      %p262 = por %p260, %p261
      %p263 = scmp.ne.s32.totalorder %s255, %s257
      %p264 = scmp.eq.s32.totalorder %s32, 1
      %p265 = por %p263, %p264
      %p266 = scmp.ne.s32.totalorder %s257, %s258
      %p267 = scmp.eq.s32.totalorder %s32, 0
      %p268 = por %p266, %p267
      %p269 = scmp.ne.s32.totalorder %s257, %s258
      %p270 = scmp.eq.s32.totalorder %s33, 1
      %p271 = por %p269, %p270
      %p273 = scmp.ne.s32.totalorder %s258, %s272
      %p274 = scmp.eq.s32.totalorder %s33, 0
      %p275 = por %p273, %p274
      %s277 = sadd.s32 %s276, 1
      %p280 = scmp.eq.s32.totalorder %s27, 1
      %p281 = scmp.ne.s32.totalorder %s276, %s278
      %p282 = scmp.eq.s32.totalorder %s27, 0
      %p283 = por %p281, %p282
      %p284 = scmp.ne.s32.totalorder %s276, %s278
      %p285 = scmp.eq.s32.totalorder %s32, 1
      %p286 = por %p284, %p285
      %p287 = scmp.ne.s32.totalorder %s278, %s279
      %p288 = scmp.eq.s32.totalorder %s32, 0
      %p289 = por %p287, %p288
      %p290 = scmp.ne.s32.totalorder %s278, %s279
      %p291 = scmp.eq.s32.totalorder %s33, 1
      %p292 = por %p290, %p291
      %p294 = scmp.ne.s32.totalorder %s279, %s293
      %p295 = scmp.eq.s32.totalorder %s33, 0
      %p296 = por %p294, %p295
      %s298 = sadd.s32 %s297, 1
      %p301 = scmp.eq.s32.totalorder %s27, 1
      %p302 = scmp.ne.s32.totalorder %s297, %s299
      %p303 = scmp.eq.s32.totalorder %s27, 0
      %p304 = por %p302, %p303
      %p305 = scmp.ne.s32.totalorder %s297, %s299
      %p306 = scmp.eq.s32.totalorder %s32, 1
      %p307 = por %p305, %p306
      %p308 = scmp.ne.s32.totalorder %s299, %s300
      %p309 = scmp.eq.s32.totalorder %s32, 0
      %p310 = por %p308, %p309
      %p311 = scmp.ne.s32.totalorder %s299, %s300
      %p312 = scmp.eq.s32.totalorder %s33, 1
      %p313 = por %p311, %p312
      %p315 = scmp.ne.s32.totalorder %s300, %s314
      %p316 = scmp.eq.s32.totalorder %s33, 0
      %p317 = por %p315, %p316
      %s319 = sadd.s32 %s318, 1
      %p322 = scmp.eq.s32.totalorder %s27, 1
      %p323 = scmp.ne.s32.totalorder %s318, %s320
      %p324 = scmp.eq.s32.totalorder %s27, 0
      %p325 = por %p323, %p324
      %p326 = scmp.ne.s32.totalorder %s318, %s320
      %p327 = scmp.eq.s32.totalorder %s32, 1
      %p328 = por %p326, %p327
      %p329 = scmp.ne.s32.totalorder %s320, %s321
      %p330 = scmp.eq.s32.totalorder %s32, 0
      %p331 = por %p329, %p330
      %p332 = scmp.ne.s32.totalorder %s320, %s321
      %p333 = scmp.eq.s32.totalorder %s33, 1
      %p334 = por %p332, %p333
      %p336 = scmp.ne.s32.totalorder %s321, %s335
      %p337 = scmp.eq.s32.totalorder %s33, 0
      %p338 = por %p336, %p337
      %s339 = ssub.s32 %s27, %s34
      %p340 = scmp.eq.s32.totalorder %s339, 0
      %s342 = sadd.s32 %s341, 1
      %s343 = scalar_select %p340, %s341, %s342
      %p346 = pneg %p340
      %p347 = scmp.eq.s32.totalorder %s27, 1
      %p348 = por %p346, %p347
      %p349 = scmp.ne.s32.totalorder %s341, %s344
      %p350 = scmp.eq.s32.totalorder %s27, 0
      %p351 = por %p349, %p350
      %p352 = scmp.ne.s32.totalorder %s341, %s344
      %p353 = scmp.eq.s32.totalorder %s32, 1
      %p354 = por %p352, %p353
      %p355 = scmp.ne.s32.totalorder %s344, %s345
      %p356 = scmp.eq.s32.totalorder %s32, 0
      %p357 = por %p355, %p356
      %p358 = scmp.ne.s32.totalorder %s344, %s345
      %p359 = scmp.eq.s32.totalorder %s33, 1
      %p360 = por %p358, %p359
      %p362 = scmp.ne.s32.totalorder %s345, %s361
      %p363 = scmp.eq.s32.totalorder %s33, 0
      %p364 = por %p362, %p363
      %p365 = scmp.le.s32.totalorder 1, %s27
      %p366 = scmp.lt.s32.totalorder %s27, 3
      %p367 = pnand %p365, %p366
      %p368 = pneg %p367
      // Predicated region
      $region9: #{_lambda_.1} parent=5 // pred_check
        _
      $region10: #{_lambda_.1} parent=5 // pred_check_branch
        %370 = sbr.rel (%p367) target = $region12
      $region11: #{_lambda_.1} parent=5 // pred_region
        %s371 = ssub.s32 %s27, 1
        // Predicated region
        $region13: #{_lambda_.1} parent=11 // pred_check
          %p372 = pneg %p100
        $region14: #{_lambda_.1} parent=11 // pred_check_branch
          %374 = sbr.rel (%p372) target = $region16
        $region15: #{_lambda_.1} parent=11 // pred_region
          _
        $region16: #{_lambda_.1} parent=11 // pred_fallthru
          _
        // Predicated region
        $region17: #{_lambda_.1} parent=11 // pred_check
          %p375 = pneg %p121
        $region18: #{_lambda_.1} parent=11 // pred_check_branch
          %377 = sbr.rel (%p375) target = $region20
        $region19: #{_lambda_.1} parent=11 // pred_region
          _
        $region20: #{_lambda_.1} parent=11 // pred_fallthru
          _
        // Predicated region
        $region21: #{_lambda_.1} parent=11 // pred_check
          %p378 = pneg %p142
        $region22: #{_lambda_.1} parent=11 // pred_check_branch
          %380 = sbr.rel (%p378) target = $region24
        $region23: #{_lambda_.1} parent=11 // pred_region
          %s382 = ssub.s32 2304, 2304
          %383 = vsyncadd [#allocation8], %s382
          %s384 = sshll.u32 [#allocation7], 4
          %s385 = int_to_ptr.vmem [resolvable:$true] %s384
          %390 = dma.hbm_to_vmem [thread:$0]  %s4, 2304, %s385, [#allocation8], 64, 64, 4
        $region24: #{_lambda_.1} parent=11 // pred_fallthru
          _
        // Predicated region
        $region25: #{_lambda_.1} parent=11 // pred_check
          %p391 = pneg %p163
        $region26: #{_lambda_.1} parent=11 // pred_check_branch
          %393 = sbr.rel (%p391) target = $region28
        $region27: #{_lambda_.1} parent=11 // pred_region
          _
        $region28: #{_lambda_.1} parent=11 // pred_fallthru
          _
        // Predicated region
        $region29: #{_lambda_.1} parent=11 // pred_check
          %p394 = pneg %p184
        $region30: #{_lambda_.1} parent=11 // pred_check_branch
          %396 = sbr.rel (%p394) target = $region32
        $region31: #{_lambda_.1} parent=11 // pred_region
          _
        $region32: #{_lambda_.1} parent=11 // pred_fallthru
          _
        // Predicated region
        $region33: #{_lambda_.1} parent=11 // pred_check
          %p397 = pneg %p205
        $region34: #{_lambda_.1} parent=11 // pred_check_branch
          %399 = sbr.rel (%p397) target = $region36
        $region35: #{_lambda_.1} parent=11 // pred_region
          _
        $region36: #{_lambda_.1} parent=11 // pred_fallthru
          _
        // Predicated region
        $region37: #{_lambda_.1} parent=11 // pred_check
          %p400 = pneg %p226
        $region38: #{_lambda_.1} parent=11 // pred_check_branch
          %402 = sbr.rel (%p400) target = $region40
        $region39: #{_lambda_.1} parent=11 // pred_region
          _
        $region40: #{_lambda_.1} parent=11 // pred_fallthru
          _
        // Predicated region
        $region41: #{_lambda_.1} parent=11 // pred_check
          %p403 = pneg %p247
        $region42: #{_lambda_.1} parent=11 // pred_check_branch
          %405 = sbr.rel (%p403) target = $region44
        $region43: #{_lambda_.1} parent=11 // pred_region
          %s407 = ssub.s32 1024, 1024
          %408 = vsyncadd [#allocation8], %s407
          %s409 = sshll.u32 [#allocation9], 4
          %s410 = int_to_ptr.vmem [resolvable:$true] %s409
          %415 = dma.hbm_to_vmem [thread:$0]  %s9, 1024, %s410, [#allocation8], 128, 128, 8
        $region44: #{_lambda_.1} parent=11 // pred_fallthru
          _
        // Predicated region
        $region45: #{_lambda_.1} parent=11 // pred_check
          %p416 = pneg %p268
        $region46: #{_lambda_.1} parent=11 // pred_check_branch
          %418 = sbr.rel (%p416) target = $region48
        $region47: #{_lambda_.1} parent=11 // pred_region
          _
        $region48: #{_lambda_.1} parent=11 // pred_fallthru
          _
        // Predicated region
        $region49: #{_lambda_.1} parent=11 // pred_check
          %p419 = pneg %p289
        $region50: #{_lambda_.1} parent=11 // pred_check_branch
          %421 = sbr.rel (%p419) target = $region52
        $region51: #{_lambda_.1} parent=11 // pred_region
          _
        $region52: #{_lambda_.1} parent=11 // pred_fallthru
          _
        // Predicated region
        $region53: #{_lambda_.1} parent=11 // pred_check
          %p422 = pneg %p310
        $region54: #{_lambda_.1} parent=11 // pred_check_branch
          %424 = sbr.rel (%p422) target = $region56
        $region55: #{_lambda_.1} parent=11 // pred_region
          _
        $region56: #{_lambda_.1} parent=11 // pred_fallthru
          _
        // Predicated region
        $region57: #{_lambda_.1} parent=11 // pred_check
          %p425 = pneg %p331
        $region58: #{_lambda_.1} parent=11 // pred_check_branch
          %427 = sbr.rel (%p425) target = $region60
        $region59: #{_lambda_.1} parent=11 // pred_region
          _
        $region60: #{_lambda_.1} parent=11 // pred_fallthru
          _
      $region12: #{_lambda_.1} parent=5 // pred_fallthru
        _
      %p428 = scmp.lt.s32.totalorder %s27, 2
      // Predicated region
      $region61: #{_lambda_.1} parent=5 // pred_check
        %p429 = pneg %p428
      $region62: #{_lambda_.1} parent=5 // pred_check_branch
        %431 = sbr.rel (%p429) target = $region64
      $region63: #{_lambda_.1} parent=5 // pred_region
        // Predicated region
        $region65: #{_lambda_.1} parent=63 // pred_check
          %p432 = pneg %p47
        $region66: #{_lambda_.1} parent=63 // pred_check_branch
          %434 = sbr.rel (%p432) target = $region68
        $region67: #{_lambda_.1} parent=63 // pred_region
          %s435 = sand.u32 %s37, 1
          %s436 = scalar_lea.sflag [#allocation5], %s435
          %s437 = sand.u32 %s37, 1
          %s438 = smul.addr %s437, 256
          %s439 = scalar_lea.vmem [#allocation4], %s438
          %s441 = ssub.s32 4096, 4096
          %442 = vsyncadd %s436, %s441
          %s443 = smul.addr %s27, 32
          %s444 = smul.addr %s443, 128
          %s445 = scalar_lea.hbm %s0, %s444
          %s446 = sshll.u32 %s439, 4
          %s447 = int_to_ptr.vmem [resolvable:$true] %s446
          %452 = dma.hbm_to_vmem [thread:$0]  %s445, 4096, %s447, %s436, 128, 128, 8
        $region68: #{_lambda_.1} parent=63 // pred_fallthru
          _
        // Predicated region
        $region69: #{_lambda_.1} parent=63 // pred_check
          %p453 = pneg %p73
        $region70: #{_lambda_.1} parent=63 // pred_check_branch
          %455 = sbr.rel (%p453) target = $region72
        $region71: #{_lambda_.1} parent=63 // pred_region
          %p456 = scmp.lt.s32.totalorder %s27, 1
          %s457 = scalar_select %p456, %s27, 1
          %s458 = smul.addr %s457, 8
          %s459 = smul.addr %s458, 8
          %s460 = scalar_lea.vmem %s1, %s459
        $region72: #{_lambda_.1} parent=63 // pred_fallthru
          _
      $region64: #{_lambda_.1} parent=5 // pred_fallthru
        _
      %p461 = scmp.le.s32.totalorder 1, %s27
      %p462 = scmp.lt.s32.totalorder %s27, 3
      %p463 = pnand %p461, %p462
      %p464 = pneg %p463
      // Predicated region
      $region73: #{_lambda_.1} parent=5 // pred_check
        _
      $region74: #{_lambda_.1} parent=5 // pred_check_branch
        %466 = sbr.rel (%p463) target = $region76
      $region75: #{_lambda_.1} parent=5 // pred_region
        %s467 = ssub.s32 %s27, 1
        %s468 = sand.u32 %s40, 1
        %s469 = scalar_lea.sflag [#allocation5], %s468
        %s470 = sand.u32 %s40, 1
        %s471 = smul.addr %s470, 256
        %s472 = scalar_lea.vmem [#allocation4], %s471
        // Predicated region
        $region77: #{_lambda_.1} parent=75 // pred_check
          %p473 = pneg %p53
        $region78: #{_lambda_.1} parent=75 // pred_check_branch
          %475 = sbr.rel (%p473) target = $region80
        $region79: #{_lambda_.1} parent=75 // pred_region
          %476 = dma.done %s469, 4096
        $region80: #{_lambda_.1} parent=75 // pred_fallthru
          _
        // Predicated region
        $region81: #{_lambda_.1} parent=75 // pred_check
          %p477 = pneg %p142
        $region82: #{_lambda_.1} parent=75 // pred_check_branch
          %479 = sbr.rel (%p477) target = $region84
        $region83: #{_lambda_.1} parent=75 // pred_region
          %480 = dma.done [#allocation8], 2304
        $region84: #{_lambda_.1} parent=75 // pred_fallthru
          _
        // Predicated region
        $region85: #{_lambda_.1} parent=75 // pred_check
          %p481 = pneg %p247
        $region86: #{_lambda_.1} parent=75 // pred_check_branch
          %483 = sbr.rel (%p481) target = $region88
        $region87: #{_lambda_.1} parent=75 // pred_region
          %484 = dma.done [#allocation8], 1024
        $region88: #{_lambda_.1} parent=75 // pred_fallthru
          _
        %s485 = sand.u32 %s40, 1
        %s486 = scalar_lea.sflag [#allocation5], %s485
        %s487 = sand.u32 %s40, 1
        %s488 = smul.addr %s487, 256
        %s489 = scalar_lea.vmem [#allocation4], %s488
        %p490 = pneg %p53
        %p491 = pneg %p50
        %p492 = scmp.lt.s32.totalorder %s32, 1
        %s493 = scalar_select %p492, %s32, 1
        %s494 = smul.addr %s493, 8
        %s495 = smul.addr %s494, 8
        %s496 = scalar_lea.vmem %s1, %s495
        %p497 = pneg %p79
        %p498 = pneg %p76
        %p499 = pneg %p100
        %p500 = pneg %p97
        %p501 = pneg %p121
        %p502 = pneg %p118
        %p503 = pneg %p142
        %p504 = pneg %p139
        %p505 = pneg %p163
        %p506 = pneg %p160
        %p507 = pneg %p184
        %p508 = pneg %p181
        %p509 = pneg %p205
        %p510 = pneg %p202
        %p511 = pneg %p226
        %p512 = pneg %p223
        %p513 = pneg %p247
        %p514 = pneg %p244
        %p515 = pneg %p268
        %p516 = pneg %p265
        %p517 = pneg %p289
        %p518 = pneg %p286
        %p519 = pneg %p310
        %p520 = pneg %p307
        %p521 = pneg %p331
        %p522 = pneg %p328
        %p523 = pneg %p357
        %p524 = pneg %p354
        %s525 = sand.u32 %s344, 1
        %s526 = scalar_lea.sflag [#allocation6], %s525
        %s527 = sand.u32 %s344, 1
        %s528 = smul.addr %s527, 64
        %s529 = scalar_lea.vmem [#allocation10], %s528
        %p530 = scmp.lt.s32.totalorder %s32, 1
        %s531 = scalar_select %p530, %s32, 1
        %s532 = smul.addr %s531, 8
        %s533 = smul.addr %s532, 8
        %s534 = scalar_lea.vmem %s1, %s533
        %vm536 = vcmask 261120
        %537 = vst.msk [vmem:[#allocation2] sm:$0xff] %vm536, 0.0
        %538 = vst.msk [vmem:[#allocation2 + $0x8] sm:$0xff] %vm536, 0.0
        %vm539 = vcmask 254976
        %540 = vst.msk [vmem:[#allocation2 + $0x10] sm:$0x3] %vm539, 0.0
        %541 = vst.msk [vmem:[#allocation2 + $0x18] sm:$0xff] %vm536, 0.0
        %542 = vst.msk [vmem:[#allocation2 + $0x20] sm:$0xff] %vm536, 0.0
        %543 = vst.msk [vmem:[#allocation2 + $0x28] sm:$0x3] %vm539, 0.0
        %544 = vst.msk [vmem:[#allocation2 + $0x30] sm:$0xff] %vm536, 0.0
        %545 = vst.msk [vmem:[#allocation2 + $0x38] sm:$0xff] %vm536, 0.0
        %546 = vst.msk [vmem:[#allocation2 + $0x40] sm:$0x3] %vm539, 0.0
        %547 = vst.msk [vmem:[#allocation2 + $0x48] sm:$0xff] %vm536, 0.0
        %548 = vst.msk [vmem:[#allocation2 + $0x50] sm:$0xff] %vm536, 0.0
        %549 = vst.msk [vmem:[#allocation2 + $0x58] sm:$0x3] %vm539, 0.0
        %550 = vst.msk [vmem:[#allocation2 + $0x60] sm:$0xff] %vm536, 0.0
        %551 = vst.msk [vmem:[#allocation2 + $0x68] sm:$0xff] %vm536, 0.0
        %552 = vst.msk [vmem:[#allocation2 + $0x70] sm:$0x3] %vm539, 0.0
        %553 = vst.msk [vmem:[#allocation2 + $0x78] sm:$0xff] %vm536, 0.0
        %554 = vst.msk [vmem:[#allocation2 + $0x80] sm:$0xff] %vm536, 0.0
        %555 = vst.msk [vmem:[#allocation2 + $0x88] sm:$0x3] %vm539, 0.0
        %556 = vst.msk [vmem:[#allocation2 + $0x90] sm:$0xff] %vm536, 0.0
        %557 = vst.msk [vmem:[#allocation2 + $0x98] sm:$0xff] %vm536, 0.0
        %558 = vst.msk [vmem:[#allocation2 + $0xa0] sm:$0x3] %vm539, 0.0
        %559 = vst.msk [vmem:[#allocation2 + $0xa8] sm:$0xff] %vm536, 0.0
        %560 = vst.msk [vmem:[#allocation2 + $0xb0] sm:$0xff] %vm536, 0.0
        %561 = vst.msk [vmem:[#allocation2 + $0xb8] sm:$0x3] %vm539, 0.0
        %562 = vst.msk [vmem:[#allocation2 + $0xc0] sm:$0xff] %vm536, 0.0
        %563 = vst.msk [vmem:[#allocation2 + $0xc8] sm:$0xff] %vm536, 0.0
        %564 = vst.msk [vmem:[#allocation2 + $0xd0] sm:$0x3] %vm539, 0.0
        %565 = vst.msk [vmem:[#allocation2 + $0xd8] sm:$0xff] %vm536, 0.0
        %566 = vst.msk [vmem:[#allocation2 + $0xe0] sm:$0xff] %vm536, 0.0
        %567 = vst.msk [vmem:[#allocation2 + $0xe8] sm:$0x3] %vm539, 0.0
        %568 = vst.msk [vmem:[#allocation2 + $0xf0] sm:$0xff] %vm536, 0.0
        %569 = vst.msk [vmem:[#allocation2 + $0xf8] sm:$0xff] %vm536, 0.0
        %570 = vst.msk [vmem:[#allocation2 + $0x100] sm:$0x3] %vm539, 0.0
        %571 = vst.msk [vmem:[#allocation2 + $0x108] sm:$0xff] %vm536, 0.0
        %572 = vst.msk [vmem:[#allocation2 + $0x110] sm:$0xff] %vm536, 0.0
        %573 = vst.msk [vmem:[#allocation2 + $0x118] sm:$0x3] %vm539, 0.0
        %574 = vst.msk [vmem:[#allocation2 + $0x120] sm:$0xff] %vm536, 0.0
        %575 = vst.msk [vmem:[#allocation2 + $0x128] sm:$0xff] %vm536, 0.0
        %576 = vst.msk [vmem:[#allocation2 + $0x130] sm:$0x3] %vm539, 0.0
        %577 = vst.msk [vmem:[#allocation2 + $0x138] sm:$0xff] %vm536, 0.0
        %578 = vst.msk [vmem:[#allocation2 + $0x140] sm:$0xff] %vm536, 0.0
        %579 = vst.msk [vmem:[#allocation2 + $0x148] sm:$0x3] %vm539, 0.0
        %580 = vst.msk [vmem:[#allocation2 + $0x150] sm:$0xff] %vm536, 0.0
        %581 = vst.msk [vmem:[#allocation2 + $0x158] sm:$0xff] %vm536, 0.0
        %582 = vst.msk [vmem:[#allocation2 + $0x160] sm:$0x3] %vm539, 0.0
        %583 = vst.msk [vmem:[#allocation2 + $0x168] sm:$0xff] %vm536, 0.0
        %584 = vst.msk [vmem:[#allocation2 + $0x170] sm:$0xff] %vm536, 0.0
        %585 = vst.msk [vmem:[#allocation2 + $0x178] sm:$0x3] %vm539, 0.0
        %586 = vst.msk [vmem:[#allocation2 + $0x180] sm:$0xff] %vm536, 0.0
        %587 = vst.msk [vmem:[#allocation2 + $0x188] sm:$0xff] %vm536, 0.0
        %588 = vst.msk [vmem:[#allocation2 + $0x190] sm:$0x3] %vm539, 0.0
        %589 = vst.msk [vmem:[#allocation2 + $0x198] sm:$0xff] %vm536, 0.0
        %590 = vst.msk [vmem:[#allocation2 + $0x1a0] sm:$0xff] %vm536, 0.0
        %591 = vst.msk [vmem:[#allocation2 + $0x1a8] sm:$0x3] %vm539, 0.0
        %v592 = vld [vmem:[%s472] sm:$0xff]
        %v593 = vld [vmem:[%s472 + $0x8] sm:$0xff]
        %v594 = vld [vmem:[%s472 + $0x10] sm:$0xff]
        %v595 = vld [vmem:[%s472 + $0x18] sm:$0xff]
        %v596 = vld [vmem:[%s472 + $0x20] sm:$0xff]
        %v597 = vld [vmem:[%s472 + $0x28] sm:$0xff]
        %v598 = vld [vmem:[%s472 + $0x30] sm:$0xff]
        %v599 = vld [vmem:[%s472 + $0x38] sm:$0xff]
        %v600 = vld [vmem:[%s472 + $0x40] sm:$0xff]
        %v601 = vld [vmem:[%s472 + $0x48] sm:$0xff]
        %v602 = vld [vmem:[%s472 + $0x50] sm:$0xff]
        %v603 = vld [vmem:[%s472 + $0x58] sm:$0xff]
        %v604 = vld [vmem:[%s472 + $0x60] sm:$0xff]
        %v605 = vld [vmem:[%s472 + $0x68] sm:$0xff]
        %v606 = vld [vmem:[%s472 + $0x70] sm:$0xff]
        %v607 = vld [vmem:[%s472 + $0x78] sm:$0xff]
        %v608 = vld [vmem:[%s472 + $0x80] sm:$0xff]
        %v609 = vld [vmem:[%s472 + $0x88] sm:$0xff]
        %v610 = vld [vmem:[%s472 + $0x90] sm:$0xff]
        %v611 = vld [vmem:[%s472 + $0x98] sm:$0xff]
        %v612 = vld [vmem:[%s472 + $0xa0] sm:$0xff]
        %v613 = vld [vmem:[%s472 + $0xa8] sm:$0xff]
        %v614 = vld [vmem:[%s472 + $0xb0] sm:$0xff]
        %v615 = vld [vmem:[%s472 + $0xb8] sm:$0xff]
        %v616 = vld [vmem:[%s472 + $0xc0] sm:$0xff]
        %v617 = vld [vmem:[%s472 + $0xc8] sm:$0xff]
        %v618 = vld [vmem:[%s472 + $0xd0] sm:$0xff]
        %v619 = vld [vmem:[%s472 + $0xd8] sm:$0xff]
        %v620 = vld [vmem:[%s472 + $0xe0] sm:$0xff]
        %v621 = vld [vmem:[%s472 + $0xe8] sm:$0xff]
        %v622 = vld [vmem:[%s472 + $0xf0] sm:$0xff]
        %v623 = vld [vmem:[%s472 + $0xf8] sm:$0xff]
        %v624 = vld [vmem:[%s2] sm:$0x1]
        %v626 = vlaneseq
        %v627 = vshrl.u32 %v626, 7
        %v628 = vsub.s32 0, %v627
        %v629 = vrot.slane %v624, %v628
        %v631 = vmul.f32 %v592, %v629
        %v632 = vmul.f32 %v593, %v629
        %v633 = vmul.f32 %v594, %v629
        %v634 = vmul.f32 %v595, %v629
        %v635 = vmul.f32 %v596, %v629
        %v636 = vmul.f32 %v597, %v629
        %v637 = vmul.f32 %v598, %v629
        %v638 = vmul.f32 %v599, %v629
        %v639 = vmul.f32 %v600, %v629
        %v640 = vmul.f32 %v601, %v629
        %v641 = vmul.f32 %v602, %v629
        %v642 = vmul.f32 %v603, %v629
        %v643 = vmul.f32 %v604, %v629
        %v644 = vmul.f32 %v605, %v629
        %v645 = vmul.f32 %v606, %v629
        %v646 = vmul.f32 %v607, %v629
        %v647 = vmul.f32 %v608, %v629
        %v648 = vmul.f32 %v609, %v629
        %v649 = vmul.f32 %v610, %v629
        %v650 = vmul.f32 %v611, %v629
        %v651 = vmul.f32 %v612, %v629
        %v652 = vmul.f32 %v613, %v629
        %v653 = vmul.f32 %v614, %v629
        %v654 = vmul.f32 %v615, %v629
        %v655 = vmul.f32 %v616, %v629
        %v656 = vmul.f32 %v617, %v629
        %v657 = vmul.f32 %v618, %v629
        %v658 = vmul.f32 %v619, %v629
        %v659 = vmul.f32 %v620, %v629
        %v660 = vmul.f32 %v621, %v629
        %v661 = vmul.f32 %v622, %v629
        %v662 = vmul.f32 %v623, %v629
        %v663 = vld [vmem:[%s3] sm:$0x1]
        %v665 = vlaneseq
        %v666 = vshrl.u32 %v665, 7
        %v667 = vsub.s32 0, %v666
        %v668 = vrot.slane %v663, %v667
        %v670 = vadd.f32 %v631, %v668
        %v671 = vadd.f32 %v632, %v668
        %v672 = vadd.f32 %v633, %v668
        %v673 = vadd.f32 %v634, %v668
        %v674 = vadd.f32 %v635, %v668
        %v675 = vadd.f32 %v636, %v668
        %v676 = vadd.f32 %v637, %v668
        %v677 = vadd.f32 %v638, %v668
        %v678 = vadd.f32 %v639, %v668
        %v679 = vadd.f32 %v640, %v668
        %v680 = vadd.f32 %v641, %v668
        %v681 = vadd.f32 %v642, %v668
        %v682 = vadd.f32 %v643, %v668
        %v683 = vadd.f32 %v644, %v668
        %v684 = vadd.f32 %v645, %v668
        %v685 = vadd.f32 %v646, %v668
        %v686 = vadd.f32 %v647, %v668
        %v687 = vadd.f32 %v648, %v668
        %v688 = vadd.f32 %v649, %v668
        %v689 = vadd.f32 %v650, %v668
        %v690 = vadd.f32 %v651, %v668
        %v691 = vadd.f32 %v652, %v668
        %v692 = vadd.f32 %v653, %v668
        %v693 = vadd.f32 %v654, %v668
        %v694 = vadd.f32 %v655, %v668
        %v695 = vadd.f32 %v656, %v668
        %v696 = vadd.f32 %v657, %v668
        %v697 = vadd.f32 %v658, %v668
        %v698 = vadd.f32 %v659, %v668
        %v699 = vadd.f32 %v660, %v668
        %v700 = vadd.f32 %v661, %v668
        %v701 = vadd.f32 %v662, %v668
        %s702 = scalar_lea.vmem [#allocation2], 24
        %703 = vst.msk [vmem:[%s702 + $0x1] sm:$0xff] %vm536, %v670
        %704 = vst.msk [vmem:[%s702 + $0x9] sm:$0xff] %vm536, %v671
        %705 = vst.msk [vmem:[%s702 + $0x19] sm:$0xff] %vm536, %v672
        %706 = vst.msk [vmem:[%s702 + $0x21] sm:$0xff] %vm536, %v673
        %707 = vst.msk [vmem:[%s702 + $0x31] sm:$0xff] %vm536, %v674
        %708 = vst.msk [vmem:[%s702 + $0x39] sm:$0xff] %vm536, %v675
        %709 = vst.msk [vmem:[%s702 + $0x49] sm:$0xff] %vm536, %v676
        %710 = vst.msk [vmem:[%s702 + $0x51] sm:$0xff] %vm536, %v677
        %711 = vst.msk [vmem:[%s702 + $0x61] sm:$0xff] %vm536, %v678
        %712 = vst.msk [vmem:[%s702 + $0x69] sm:$0xff] %vm536, %v679
        %713 = vst.msk [vmem:[%s702 + $0x79] sm:$0xff] %vm536, %v680
        %714 = vst.msk [vmem:[%s702 + $0x81] sm:$0xff] %vm536, %v681
        %715 = vst.msk [vmem:[%s702 + $0x91] sm:$0xff] %vm536, %v682
        %716 = vst.msk [vmem:[%s702 + $0x99] sm:$0xff] %vm536, %v683
        %717 = vst.msk [vmem:[%s702 + $0xa9] sm:$0xff] %vm536, %v684
        %718 = vst.msk [vmem:[%s702 + $0xb1] sm:$0xff] %vm536, %v685
        %719 = vst.msk [vmem:[%s702 + $0xc1] sm:$0xff] %vm536, %v686
        %720 = vst.msk [vmem:[%s702 + $0xc9] sm:$0xff] %vm536, %v687
        %721 = vst.msk [vmem:[%s702 + $0xd9] sm:$0xff] %vm536, %v688
        %722 = vst.msk [vmem:[%s702 + $0xe1] sm:$0xff] %vm536, %v689
        %723 = vst.msk [vmem:[%s702 + $0xf1] sm:$0xff] %vm536, %v690
        %724 = vst.msk [vmem:[%s702 + $0xf9] sm:$0xff] %vm536, %v691
        %725 = vst.msk [vmem:[%s702 + $0x109] sm:$0xff] %vm536, %v692
        %726 = vst.msk [vmem:[%s702 + $0x111] sm:$0xff] %vm536, %v693
        %727 = vst.msk [vmem:[%s702 + $0x121] sm:$0xff] %vm536, %v694
        %728 = vst.msk [vmem:[%s702 + $0x129] sm:$0xff] %vm536, %v695
        %729 = vst.msk [vmem:[%s702 + $0x139] sm:$0xff] %vm536, %v696
        %730 = vst.msk [vmem:[%s702 + $0x141] sm:$0xff] %vm536, %v697
        %731 = vst.msk [vmem:[%s702 + $0x151] sm:$0xff] %vm536, %v698
        %732 = vst.msk [vmem:[%s702 + $0x159] sm:$0xff] %vm536, %v699
        %733 = vst.msk [vmem:[%s702 + $0x169] sm:$0xff] %vm536, %v700
        %734 = vst.msk [vmem:[%s702 + $0x171] sm:$0xff] %vm536, %v701
        %v735 = vld [vmem:[#allocation2] sm:$0xff]
        %v736 = vld [vmem:[#allocation2 + $0x8] sm:$0xff]
        %v737 = vld [vmem:[#allocation2 + $0x18] sm:$0xff]
        %v738 = vld [vmem:[#allocation2 + $0x20] sm:$0xff]
        %v739 = vld [vmem:[#allocation2 + $0x30] sm:$0xff]
        %v740 = vld [vmem:[#allocation2 + $0x38] sm:$0xff]
        %v741 = vld [vmem:[#allocation2 + $0x48] sm:$0xff]
        %v742 = vld [vmem:[#allocation2 + $0x50] sm:$0xff]
        %v743 = vld [vmem:[#allocation2 + $0x60] sm:$0xff]
        %v744 = vld [vmem:[#allocation2 + $0x68] sm:$0xff]
        %v745 = vld [vmem:[#allocation2 + $0x78] sm:$0xff]
        %v746 = vld [vmem:[#allocation2 + $0x80] sm:$0xff]
        %v747 = vld [vmem:[#allocation2 + $0x90] sm:$0xff]
        %v748 = vld [vmem:[#allocation2 + $0x98] sm:$0xff]
        %v749 = vld [vmem:[#allocation2 + $0xa8] sm:$0xff]
        %v750 = vld [vmem:[#allocation2 + $0xb0] sm:$0xff]
        %v751 = vld [vmem:[#allocation2 + $0xc0] sm:$0xff]
        %v752 = vld [vmem:[#allocation2 + $0xc8] sm:$0xff]
        %v753 = vld [vmem:[#allocation2 + $0xd8] sm:$0xff]
        %v754 = vld [vmem:[#allocation2 + $0xe0] sm:$0xff]
        %v755 = vld [vmem:[#allocation2 + $0xf0] sm:$0xff]
        %v756 = vld [vmem:[#allocation2 + $0xf8] sm:$0xff]
        %v757 = vld [vmem:[#allocation2 + $0x108] sm:$0xff]
        %v758 = vld [vmem:[#allocation2 + $0x110] sm:$0xff]
        %v759 = vld [vmem:[#allocation2 + $0x120] sm:$0xff]
        %v760 = vld [vmem:[#allocation2 + $0x128] sm:$0xff]
        %v761 = vld [vmem:[#allocation2 + $0x138] sm:$0xff]
        %v762 = vld [vmem:[#allocation2 + $0x140] sm:$0xff]
        %v763 = vld [vmem:[#allocation2 + $0x150] sm:$0xff]
        %v764 = vld [vmem:[#allocation2 + $0x158] sm:$0xff]
        %v765 = vld [vmem:[#allocation2 + $0x168] sm:$0xff]
        %v766 = vld [vmem:[#allocation2 + $0x170] sm:$0xff]
        %v767 = vpack.c.bf16 %v736, %v735
        %v768 = vpack.c.bf16 %v738, %v737
        %v769 = vpack.c.bf16 %v740, %v739
        %v770 = vpack.c.bf16 %v742, %v741
        %v771 = vpack.c.bf16 %v744, %v743
        %v772 = vpack.c.bf16 %v746, %v745
        %v773 = vpack.c.bf16 %v748, %v747
        %v774 = vpack.c.bf16 %v750, %v749
        %v775 = vpack.c.bf16 %v752, %v751
        %v776 = vpack.c.bf16 %v754, %v753
        %v777 = vpack.c.bf16 %v756, %v755
        %v778 = vpack.c.bf16 %v758, %v757
        %v779 = vpack.c.bf16 %v760, %v759
        %v780 = vpack.c.bf16 %v762, %v761
        %v781 = vpack.c.bf16 %v764, %v763
        %v782 = vpack.c.bf16 %v766, %v765
        %v783 = vld [vmem:[#allocation7] sm:$0xf]
        %v784 = vld [vmem:[#allocation7 + $0x4] sm:$0xf]
        %v785 = vld [vmem:[#allocation7 + $0x8] sm:$0xf]
        %v786 = vld [vmem:[#allocation7 + $0xc] sm:$0xf]
        %v787 = vld [vmem:[#allocation2 + $0x1] sm:$0xff]
        %v788 = vld [vmem:[#allocation2 + $0x9] sm:$0xff]
        %v789 = vld [vmem:[#allocation2 + $0x19] sm:$0xff]
        %v790 = vld [vmem:[#allocation2 + $0x21] sm:$0xff]
        %v791 = vld [vmem:[#allocation2 + $0x31] sm:$0xff]
        %v792 = vld [vmem:[#allocation2 + $0x39] sm:$0xff]
        %v793 = vld [vmem:[#allocation2 + $0x49] sm:$0xff]
        %v794 = vld [vmem:[#allocation2 + $0x51] sm:$0xff]
        %v795 = vld [vmem:[#allocation2 + $0x61] sm:$0xff]
        %v796 = vld [vmem:[#allocation2 + $0x69] sm:$0xff]
        %v797 = vld [vmem:[#allocation2 + $0x79] sm:$0xff]
        %v798 = vld [vmem:[#allocation2 + $0x81] sm:$0xff]
        %v799 = vld [vmem:[#allocation2 + $0x91] sm:$0xff]
        %v800 = vld [vmem:[#allocation2 + $0x99] sm:$0xff]
        %v801 = vld [vmem:[#allocation2 + $0xa9] sm:$0xff]
        %v802 = vld [vmem:[#allocation2 + $0xb1] sm:$0xff]
        %v803 = vld [vmem:[#allocation2 + $0xc1] sm:$0xff]
        %v804 = vld [vmem:[#allocation2 + $0xc9] sm:$0xff]
        %v805 = vld [vmem:[#allocation2 + $0xd9] sm:$0xff]
        %v806 = vld [vmem:[#allocation2 + $0xe1] sm:$0xff]
        %v807 = vld [vmem:[#allocation2 + $0xf1] sm:$0xff]
        %v808 = vld [vmem:[#allocation2 + $0xf9] sm:$0xff]
        %v809 = vld [vmem:[#allocation2 + $0x109] sm:$0xff]
        %v810 = vld [vmem:[#allocation2 + $0x111] sm:$0xff]
        %v811 = vld [vmem:[#allocation2 + $0x121] sm:$0xff]
        %v812 = vld [vmem:[#allocation2 + $0x129] sm:$0xff]
        %v813 = vld [vmem:[#allocation2 + $0x139] sm:$0xff]
        %v814 = vld [vmem:[#allocation2 + $0x141] sm:$0xff]
        %v815 = vld [vmem:[#allocation2 + $0x151] sm:$0xff]
        %v816 = vld [vmem:[#allocation2 + $0x159] sm:$0xff]
        %v817 = vld [vmem:[#allocation2 + $0x169] sm:$0xff]
        %v818 = vld [vmem:[#allocation2 + $0x171] sm:$0xff]
        %v819 = vpack.c.bf16 %v788, %v787
        %v820 = vpack.c.bf16 %v790, %v789
        %v821 = vpack.c.bf16 %v792, %v791
        %v822 = vpack.c.bf16 %v794, %v793
        %v823 = vpack.c.bf16 %v796, %v795
        %v824 = vpack.c.bf16 %v798, %v797
        %v825 = vpack.c.bf16 %v800, %v799
        %v826 = vpack.c.bf16 %v802, %v801
        %v827 = vpack.c.bf16 %v804, %v803
        %v828 = vpack.c.bf16 %v806, %v805
        %v829 = vpack.c.bf16 %v808, %v807
        %v830 = vpack.c.bf16 %v810, %v809
        %v831 = vpack.c.bf16 %v812, %v811
        %v832 = vpack.c.bf16 %v814, %v813
        %v833 = vpack.c.bf16 %v816, %v815
        %v834 = vpack.c.bf16 %v818, %v817
        %s835 = scalar_lea.vmem [#allocation7], 16
        %v836 = vld [vmem:[%s835] sm:$0xf]
        %v837 = vld [vmem:[%s835 + $0x4] sm:$0xf]
        %v838 = vld [vmem:[%s835 + $0x8] sm:$0xf]
        %v839 = vld [vmem:[%s835 + $0xc] sm:$0xf]
        %v844 = vunpack.c.l.b16 %v836
        %v845 = vunpack.c.l.b16 %v837
        %v846 = vunpack.c.l.b16 %v838
        %v847 = vunpack.c.l.b16 %v839
        %v848 = vpack.c.b16 %v845, %v844
        %v849 = vpack.c.b16 %v847, %v846
        %v853 = vsel %vm536, %v819, 0
        %v856 = vsel %vm536, %v820, 0
        %v859 = vsel %vm536, %v821, 0
        %v862 = vsel %vm536, %v822, 0
        %v865 = vsel %vm536, %v823, 0
        %v868 = vsel %vm536, %v824, 0
        %v871 = vsel %vm536, %v825, 0
        %v874 = vsel %vm536, %v826, 0
        %v877 = vsel %vm536, %v827, 0
        %v880 = vsel %vm536, %v828, 0
        %v883 = vsel %vm536, %v829, 0
        %v886 = vsel %vm536, %v830, 0
        %v889 = vsel %vm536, %v831, 0
        %v892 = vsel %vm536, %v832, 0
        %v895 = vsel %vm536, %v833, 0
        %v898 = vsel %vm536, %v834, 0
        %900 = vmatprep.subr.bf16.mxu0 0
        %901 = vmatpush1.bf16.msra.mxu0 %v848
        %902 = vmatprep.subr.bf16.mxu0 0
        %903 = vmatpush1.bf16.msra.mxu0 %v849
        %904 = vmatprep.subr.bf16.mxu0 0
        %905 = vmatpush1.bf16.msra.mxu0 0
        %906 = vmatprep.subr.bf16.mxu0 0
        %907 = vmatpush1.bf16.msra.mxu0 0
        %908 = vmatprep.subr.bf16.mxu0 0
        %909 = vmatpush1.bf16.msra.mxu0 0
        %910 = vmatprep.subr.bf16.mxu0 0
        %911 = vmatpush1.bf16.msra.mxu0 0
        %912 = vmatprep.subr.bf16.mxu0 0
        %913 = vmatpush1.bf16.msra.mxu0 0
        %914 = vmatprep.subr.bf16.mxu0 0
        %915 = vmatpush1.bf16.msra.mxu0 0
        %916 = vmatprep.subr.bf16.mxu0 0
        %917 = vmatpush1.bf16.msra.mxu0 0
        %918 = vmatprep.subr.bf16.mxu0 0
        %919 = vmatpush1.bf16.msra.mxu0 0
        %920 = vmatprep.subr.bf16.mxu0 0
        %921 = vmatpush1.bf16.msra.mxu0 0
        %922 = vmatprep.subr.bf16.mxu0 0
        %923 = vmatpush1.bf16.msra.mxu0 0
        %924 = vmatprep.subr.bf16.mxu0 0
        %925 = vmatpush1.bf16.msra.mxu0 0
        %926 = vmatprep.subr.bf16.mxu0 0
        %927 = vmatpush1.bf16.msra.mxu0 0
        %928 = vmatprep.subr.bf16.mxu0 0
        %929 = vmatpush1.bf16.msra.mxu0 0
        %930 = vmatprep.subr.bf16.mxu0 0
        %931 = vmatpush1.bf16.msra.mxu0 0
        %932 = vmatprep.mubr.bf16.mxu0 0
        %933 = vmatmul.mubr.bf16.gmra.mrb[0].mxu0 %v853
        %v934 = vpop.f32.mrb[0].mxu0
        %v935 = vadd.f32 0.0, %v934
        %v936 = vpop.f32.mrb[0].mxu0
        %v937 = vpop.f32.mrb[0].mxu0
        %v938 = vadd.f32 0.0, %v937
        %v939 = vpop.f32.mrb[0].mxu0
        %940 = vmatprep.mubr.bf16.mxu0 0
        %941 = vmatmul.mubr.bf16.gmra.mrb[0].mxu0 %v856
        %v942 = vpop.f32.mrb[0].mxu0
        %v943 = vadd.f32 0.0, %v942
        %v944 = vpop.f32.mrb[0].mxu0
        %v945 = vpop.f32.mrb[0].mxu0
        %v946 = vadd.f32 0.0, %v945
        %v947 = vpop.f32.mrb[0].mxu0
        %948 = vmatprep.mubr.bf16.mxu0 0
        %949 = vmatmul.mubr.bf16.gmra.mrb[0].mxu0 %v859
        %v950 = vpop.f32.mrb[0].mxu0
        %v951 = vadd.f32 0.0, %v950
        %v952 = vpop.f32.mrb[0].mxu0
        %v953 = vpop.f32.mrb[0].mxu0
        %v954 = vadd.f32 0.0, %v953
        %v955 = vpop.f32.mrb[0].mxu0
        %956 = vmatprep.mubr.bf16.mxu0 0
        %957 = vmatmul.mubr.bf16.gmra.mrb[0].mxu0 %v862
        %v958 = vpop.f32.mrb[0].mxu0
        %v959 = vadd.f32 0.0, %v958
        %v960 = vpop.f32.mrb[0].mxu0
        %v961 = vpop.f32.mrb[0].mxu0
        %v962 = vadd.f32 0.0, %v961
        %v963 = vpop.f32.mrb[0].mxu0
        %964 = vmatprep.mubr.bf16.mxu0 0
        %965 = vmatmul.mubr.bf16.gmra.mrb[0].mxu0 %v865
        %v966 = vpop.f32.mrb[0].mxu0
        %v967 = vadd.f32 0.0, %v966
        %v968 = vpop.f32.mrb[0].mxu0
        %v969 = vpop.f32.mrb[0].mxu0
        %v970 = vadd.f32 0.0, %v969
        %v971 = vpop.f32.mrb[0].mxu0
        %972 = vmatprep.mubr.bf16.mxu0 0
        %973 = vmatmul.mubr.bf16.gmra.mrb[0].mxu0 %v868
        %v974 = vpop.f32.mrb[0].mxu0
        %v975 = vadd.f32 0.0, %v974
        %v976 = vpop.f32.mrb[0].mxu0
        %v977 = vpop.f32.mrb[0].mxu0
        %v978 = vadd.f32 0.0, %v977
        %v979 = vpop.f32.mrb[0].mxu0
        %980 = vmatprep.mubr.bf16.mxu0 0
        %981 = vmatmul.mubr.bf16.gmra.mrb[0].mxu0 %v871
        %v982 = vpop.f32.mrb[0].mxu0
        %v983 = vadd.f32 0.0, %v982
        %v984 = vpop.f32.mrb[0].mxu0
        %v985 = vpop.f32.mrb[0].mxu0
        %v986 = vadd.f32 0.0, %v985
        %v987 = vpop.f32.mrb[0].mxu0
        %988 = vmatprep.mubr.bf16.mxu0 0
        %989 = vmatmul.mubr.bf16.gmra.mrb[0].mxu0 %v874
        %v990 = vpop.f32.mrb[0].mxu0
        %v991 = vadd.f32 0.0, %v990
        %v992 = vpop.f32.mrb[0].mxu0
        %v993 = vpop.f32.mrb[0].mxu0
        %v994 = vadd.f32 0.0, %v993
        %v995 = vpop.f32.mrb[0].mxu0
        %996 = vmatprep.mubr.bf16.mxu0 0
        %997 = vmatmul.mubr.bf16.gmra.mrb[0].mxu0 %v877
        %v998 = vpop.f32.mrb[0].mxu0
        %v999 = vadd.f32 0.0, %v998
        %v1000 = vpop.f32.mrb[0].mxu0
        %v1001 = vpop.f32.mrb[0].mxu0
        %v1002 = vadd.f32 0.0, %v1001
        %v1003 = vpop.f32.mrb[0].mxu0
        %1004 = vmatprep.mubr.bf16.mxu0 0
        %1005 = vmatmul.mubr.bf16.gmra.mrb[0].mxu0 %v880
        %v1006 = vpop.f32.mrb[0].mxu0
        %v1007 = vadd.f32 0.0, %v1006
        %v1008 = vpop.f32.mrb[0].mxu0
        %v1009 = vpop.f32.mrb[0].mxu0
        %v1010 = vadd.f32 0.0, %v1009
        %v1011 = vpop.f32.mrb[0].mxu0
        %1012 = vmatprep.mubr.bf16.mxu0 0
        %1013 = vmatmul.mubr.bf16.gmra.mrb[0].mxu0 %v883
        %v1014 = vpop.f32.mrb[0].mxu0
        %v1015 = vadd.f32 0.0, %v1014
        %v1016 = vpop.f32.mrb[0].mxu0
        %v1017 = vpop.f32.mrb[0].mxu0
        %v1018 = vadd.f32 0.0, %v1017
        %v1019 = vpop.f32.mrb[0].mxu0
        %1020 = vmatprep.mubr.bf16.mxu0 0
        %1021 = vmatmul.mubr.bf16.gmra.mrb[0].mxu0 %v886
        %v1022 = vpop.f32.mrb[0].mxu0
        %v1023 = vadd.f32 0.0, %v1022
        %v1024 = vpop.f32.mrb[0].mxu0
        %v1025 = vpop.f32.mrb[0].mxu0
        %v1026 = vadd.f32 0.0, %v1025
        %v1027 = vpop.f32.mrb[0].mxu0
        %1028 = vmatprep.mubr.bf16.mxu0 0
        %1029 = vmatmul.mubr.bf16.gmra.mrb[0].mxu0 %v889
        %v1030 = vpop.f32.mrb[0].mxu0
        %v1031 = vadd.f32 0.0, %v1030
        %v1032 = vpop.f32.mrb[0].mxu0
        %v1033 = vpop.f32.mrb[0].mxu0
        %v1034 = vadd.f32 0.0, %v1033
        %v1035 = vpop.f32.mrb[0].mxu0
        %1036 = vmatprep.mubr.bf16.mxu0 0
        %1037 = vmatmul.mubr.bf16.gmra.mrb[0].mxu0 %v892
        %v1038 = vpop.f32.mrb[0].mxu0
        %v1039 = vadd.f32 0.0, %v1038
        %v1040 = vpop.f32.mrb[0].mxu0
        %v1041 = vpop.f32.mrb[0].mxu0
        %v1042 = vadd.f32 0.0, %v1041
        %v1043 = vpop.f32.mrb[0].mxu0
        %1044 = vmatprep.mubr.bf16.mxu0 0
        %1045 = vmatmul.mubr.bf16.gmra.mrb[0].mxu0 %v895
        %v1046 = vpop.f32.mrb[0].mxu0
        %v1047 = vadd.f32 0.0, %v1046
        %v1048 = vpop.f32.mrb[0].mxu0
        %v1049 = vpop.f32.mrb[0].mxu0
        %v1050 = vadd.f32 0.0, %v1049
        %v1051 = vpop.f32.mrb[0].mxu0
        %1052 = vmatprep.mubr.bf16.mxu0 0
        %1053 = vmatmul.mubr.bf16.gmra.mrb[0].mxu0 %v898
        %v1054 = vpop.f32.mrb[0].mxu0
        %v1055 = vadd.f32 0.0, %v1054
        %v1056 = vpop.f32.mrb[0].mxu0
        %v1057 = vpop.f32.mrb[0].mxu0
        %v1058 = vadd.f32 0.0, %v1057
        %v1059 = vpop.f32.mrb[0].mxu0
        %1060 = vdwg.mxu0
        %v1065 = vunpack.c.l.b16 %v783
        %v1066 = vunpack.c.l.b16 %v784
        %v1067 = vunpack.c.l.b16 %v785
        %v1068 = vunpack.c.l.b16 %v786
        %v1069 = vpack.c.b16 %v1066, %v1065
        %v1070 = vpack.c.b16 %v1068, %v1067
        %v1074 = vsel %vm536, %v767, 0
        %v1077 = vsel %vm536, %v768, 0
        %v1080 = vsel %vm536, %v769, 0
        %v1083 = vsel %vm536, %v770, 0
        %v1086 = vsel %vm536, %v771, 0
        %v1089 = vsel %vm536, %v772, 0
        %v1092 = vsel %vm536, %v773, 0
        %v1095 = vsel %vm536, %v774, 0
        %v1098 = vsel %vm536, %v775, 0
        %v1101 = vsel %vm536, %v776, 0
        %v1104 = vsel %vm536, %v777, 0
        %v1107 = vsel %vm536, %v778, 0
        %v1110 = vsel %vm536, %v779, 0
        %v1113 = vsel %vm536, %v780, 0
        %v1116 = vsel %vm536, %v781, 0
        %v1119 = vsel %vm536, %v782, 0
        %1121 = vmatprep.subr.bf16.mxu0 0
        %1122 = vmatpush1.bf16.msra.mxu0 %v1069
        %1123 = vmatprep.subr.bf16.mxu0 0
        %1124 = vmatpush1.bf16.msra.mxu0 %v1070
        %1125 = vmatprep.subr.bf16.mxu0 0
        %1126 = vmatpush1.bf16.msra.mxu0 0
        %1127 = vmatprep.subr.bf16.mxu0 0
        %1128 = vmatpush1.bf16.msra.mxu0 0
        %1129 = vmatprep.subr.bf16.mxu0 0
        %1130 = vmatpush1.bf16.msra.mxu0 0
        %1131 = vmatprep.subr.bf16.mxu0 0
        %1132 = vmatpush1.bf16.msra.mxu0 0
        %1133 = vmatprep.subr.bf16.mxu0 0
        %1134 = vmatpush1.bf16.msra.mxu0 0
        %1135 = vmatprep.subr.bf16.mxu0 0
        %1136 = vmatpush1.bf16.msra.mxu0 0
        %1137 = vmatprep.subr.bf16.mxu0 0
        %1138 = vmatpush1.bf16.msra.mxu0 0
        %1139 = vmatprep.subr.bf16.mxu0 0
        %1140 = vmatpush1.bf16.msra.mxu0 0
        %1141 = vmatprep.subr.bf16.mxu0 0
        %1142 = vmatpush1.bf16.msra.mxu0 0
        %1143 = vmatprep.subr.bf16.mxu0 0
        %1144 = vmatpush1.bf16.msra.mxu0 0
        %1145 = vmatprep.subr.bf16.mxu0 0
        %1146 = vmatpush1.bf16.msra.mxu0 0
        %1147 = vmatprep.subr.bf16.mxu0 0
        %1148 = vmatpush1.bf16.msra.mxu0 0
        %1149 = vmatprep.subr.bf16.mxu0 0
        %1150 = vmatpush1.bf16.msra.mxu0 0
        %1151 = vmatprep.subr.bf16.mxu0 0
        %1152 = vmatpush1.bf16.msra.mxu0 0
        %1153 = vmatprep.mubr.bf16.mxu0 0
        %1154 = vmatmul.mubr.bf16.gmra.mrb[0].mxu0 %v1074
        %v1155 = vpop.f32.mrb[0].mxu0
        %v1156 = vadd.f32 %v935, %v1155
        %v1157 = vpop.f32.mrb[0].mxu0
        %v1158 = vpop.f32.mrb[0].mxu0
        %v1159 = vadd.f32 %v938, %v1158
        %v1160 = vpop.f32.mrb[0].mxu0
        %1161 = vmatprep.mubr.bf16.mxu0 0
        %1162 = vmatmul.mubr.bf16.gmra.mrb[0].mxu0 %v1077
        %v1163 = vpop.f32.mrb[0].mxu0
        %v1164 = vadd.f32 %v943, %v1163
        %v1165 = vpop.f32.mrb[0].mxu0
        %v1166 = vpop.f32.mrb[0].mxu0
        %v1167 = vadd.f32 %v946, %v1166
        %v1168 = vpop.f32.mrb[0].mxu0
        %1169 = vmatprep.mubr.bf16.mxu0 0
        %1170 = vmatmul.mubr.bf16.gmra.mrb[0].mxu0 %v1080
        %v1171 = vpop.f32.mrb[0].mxu0
        %v1172 = vadd.f32 %v951, %v1171
        %v1173 = vpop.f32.mrb[0].mxu0
        %v1174 = vpop.f32.mrb[0].mxu0
        %v1175 = vadd.f32 %v954, %v1174
        %v1176 = vpop.f32.mrb[0].mxu0
        %1177 = vmatprep.mubr.bf16.mxu0 0
        %1178 = vmatmul.mubr.bf16.gmra.mrb[0].mxu0 %v1083
        %v1179 = vpop.f32.mrb[0].mxu0
        %v1180 = vadd.f32 %v959, %v1179
        %v1181 = vpop.f32.mrb[0].mxu0
        %v1182 = vpop.f32.mrb[0].mxu0
        %v1183 = vadd.f32 %v962, %v1182
        %v1184 = vpop.f32.mrb[0].mxu0
        %1185 = vmatprep.mubr.bf16.mxu0 0
        %1186 = vmatmul.mubr.bf16.gmra.mrb[0].mxu0 %v1086
        %v1187 = vpop.f32.mrb[0].mxu0
        %v1188 = vadd.f32 %v967, %v1187
        %v1189 = vpop.f32.mrb[0].mxu0
        %v1190 = vpop.f32.mrb[0].mxu0
        %v1191 = vadd.f32 %v970, %v1190
        %v1192 = vpop.f32.mrb[0].mxu0
        %1193 = vmatprep.mubr.bf16.mxu0 0
        %1194 = vmatmul.mubr.bf16.gmra.mrb[0].mxu0 %v1089
        %v1195 = vpop.f32.mrb[0].mxu0
        %v1196 = vadd.f32 %v975, %v1195
        %v1197 = vpop.f32.mrb[0].mxu0
        %v1198 = vpop.f32.mrb[0].mxu0
        %v1199 = vadd.f32 %v978, %v1198
        %v1200 = vpop.f32.mrb[0].mxu0
        %1201 = vmatprep.mubr.bf16.mxu0 0
        %1202 = vmatmul.mubr.bf16.gmra.mrb[0].mxu0 %v1092
        %v1203 = vpop.f32.mrb[0].mxu0
        %v1204 = vadd.f32 %v983, %v1203
        %v1205 = vpop.f32.mrb[0].mxu0
        %v1206 = vpop.f32.mrb[0].mxu0
        %v1207 = vadd.f32 %v986, %v1206
        %v1208 = vpop.f32.mrb[0].mxu0
        %1209 = vmatprep.mubr.bf16.mxu0 0
        %1210 = vmatmul.mubr.bf16.gmra.mrb[0].mxu0 %v1095
        %v1211 = vpop.f32.mrb[0].mxu0
        %v1212 = vadd.f32 %v991, %v1211
        %v1213 = vpop.f32.mrb[0].mxu0
        %v1214 = vpop.f32.mrb[0].mxu0
        %v1215 = vadd.f32 %v994, %v1214
        %v1216 = vpop.f32.mrb[0].mxu0
        %1217 = vmatprep.mubr.bf16.mxu0 0
        %1218 = vmatmul.mubr.bf16.gmra.mrb[0].mxu0 %v1098
        %v1219 = vpop.f32.mrb[0].mxu0
        %v1220 = vadd.f32 %v999, %v1219
        %v1221 = vpop.f32.mrb[0].mxu0
        %v1222 = vpop.f32.mrb[0].mxu0
        %v1223 = vadd.f32 %v1002, %v1222
        %v1224 = vpop.f32.mrb[0].mxu0
        %1225 = vmatprep.mubr.bf16.mxu0 0
        %1226 = vmatmul.mubr.bf16.gmra.mrb[0].mxu0 %v1101
        %v1227 = vpop.f32.mrb[0].mxu0
        %v1228 = vadd.f32 %v1007, %v1227
        %v1229 = vpop.f32.mrb[0].mxu0
        %v1230 = vpop.f32.mrb[0].mxu0
        %v1231 = vadd.f32 %v1010, %v1230
        %v1232 = vpop.f32.mrb[0].mxu0
        %1233 = vmatprep.mubr.bf16.mxu0 0
        %1234 = vmatmul.mubr.bf16.gmra.mrb[0].mxu0 %v1104
        %v1235 = vpop.f32.mrb[0].mxu0
        %v1236 = vadd.f32 %v1015, %v1235
        %v1237 = vpop.f32.mrb[0].mxu0
        %v1238 = vpop.f32.mrb[0].mxu0
        %v1239 = vadd.f32 %v1018, %v1238
        %v1240 = vpop.f32.mrb[0].mxu0
        %1241 = vmatprep.mubr.bf16.mxu0 0
        %1242 = vmatmul.mubr.bf16.gmra.mrb[0].mxu0 %v1107
        %v1243 = vpop.f32.mrb[0].mxu0
        %v1244 = vadd.f32 %v1023, %v1243
        %v1245 = vpop.f32.mrb[0].mxu0
        %v1246 = vpop.f32.mrb[0].mxu0
        %v1247 = vadd.f32 %v1026, %v1246
        %v1248 = vpop.f32.mrb[0].mxu0
        %1249 = vmatprep.mubr.bf16.mxu0 0
        %1250 = vmatmul.mubr.bf16.gmra.mrb[0].mxu0 %v1110
        %v1251 = vpop.f32.mrb[0].mxu0
        %v1252 = vadd.f32 %v1031, %v1251
        %v1253 = vpop.f32.mrb[0].mxu0
        %v1254 = vpop.f32.mrb[0].mxu0
        %v1255 = vadd.f32 %v1034, %v1254
        %v1256 = vpop.f32.mrb[0].mxu0
        %1257 = vmatprep.mubr.bf16.mxu0 0
        %1258 = vmatmul.mubr.bf16.gmra.mrb[0].mxu0 %v1113
        %v1259 = vpop.f32.mrb[0].mxu0
        %v1260 = vadd.f32 %v1039, %v1259
        %v1261 = vpop.f32.mrb[0].mxu0
        %v1262 = vpop.f32.mrb[0].mxu0
        %v1263 = vadd.f32 %v1042, %v1262
        %v1264 = vpop.f32.mrb[0].mxu0
        %1265 = vmatprep.mubr.bf16.mxu0 0
        %1266 = vmatmul.mubr.bf16.gmra.mrb[0].mxu0 %v1116
        %v1267 = vpop.f32.mrb[0].mxu0
        %v1268 = vadd.f32 %v1047, %v1267
        %v1269 = vpop.f32.mrb[0].mxu0
        %v1270 = vpop.f32.mrb[0].mxu0
        %v1271 = vadd.f32 %v1050, %v1270
        %v1272 = vpop.f32.mrb[0].mxu0
        %1273 = vmatprep.mubr.bf16.mxu0 0
        %1274 = vmatmul.mubr.bf16.gmra.mrb[0].mxu0 %v1119
        %v1275 = vpop.f32.mrb[0].mxu0
        %v1276 = vadd.f32 %v1055, %v1275
        %v1277 = vpop.f32.mrb[0].mxu0
        %v1278 = vpop.f32.mrb[0].mxu0
        %v1279 = vadd.f32 %v1058, %v1278
        %v1280 = vpop.f32.mrb[0].mxu0
        %1281 = vdwg.mxu0
        %v1282 = vld [vmem:[#allocation2 + $0x2] sm:$0xff]
        %v1283 = vld [vmem:[#allocation2 + $0xa] sm:$0xff]
        %v1284 = vld [vmem:[#allocation2 + $0x1a] sm:$0xff]
        %v1285 = vld [vmem:[#allocation2 + $0x22] sm:$0xff]
        %v1286 = vld [vmem:[#allocation2 + $0x32] sm:$0xff]
        %v1287 = vld [vmem:[#allocation2 + $0x3a] sm:$0xff]
        %v1288 = vld [vmem:[#allocation2 + $0x4a] sm:$0xff]
        %v1289 = vld [vmem:[#allocation2 + $0x52] sm:$0xff]
        %v1290 = vld [vmem:[#allocation2 + $0x62] sm:$0xff]
        %v1291 = vld [vmem:[#allocation2 + $0x6a] sm:$0xff]
        %v1292 = vld [vmem:[#allocation2 + $0x7a] sm:$0xff]
        %v1293 = vld [vmem:[#allocation2 + $0x82] sm:$0xff]
        %v1294 = vld [vmem:[#allocation2 + $0x92] sm:$0xff]
        %v1295 = vld [vmem:[#allocation2 + $0x9a] sm:$0xff]
        %v1296 = vld [vmem:[#allocation2 + $0xaa] sm:$0xff]
        %v1297 = vld [vmem:[#allocation2 + $0xb2] sm:$0xff]
        %v1298 = vld [vmem:[#allocation2 + $0xc2] sm:$0xff]
        %v1299 = vld [vmem:[#allocation2 + $0xca] sm:$0xff]
        %v1300 = vld [vmem:[#allocation2 + $0xda] sm:$0xff]
        %v1301 = vld [vmem:[#allocation2 + $0xe2] sm:$0xff]
        %v1302 = vld [vmem:[#allocation2 + $0xf2] sm:$0xff]
        %v1303 = vld [vmem:[#allocation2 + $0xfa] sm:$0xff]
        %v1304 = vld [vmem:[#allocation2 + $0x10a] sm:$0xff]
        %v1305 = vld [vmem:[#allocation2 + $0x112] sm:$0xff]
        %v1306 = vld [vmem:[#allocation2 + $0x122] sm:$0xff]
        %v1307 = vld [vmem:[#allocation2 + $0x12a] sm:$0xff]
        %v1308 = vld [vmem:[#allocation2 + $0x13a] sm:$0xff]
        %v1309 = vld [vmem:[#allocation2 + $0x142] sm:$0xff]
        %v1310 = vld [vmem:[#allocation2 + $0x152] sm:$0xff]
        %v1311 = vld [vmem:[#allocation2 + $0x15a] sm:$0xff]
        %v1312 = vld [vmem:[#allocation2 + $0x16a] sm:$0xff]
        %v1313 = vld [vmem:[#allocation2 + $0x172] sm:$0xff]
        %v1314 = vpack.c.bf16 %v1283, %v1282
        %v1315 = vpack.c.bf16 %v1285, %v1284
        %v1316 = vpack.c.bf16 %v1287, %v1286
        %v1317 = vpack.c.bf16 %v1289, %v1288
        %v1318 = vpack.c.bf16 %v1291, %v1290
        %v1319 = vpack.c.bf16 %v1293, %v1292
        %v1320 = vpack.c.bf16 %v1295, %v1294
        %v1321 = vpack.c.bf16 %v1297, %v1296
        %v1322 = vpack.c.bf16 %v1299, %v1298
        %v1323 = vpack.c.bf16 %v1301, %v1300
        %v1324 = vpack.c.bf16 %v1303, %v1302
        %v1325 = vpack.c.bf16 %v1305, %v1304
        %v1326 = vpack.c.bf16 %v1307, %v1306
        %v1327 = vpack.c.bf16 %v1309, %v1308
        %v1328 = vpack.c.bf16 %v1311, %v1310
        %v1329 = vpack.c.bf16 %v1313, %v1312
        %s1330 = scalar_lea.vmem [#allocation7], 32
        %v1331 = vld [vmem:[%s1330] sm:$0xf]
        %v1332 = vld [vmem:[%s1330 + $0x4] sm:$0xf]
        %v1333 = vld [vmem:[%s1330 + $0x8] sm:$0xf]
        %v1334 = vld [vmem:[%s1330 + $0xc] sm:$0xf]
        %v1339 = vunpack.c.l.b16 %v1331
        %v1340 = vunpack.c.l.b16 %v1332
        %v1341 = vunpack.c.l.b16 %v1333
        %v1342 = vunpack.c.l.b16 %v1334
        %v1343 = vpack.c.b16 %v1340, %v1339
        %v1344 = vpack.c.b16 %v1342, %v1341
        %v1348 = vsel %vm536, %v1314, 0
        %v1351 = vsel %vm536, %v1315, 0
        %v1354 = vsel %vm536, %v1316, 0
        %v1357 = vsel %vm536, %v1317, 0
        %v1360 = vsel %vm536, %v1318, 0
        %v1363 = vsel %vm536, %v1319, 0
        %v1366 = vsel %vm536, %v1320, 0
        %v1369 = vsel %vm536, %v1321, 0
        %v1372 = vsel %vm536, %v1322, 0
        %v1375 = vsel %vm536, %v1323, 0
        %v1378 = vsel %vm536, %v1324, 0
        %v1381 = vsel %vm536, %v1325, 0
        %v1384 = vsel %vm536, %v1326, 0
        %v1387 = vsel %vm536, %v1327, 0
        %v1390 = vsel %vm536, %v1328, 0
        %v1393 = vsel %vm536, %v1329, 0
        %1395 = vmatprep.subr.bf16.mxu0 0
        %1396 = vmatpush1.bf16.msra.mxu0 %v1343
        %1397 = vmatprep.subr.bf16.mxu0 0
        %1398 = vmatpush1.bf16.msra.mxu0 %v1344
        %1399 = vmatprep.subr.bf16.mxu0 0
        %1400 = vmatpush1.bf16.msra.mxu0 0
        %1401 = vmatprep.subr.bf16.mxu0 0
        %1402 = vmatpush1.bf16.msra.mxu0 0
        %1403 = vmatprep.subr.bf16.mxu0 0
        %1404 = vmatpush1.bf16.msra.mxu0 0
        %1405 = vmatprep.subr.bf16.mxu0 0
        %1406 = vmatpush1.bf16.msra.mxu0 0
        %1407 = vmatprep.subr.bf16.mxu0 0
        %1408 = vmatpush1.bf16.msra.mxu0 0
        %1409 = vmatprep.subr.bf16.mxu0 0
        %1410 = vmatpush1.bf16.msra.mxu0 0
        %1411 = vmatprep.subr.bf16.mxu0 0
        %1412 = vmatpush1.bf16.msra.mxu0 0
        %1413 = vmatprep.subr.bf16.mxu0 0
        %1414 = vmatpush1.bf16.msra.mxu0 0
        %1415 = vmatprep.subr.bf16.mxu0 0
        %1416 = vmatpush1.bf16.msra.mxu0 0
        %1417 = vmatprep.subr.bf16.mxu0 0
        %1418 = vmatpush1.bf16.msra.mxu0 0
        %1419 = vmatprep.subr.bf16.mxu0 0
        %1420 = vmatpush1.bf16.msra.mxu0 0
        %1421 = vmatprep.subr.bf16.mxu0 0
        %1422 = vmatpush1.bf16.msra.mxu0 0
        %1423 = vmatprep.subr.bf16.mxu0 0
        %1424 = vmatpush1.bf16.msra.mxu0 0
        %1425 = vmatprep.subr.bf16.mxu0 0
        %1426 = vmatpush1.bf16.msra.mxu0 0
        %1427 = vmatprep.mubr.bf16.mxu0 0
        %1428 = vmatmul.mubr.bf16.gmra.mrb[0].mxu0 %v1348
        %v1429 = vpop.f32.mrb[0].mxu0
        %v1430 = vadd.f32 0.0, %v1429
        %v1431 = vpop.f32.mrb[0].mxu0
        %v1432 = vpop.f32.mrb[0].mxu0
        %v1433 = vadd.f32 0.0, %v1432
        %v1434 = vpop.f32.mrb[0].mxu0
        %1435 = vmatprep.mubr.bf16.mxu0 0
        %1436 = vmatmul.mubr.bf16.gmra.mrb[0].mxu0 %v1351
        %v1437 = vpop.f32.mrb[0].mxu0
        %v1438 = vadd.f32 0.0, %v1437
        %v1439 = vpop.f32.mrb[0].mxu0
        %v1440 = vpop.f32.mrb[0].mxu0
        %v1441 = vadd.f32 0.0, %v1440
        %v1442 = vpop.f32.mrb[0].mxu0
        %1443 = vmatprep.mubr.bf16.mxu0 0
        %1444 = vmatmul.mubr.bf16.gmra.mrb[0].mxu0 %v1354
        %v1445 = vpop.f32.mrb[0].mxu0
        %v1446 = vadd.f32 0.0, %v1445
        %v1447 = vpop.f32.mrb[0].mxu0
        %v1448 = vpop.f32.mrb[0].mxu0
        %v1449 = vadd.f32 0.0, %v1448
        %v1450 = vpop.f32.mrb[0].mxu0
        %1451 = vmatprep.mubr.bf16.mxu0 0
        %1452 = vmatmul.mubr.bf16.gmra.mrb[0].mxu0 %v1357
        %v1453 = vpop.f32.mrb[0].mxu0
        %v1454 = vadd.f32 0.0, %v1453
        %v1455 = vpop.f32.mrb[0].mxu0
        %v1456 = vpop.f32.mrb[0].mxu0
        %v1457 = vadd.f32 0.0, %v1456
        %v1458 = vpop.f32.mrb[0].mxu0
        %1459 = vmatprep.mubr.bf16.mxu0 0
        %1460 = vmatmul.mubr.bf16.gmra.mrb[0].mxu0 %v1360
        %v1461 = vpop.f32.mrb[0].mxu0
        %v1462 = vadd.f32 0.0, %v1461
        %v1463 = vpop.f32.mrb[0].mxu0
        %v1464 = vpop.f32.mrb[0].mxu0
        %v1465 = vadd.f32 0.0, %v1464
        %v1466 = vpop.f32.mrb[0].mxu0
        %1467 = vmatprep.mubr.bf16.mxu0 0
        %1468 = vmatmul.mubr.bf16.gmra.mrb[0].mxu0 %v1363
        %v1469 = vpop.f32.mrb[0].mxu0
        %v1470 = vadd.f32 0.0, %v1469
        %v1471 = vpop.f32.mrb[0].mxu0
        %v1472 = vpop.f32.mrb[0].mxu0
        %v1473 = vadd.f32 0.0, %v1472
        %v1474 = vpop.f32.mrb[0].mxu0
        %1475 = vmatprep.mubr.bf16.mxu0 0
        %1476 = vmatmul.mubr.bf16.gmra.mrb[0].mxu0 %v1366
        %v1477 = vpop.f32.mrb[0].mxu0
        %v1478 = vadd.f32 0.0, %v1477
        %v1479 = vpop.f32.mrb[0].mxu0
        %v1480 = vpop.f32.mrb[0].mxu0
        %v1481 = vadd.f32 0.0, %v1480
        %v1482 = vpop.f32.mrb[0].mxu0
        %1483 = vmatprep.mubr.bf16.mxu0 0
        %1484 = vmatmul.mubr.bf16.gmra.mrb[0].mxu0 %v1369
        %v1485 = vpop.f32.mrb[0].mxu0
        %v1486 = vadd.f32 0.0, %v1485
        %v1487 = vpop.f32.mrb[0].mxu0
        %v1488 = vpop.f32.mrb[0].mxu0
        %v1489 = vadd.f32 0.0, %v1488
        %v1490 = vpop.f32.mrb[0].mxu0
        %1491 = vmatprep.mubr.bf16.mxu0 0
        %1492 = vmatmul.mubr.bf16.gmra.mrb[0].mxu0 %v1372
        %v1493 = vpop.f32.mrb[0].mxu0
        %v1494 = vadd.f32 0.0, %v1493
        %v1495 = vpop.f32.mrb[0].mxu0
        %v1496 = vpop.f32.mrb[0].mxu0
        %v1497 = vadd.f32 0.0, %v1496
        %v1498 = vpop.f32.mrb[0].mxu0
        %1499 = vmatprep.mubr.bf16.mxu0 0
        %1500 = vmatmul.mubr.bf16.gmra.mrb[0].mxu0 %v1375
        %v1501 = vpop.f32.mrb[0].mxu0
        %v1502 = vadd.f32 0.0, %v1501
        %v1503 = vpop.f32.mrb[0].mxu0
        %v1504 = vpop.f32.mrb[0].mxu0
        %v1505 = vadd.f32 0.0, %v1504
        %v1506 = vpop.f32.mrb[0].mxu0
        %1507 = vmatprep.mubr.bf16.mxu0 0
        %1508 = vmatmul.mubr.bf16.gmra.mrb[0].mxu0 %v1378
        %v1509 = vpop.f32.mrb[0].mxu0
        %v1510 = vadd.f32 0.0, %v1509
        %v1511 = vpop.f32.mrb[0].mxu0
        %v1512 = vpop.f32.mrb[0].mxu0
        %v1513 = vadd.f32 0.0, %v1512
        %v1514 = vpop.f32.mrb[0].mxu0
        %1515 = vmatprep.mubr.bf16.mxu0 0
        %1516 = vmatmul.mubr.bf16.gmra.mrb[0].mxu0 %v1381
        %v1517 = vpop.f32.mrb[0].mxu0
        %v1518 = vadd.f32 0.0, %v1517
        %v1519 = vpop.f32.mrb[0].mxu0
        %v1520 = vpop.f32.mrb[0].mxu0
        %v1521 = vadd.f32 0.0, %v1520
        %v1522 = vpop.f32.mrb[0].mxu0
        %1523 = vmatprep.mubr.bf16.mxu0 0
        %1524 = vmatmul.mubr.bf16.gmra.mrb[0].mxu0 %v1384
        %v1525 = vpop.f32.mrb[0].mxu0
        %v1526 = vadd.f32 0.0, %v1525
        %v1527 = vpop.f32.mrb[0].mxu0
        %v1528 = vpop.f32.mrb[0].mxu0
        %v1529 = vadd.f32 0.0, %v1528
        %v1530 = vpop.f32.mrb[0].mxu0
        %1531 = vmatprep.mubr.bf16.mxu0 0
        %1532 = vmatmul.mubr.bf16.gmra.mrb[0].mxu0 %v1387
        %v1533 = vpop.f32.mrb[0].mxu0
        %v1534 = vadd.f32 0.0, %v1533
        %v1535 = vpop.f32.mrb[0].mxu0
        %v1536 = vpop.f32.mrb[0].mxu0
        %v1537 = vadd.f32 0.0, %v1536
        %v1538 = vpop.f32.mrb[0].mxu0
        %1539 = vmatprep.mubr.bf16.mxu0 0
        %1540 = vmatmul.mubr.bf16.gmra.mrb[0].mxu0 %v1390
        %v1541 = vpop.f32.mrb[0].mxu0
        %v1542 = vadd.f32 0.0, %v1541
        %v1543 = vpop.f32.mrb[0].mxu0
        %v1544 = vpop.f32.mrb[0].mxu0
        %v1545 = vadd.f32 0.0, %v1544
        %v1546 = vpop.f32.mrb[0].mxu0
        %1547 = vmatprep.mubr.bf16.mxu0 0
        %1548 = vmatmul.mubr.bf16.gmra.mrb[0].mxu0 %v1393
        %v1549 = vpop.f32.mrb[0].mxu0
        %v1550 = vadd.f32 0.0, %v1549
        %v1551 = vpop.f32.mrb[0].mxu0
        %v1552 = vpop.f32.mrb[0].mxu0
        %v1553 = vadd.f32 0.0, %v1552
        %v1554 = vpop.f32.mrb[0].mxu0
        %1555 = vdwg.mxu0
        %v1556 = vadd.f32 %v1156, %v1430
        %v1557 = vadd.f32 %v1159, %v1433
        %v1558 = vadd.f32 %v1164, %v1438
        %v1559 = vadd.f32 %v1167, %v1441
        %v1560 = vadd.f32 %v1172, %v1446
        %v1561 = vadd.f32 %v1175, %v1449
        %v1562 = vadd.f32 %v1180, %v1454
        %v1563 = vadd.f32 %v1183, %v1457
        %v1564 = vadd.f32 %v1188, %v1462
        %v1565 = vadd.f32 %v1191, %v1465
        %v1566 = vadd.f32 %v1196, %v1470
        %v1567 = vadd.f32 %v1199, %v1473
        %v1568 = vadd.f32 %v1204, %v1478
        %v1569 = vadd.f32 %v1207, %v1481
        %v1570 = vadd.f32 %v1212, %v1486
        %v1571 = vadd.f32 %v1215, %v1489
        %v1572 = vadd.f32 %v1220, %v1494
        %v1573 = vadd.f32 %v1223, %v1497
        %v1574 = vadd.f32 %v1228, %v1502
        %v1575 = vadd.f32 %v1231, %v1505
        %v1576 = vadd.f32 %v1236, %v1510
        %v1577 = vadd.f32 %v1239, %v1513
        %v1578 = vadd.f32 %v1244, %v1518
        %v1579 = vadd.f32 %v1247, %v1521
        %v1580 = vadd.f32 %v1252, %v1526
        %v1581 = vadd.f32 %v1255, %v1529
        %v1582 = vadd.f32 %v1260, %v1534
        %v1583 = vadd.f32 %v1263, %v1537
        %v1584 = vadd.f32 %v1268, %v1542
        %v1585 = vadd.f32 %v1271, %v1545
        %v1586 = vadd.f32 %v1276, %v1550
        %v1587 = vadd.f32 %v1279, %v1553
        %v1588 = vld [vmem:[%s702] sm:$0xff]
        %v1589 = vld [vmem:[%s702 + $0x8] sm:$0xff]
        %v1590 = vld [vmem:[%s702 + $0x18] sm:$0xff]
        %v1591 = vld [vmem:[%s702 + $0x20] sm:$0xff]
        %v1592 = vld [vmem:[%s702 + $0x30] sm:$0xff]
        %v1593 = vld [vmem:[%s702 + $0x38] sm:$0xff]
        %v1594 = vld [vmem:[%s702 + $0x48] sm:$0xff]
        %v1595 = vld [vmem:[%s702 + $0x50] sm:$0xff]
        %v1596 = vld [vmem:[%s702 + $0x60] sm:$0xff]
        %v1597 = vld [vmem:[%s702 + $0x68] sm:$0xff]
        %v1598 = vld [vmem:[%s702 + $0x78] sm:$0xff]
        %v1599 = vld [vmem:[%s702 + $0x80] sm:$0xff]
        %v1600 = vld [vmem:[%s702 + $0x90] sm:$0xff]
        %v1601 = vld [vmem:[%s702 + $0x98] sm:$0xff]
        %v1602 = vld [vmem:[%s702 + $0xa8] sm:$0xff]
        %v1603 = vld [vmem:[%s702 + $0xb0] sm:$0xff]
        %v1604 = vld [vmem:[%s702 + $0xc0] sm:$0xff]
        %v1605 = vld [vmem:[%s702 + $0xc8] sm:$0xff]
        %v1606 = vld [vmem:[%s702 + $0xd8] sm:$0xff]
        %v1607 = vld [vmem:[%s702 + $0xe0] sm:$0xff]
        %v1608 = vld [vmem:[%s702 + $0xf0] sm:$0xff]
        %v1609 = vld [vmem:[%s702 + $0xf8] sm:$0xff]
        %v1610 = vld [vmem:[%s702 + $0x108] sm:$0xff]
        %v1611 = vld [vmem:[%s702 + $0x110] sm:$0xff]
        %v1612 = vld [vmem:[%s702 + $0x120] sm:$0xff]
        %v1613 = vld [vmem:[%s702 + $0x128] sm:$0xff]
        %v1614 = vld [vmem:[%s702 + $0x138] sm:$0xff]
        %v1615 = vld [vmem:[%s702 + $0x140] sm:$0xff]
        %v1616 = vld [vmem:[%s702 + $0x150] sm:$0xff]
        %v1617 = vld [vmem:[%s702 + $0x158] sm:$0xff]
        %v1618 = vld [vmem:[%s702 + $0x168] sm:$0xff]
        %v1619 = vld [vmem:[%s702 + $0x170] sm:$0xff]
        %v1620 = vpack.c.bf16 %v1589, %v1588
        %v1621 = vpack.c.bf16 %v1591, %v1590
        %v1622 = vpack.c.bf16 %v1593, %v1592
        %v1623 = vpack.c.bf16 %v1595, %v1594
        %v1624 = vpack.c.bf16 %v1597, %v1596
        %v1625 = vpack.c.bf16 %v1599, %v1598
        %v1626 = vpack.c.bf16 %v1601, %v1600
        %v1627 = vpack.c.bf16 %v1603, %v1602
        %v1628 = vpack.c.bf16 %v1605, %v1604
        %v1629 = vpack.c.bf16 %v1607, %v1606
        %v1630 = vpack.c.bf16 %v1609, %v1608
        %v1631 = vpack.c.bf16 %v1611, %v1610
        %v1632 = vpack.c.bf16 %v1613, %v1612
        %v1633 = vpack.c.bf16 %v1615, %v1614
        %v1634 = vpack.c.bf16 %v1617, %v1616
        %v1635 = vpack.c.bf16 %v1619, %v1618
        %s1636 = scalar_lea.vmem [#allocation7], 48
        %v1637 = vld [vmem:[%s1636] sm:$0xf]
        %v1638 = vld [vmem:[%s1636 + $0x4] sm:$0xf]
        %v1639 = vld [vmem:[%s1636 + $0x8] sm:$0xf]
        %v1640 = vld [vmem:[%s1636 + $0xc] sm:$0xf]
        %v1645 = vunpack.c.l.b16 %v1637
        %v1646 = vunpack.c.l.b16 %v1638
        %v1647 = vunpack.c.l.b16 %v1639
        %v1648 = vunpack.c.l.b16 %v1640
        %v1649 = vpack.c.b16 %v1646, %v1645
        %v1650 = vpack.c.b16 %v1648, %v1647
        %v1654 = vsel %vm536, %v1620, 0
        %v1657 = vsel %vm536, %v1621, 0
        %v1660 = vsel %vm536, %v1622, 0
        %v1663 = vsel %vm536, %v1623, 0
        %v1666 = vsel %vm536, %v1624, 0
        %v1669 = vsel %vm536, %v1625, 0
        %v1672 = vsel %vm536, %v1626, 0
        %v1675 = vsel %vm536, %v1627, 0
        %v1678 = vsel %vm536, %v1628, 0
        %v1681 = vsel %vm536, %v1629, 0
        %v1684 = vsel %vm536, %v1630, 0
        %v1687 = vsel %vm536, %v1631, 0
        %v1690 = vsel %vm536, %v1632, 0
        %v1693 = vsel %vm536, %v1633, 0
        %v1696 = vsel %vm536, %v1634, 0
        %v1699 = vsel %vm536, %v1635, 0
        %1701 = vmatprep.subr.bf16.mxu0 0
        %1702 = vmatpush1.bf16.msra.mxu0 %v1649
        %1703 = vmatprep.subr.bf16.mxu0 0
        %1704 = vmatpush1.bf16.msra.mxu0 %v1650
        %1705 = vmatprep.subr.bf16.mxu0 0
        %1706 = vmatpush1.bf16.msra.mxu0 0
        %1707 = vmatprep.subr.bf16.mxu0 0
        %1708 = vmatpush1.bf16.msra.mxu0 0
        %1709 = vmatprep.subr.bf16.mxu0 0
        %1710 = vmatpush1.bf16.msra.mxu0 0
        %1711 = vmatprep.subr.bf16.mxu0 0
        %1712 = vmatpush1.bf16.msra.mxu0 0
        %1713 = vmatprep.subr.bf16.mxu0 0
        %1714 = vmatpush1.bf16.msra.mxu0 0
        %1715 = vmatprep.subr.bf16.mxu0 0
        %1716 = vmatpush1.bf16.msra.mxu0 0
        %1717 = vmatprep.subr.bf16.mxu0 0
        %1718 = vmatpush1.bf16.msra.mxu0 0
        %1719 = vmatprep.subr.bf16.mxu0 0
        %1720 = vmatpush1.bf16.msra.mxu0 0
        %1721 = vmatprep.subr.bf16.mxu0 0
        %1722 = vmatpush1.bf16.msra.mxu0 0
        %1723 = vmatprep.subr.bf16.mxu0 0
        %1724 = vmatpush1.bf16.msra.mxu0 0
        %1725 = vmatprep.subr.bf16.mxu0 0
        %1726 = vmatpush1.bf16.msra.mxu0 0
        %1727 = vmatprep.subr.bf16.mxu0 0
        %1728 = vmatpush1.bf16.msra.mxu0 0
        %1729 = vmatprep.subr.bf16.mxu0 0
        %1730 = vmatpush1.bf16.msra.mxu0 0
        %1731 = vmatprep.subr.bf16.mxu0 0
        %1732 = vmatpush1.bf16.msra.mxu0 0
        %1733 = vmatprep.mubr.bf16.mxu0 0
        %1734 = vmatmul.mubr.bf16.gmra.mrb[0].mxu0 %v1654
        %v1735 = vpop.f32.mrb[0].mxu0
        %v1736 = vadd.f32 0.0, %v1735
        %v1737 = vpop.f32.mrb[0].mxu0
        %v1738 = vpop.f32.mrb[0].mxu0
        %v1739 = vadd.f32 0.0, %v1738
        %v1740 = vpop.f32.mrb[0].mxu0
        %1741 = vmatprep.mubr.bf16.mxu0 0
        %1742 = vmatmul.mubr.bf16.gmra.mrb[0].mxu0 %v1657
        %v1743 = vpop.f32.mrb[0].mxu0
        %v1744 = vadd.f32 0.0, %v1743
        %v1745 = vpop.f32.mrb[0].mxu0
        %v1746 = vpop.f32.mrb[0].mxu0
        %v1747 = vadd.f32 0.0, %v1746
        %v1748 = vpop.f32.mrb[0].mxu0
        %1749 = vmatprep.mubr.bf16.mxu0 0
        %1750 = vmatmul.mubr.bf16.gmra.mrb[0].mxu0 %v1660
        %v1751 = vpop.f32.mrb[0].mxu0
        %v1752 = vadd.f32 0.0, %v1751
        %v1753 = vpop.f32.mrb[0].mxu0
        %v1754 = vpop.f32.mrb[0].mxu0
        %v1755 = vadd.f32 0.0, %v1754
        %v1756 = vpop.f32.mrb[0].mxu0
        %1757 = vmatprep.mubr.bf16.mxu0 0
        %1758 = vmatmul.mubr.bf16.gmra.mrb[0].mxu0 %v1663
        %v1759 = vpop.f32.mrb[0].mxu0
        %v1760 = vadd.f32 0.0, %v1759
        %v1761 = vpop.f32.mrb[0].mxu0
        %v1762 = vpop.f32.mrb[0].mxu0
        %v1763 = vadd.f32 0.0, %v1762
        %v1764 = vpop.f32.mrb[0].mxu0
        %1765 = vmatprep.mubr.bf16.mxu0 0
        %1766 = vmatmul.mubr.bf16.gmra.mrb[0].mxu0 %v1666
        %v1767 = vpop.f32.mrb[0].mxu0
        %v1768 = vadd.f32 0.0, %v1767
        %v1769 = vpop.f32.mrb[0].mxu0
        %v1770 = vpop.f32.mrb[0].mxu0
        %v1771 = vadd.f32 0.0, %v1770
        %v1772 = vpop.f32.mrb[0].mxu0
        %1773 = vmatprep.mubr.bf16.mxu0 0
        %1774 = vmatmul.mubr.bf16.gmra.mrb[0].mxu0 %v1669
        %v1775 = vpop.f32.mrb[0].mxu0
        %v1776 = vadd.f32 0.0, %v1775
        %v1777 = vpop.f32.mrb[0].mxu0
        %v1778 = vpop.f32.mrb[0].mxu0
        %v1779 = vadd.f32 0.0, %v1778
        %v1780 = vpop.f32.mrb[0].mxu0
        %1781 = vmatprep.mubr.bf16.mxu0 0
        %1782 = vmatmul.mubr.bf16.gmra.mrb[0].mxu0 %v1672
        %v1783 = vpop.f32.mrb[0].mxu0
        %v1784 = vadd.f32 0.0, %v1783
        %v1785 = vpop.f32.mrb[0].mxu0
        %v1786 = vpop.f32.mrb[0].mxu0
        %v1787 = vadd.f32 0.0, %v1786
        %v1788 = vpop.f32.mrb[0].mxu0
        %1789 = vmatprep.mubr.bf16.mxu0 0
        %1790 = vmatmul.mubr.bf16.gmra.mrb[0].mxu0 %v1675
        %v1791 = vpop.f32.mrb[0].mxu0
        %v1792 = vadd.f32 0.0, %v1791
        %v1793 = vpop.f32.mrb[0].mxu0
        %v1794 = vpop.f32.mrb[0].mxu0
        %v1795 = vadd.f32 0.0, %v1794
        %v1796 = vpop.f32.mrb[0].mxu0
        %1797 = vmatprep.mubr.bf16.mxu0 0
        %1798 = vmatmul.mubr.bf16.gmra.mrb[0].mxu0 %v1678
        %v1799 = vpop.f32.mrb[0].mxu0
        %v1800 = vadd.f32 0.0, %v1799
        %v1801 = vpop.f32.mrb[0].mxu0
        %v1802 = vpop.f32.mrb[0].mxu0
        %v1803 = vadd.f32 0.0, %v1802
        %v1804 = vpop.f32.mrb[0].mxu0
        %1805 = vmatprep.mubr.bf16.mxu0 0
        %1806 = vmatmul.mubr.bf16.gmra.mrb[0].mxu0 %v1681
        %v1807 = vpop.f32.mrb[0].mxu0
        %v1808 = vadd.f32 0.0, %v1807
        %v1809 = vpop.f32.mrb[0].mxu0
        %v1810 = vpop.f32.mrb[0].mxu0
        %v1811 = vadd.f32 0.0, %v1810
        %v1812 = vpop.f32.mrb[0].mxu0
        %1813 = vmatprep.mubr.bf16.mxu0 0
        %1814 = vmatmul.mubr.bf16.gmra.mrb[0].mxu0 %v1684
        %v1815 = vpop.f32.mrb[0].mxu0
        %v1816 = vadd.f32 0.0, %v1815
        %v1817 = vpop.f32.mrb[0].mxu0
        %v1818 = vpop.f32.mrb[0].mxu0
        %v1819 = vadd.f32 0.0, %v1818
        %v1820 = vpop.f32.mrb[0].mxu0
        %1821 = vmatprep.mubr.bf16.mxu0 0
        %1822 = vmatmul.mubr.bf16.gmra.mrb[0].mxu0 %v1687
        %v1823 = vpop.f32.mrb[0].mxu0
        %v1824 = vadd.f32 0.0, %v1823
        %v1825 = vpop.f32.mrb[0].mxu0
        %v1826 = vpop.f32.mrb[0].mxu0
        %v1827 = vadd.f32 0.0, %v1826
        %v1828 = vpop.f32.mrb[0].mxu0
        %1829 = vmatprep.mubr.bf16.mxu0 0
        %1830 = vmatmul.mubr.bf16.gmra.mrb[0].mxu0 %v1690
        %v1831 = vpop.f32.mrb[0].mxu0
        %v1832 = vadd.f32 0.0, %v1831
        %v1833 = vpop.f32.mrb[0].mxu0
        %v1834 = vpop.f32.mrb[0].mxu0
        %v1835 = vadd.f32 0.0, %v1834
        %v1836 = vpop.f32.mrb[0].mxu0
        %1837 = vmatprep.mubr.bf16.mxu0 0
        %1838 = vmatmul.mubr.bf16.gmra.mrb[0].mxu0 %v1693
        %v1839 = vpop.f32.mrb[0].mxu0
        %v1840 = vadd.f32 0.0, %v1839
        %v1841 = vpop.f32.mrb[0].mxu0
        %v1842 = vpop.f32.mrb[0].mxu0
        %v1843 = vadd.f32 0.0, %v1842
        %v1844 = vpop.f32.mrb[0].mxu0
        %1845 = vmatprep.mubr.bf16.mxu0 0
        %1846 = vmatmul.mubr.bf16.gmra.mrb[0].mxu0 %v1696
        %v1847 = vpop.f32.mrb[0].mxu0
        %v1848 = vadd.f32 0.0, %v1847
        %v1849 = vpop.f32.mrb[0].mxu0
        %v1850 = vpop.f32.mrb[0].mxu0
        %v1851 = vadd.f32 0.0, %v1850
        %v1852 = vpop.f32.mrb[0].mxu0
        %1853 = vmatprep.mubr.bf16.mxu0 0
        %1854 = vmatmul.mubr.bf16.gmra.mrb[0].mxu0 %v1699
        %v1855 = vpop.f32.mrb[0].mxu0
        %v1856 = vadd.f32 0.0, %v1855
        %v1857 = vpop.f32.mrb[0].mxu0
        %v1858 = vpop.f32.mrb[0].mxu0
        %v1859 = vadd.f32 0.0, %v1858
        %v1860 = vpop.f32.mrb[0].mxu0
        %1861 = vdwg.mxu0
        %v1862 = vadd.f32 %v1556, %v1736
        %v1863 = vadd.f32 %v1557, %v1739
        %v1864 = vadd.f32 %v1558, %v1744
        %v1865 = vadd.f32 %v1559, %v1747
        %v1866 = vadd.f32 %v1560, %v1752
        %v1867 = vadd.f32 %v1561, %v1755
        %v1868 = vadd.f32 %v1562, %v1760
        %v1869 = vadd.f32 %v1563, %v1763
        %v1870 = vadd.f32 %v1564, %v1768
        %v1871 = vadd.f32 %v1565, %v1771
        %v1872 = vadd.f32 %v1566, %v1776
        %v1873 = vadd.f32 %v1567, %v1779
        %v1874 = vadd.f32 %v1568, %v1784
        %v1875 = vadd.f32 %v1569, %v1787
        %v1876 = vadd.f32 %v1570, %v1792
        %v1877 = vadd.f32 %v1571, %v1795
        %v1878 = vadd.f32 %v1572, %v1800
        %v1879 = vadd.f32 %v1573, %v1803
        %v1880 = vadd.f32 %v1574, %v1808
        %v1881 = vadd.f32 %v1575, %v1811
        %v1882 = vadd.f32 %v1576, %v1816
        %v1883 = vadd.f32 %v1577, %v1819
        %v1884 = vadd.f32 %v1578, %v1824
        %v1885 = vadd.f32 %v1579, %v1827
        %v1886 = vadd.f32 %v1580, %v1832
        %v1887 = vadd.f32 %v1581, %v1835
        %v1888 = vadd.f32 %v1582, %v1840
        %v1889 = vadd.f32 %v1583, %v1843
        %v1890 = vadd.f32 %v1584, %v1848
        %v1891 = vadd.f32 %v1585, %v1851
        %v1892 = vadd.f32 %v1586, %v1856
        %v1893 = vadd.f32 %v1587, %v1859
        %v1894 = vld [vmem:[%s702 + $0x1] sm:$0xff]
        %v1895 = vld [vmem:[%s702 + $0x9] sm:$0xff]
        %v1896 = vld [vmem:[%s702 + $0x19] sm:$0xff]
        %v1897 = vld [vmem:[%s702 + $0x21] sm:$0xff]
        %v1898 = vld [vmem:[%s702 + $0x31] sm:$0xff]
        %v1899 = vld [vmem:[%s702 + $0x39] sm:$0xff]
        %v1900 = vld [vmem:[%s702 + $0x49] sm:$0xff]
        %v1901 = vld [vmem:[%s702 + $0x51] sm:$0xff]
        %v1902 = vld [vmem:[%s702 + $0x61] sm:$0xff]
        %v1903 = vld [vmem:[%s702 + $0x69] sm:$0xff]
        %v1904 = vld [vmem:[%s702 + $0x79] sm:$0xff]
        %v1905 = vld [vmem:[%s702 + $0x81] sm:$0xff]
        %v1906 = vld [vmem:[%s702 + $0x91] sm:$0xff]
        %v1907 = vld [vmem:[%s702 + $0x99] sm:$0xff]
        %v1908 = vld [vmem:[%s702 + $0xa9] sm:$0xff]
        %v1909 = vld [vmem:[%s702 + $0xb1] sm:$0xff]
        %v1910 = vld [vmem:[%s702 + $0xc1] sm:$0xff]
        %v1911 = vld [vmem:[%s702 + $0xc9] sm:$0xff]
        %v1912 = vld [vmem:[%s702 + $0xd9] sm:$0xff]
        %v1913 = vld [vmem:[%s702 + $0xe1] sm:$0xff]
        %v1914 = vld [vmem:[%s702 + $0xf1] sm:$0xff]
        %v1915 = vld [vmem:[%s702 + $0xf9] sm:$0xff]
        %v1916 = vld [vmem:[%s702 + $0x109] sm:$0xff]
        %v1917 = vld [vmem:[%s702 + $0x111] sm:$0xff]
        %v1918 = vld [vmem:[%s702 + $0x121] sm:$0xff]
        %v1919 = vld [vmem:[%s702 + $0x129] sm:$0xff]
        %v1920 = vld [vmem:[%s702 + $0x139] sm:$0xff]
        %v1921 = vld [vmem:[%s702 + $0x141] sm:$0xff]
        %v1922 = vld [vmem:[%s702 + $0x151] sm:$0xff]
        %v1923 = vld [vmem:[%s702 + $0x159] sm:$0xff]
        %v1924 = vld [vmem:[%s702 + $0x169] sm:$0xff]
        %v1925 = vld [vmem:[%s702 + $0x171] sm:$0xff]
        %v1926 = vpack.c.bf16 %v1895, %v1894
        %v1927 = vpack.c.bf16 %v1897, %v1896
        %v1928 = vpack.c.bf16 %v1899, %v1898
        %v1929 = vpack.c.bf16 %v1901, %v1900
        %v1930 = vpack.c.bf16 %v1903, %v1902
        %v1931 = vpack.c.bf16 %v1905, %v1904
        %v1932 = vpack.c.bf16 %v1907, %v1906
        %v1933 = vpack.c.bf16 %v1909, %v1908
        %v1934 = vpack.c.bf16 %v1911, %v1910
        %v1935 = vpack.c.bf16 %v1913, %v1912
        %v1936 = vpack.c.bf16 %v1915, %v1914
        %v1937 = vpack.c.bf16 %v1917, %v1916
        %v1938 = vpack.c.bf16 %v1919, %v1918
        %v1939 = vpack.c.bf16 %v1921, %v1920
        %v1940 = vpack.c.bf16 %v1923, %v1922
        %v1941 = vpack.c.bf16 %v1925, %v1924
        %s1942 = scalar_lea.vmem [#allocation7], 64
        %v1943 = vld [vmem:[%s1942] sm:$0xf]
        %v1944 = vld [vmem:[%s1942 + $0x4] sm:$0xf]
        %v1945 = vld [vmem:[%s1942 + $0x8] sm:$0xf]
        %v1946 = vld [vmem:[%s1942 + $0xc] sm:$0xf]
        %v1951 = vunpack.c.l.b16 %v1943
        %v1952 = vunpack.c.l.b16 %v1944
        %v1953 = vunpack.c.l.b16 %v1945
        %v1954 = vunpack.c.l.b16 %v1946
        %v1955 = vpack.c.b16 %v1952, %v1951
        %v1956 = vpack.c.b16 %v1954, %v1953
        %v1960 = vsel %vm536, %v1926, 0
        %v1963 = vsel %vm536, %v1927, 0
        %v1966 = vsel %vm536, %v1928, 0
        %v1969 = vsel %vm536, %v1929, 0
        %v1972 = vsel %vm536, %v1930, 0
        %v1975 = vsel %vm536, %v1931, 0
        %v1978 = vsel %vm536, %v1932, 0
        %v1981 = vsel %vm536, %v1933, 0
        %v1984 = vsel %vm536, %v1934, 0
        %v1987 = vsel %vm536, %v1935, 0
        %v1990 = vsel %vm536, %v1936, 0
        %v1993 = vsel %vm536, %v1937, 0
        %v1996 = vsel %vm536, %v1938, 0
        %v1999 = vsel %vm536, %v1939, 0
        %v2002 = vsel %vm536, %v1940, 0
        %v2005 = vsel %vm536, %v1941, 0
        %2007 = vmatprep.subr.bf16.mxu0 0
        %2008 = vmatpush1.bf16.msra.mxu0 %v1955
        %2009 = vmatprep.subr.bf16.mxu0 0
        %2010 = vmatpush1.bf16.msra.mxu0 %v1956
        %2011 = vmatprep.subr.bf16.mxu0 0
        %2012 = vmatpush1.bf16.msra.mxu0 0
        %2013 = vmatprep.subr.bf16.mxu0 0
        %2014 = vmatpush1.bf16.msra.mxu0 0
        %2015 = vmatprep.subr.bf16.mxu0 0
        %2016 = vmatpush1.bf16.msra.mxu0 0
        %2017 = vmatprep.subr.bf16.mxu0 0
        %2018 = vmatpush1.bf16.msra.mxu0 0
        %2019 = vmatprep.subr.bf16.mxu0 0
        %2020 = vmatpush1.bf16.msra.mxu0 0
        %2021 = vmatprep.subr.bf16.mxu0 0
        %2022 = vmatpush1.bf16.msra.mxu0 0
        %2023 = vmatprep.subr.bf16.mxu0 0
        %2024 = vmatpush1.bf16.msra.mxu0 0
        %2025 = vmatprep.subr.bf16.mxu0 0
        %2026 = vmatpush1.bf16.msra.mxu0 0
        %2027 = vmatprep.subr.bf16.mxu0 0
        %2028 = vmatpush1.bf16.msra.mxu0 0
        %2029 = vmatprep.subr.bf16.mxu0 0
        %2030 = vmatpush1.bf16.msra.mxu0 0
        %2031 = vmatprep.subr.bf16.mxu0 0
        %2032 = vmatpush1.bf16.msra.mxu0 0
        %2033 = vmatprep.subr.bf16.mxu0 0
        %2034 = vmatpush1.bf16.msra.mxu0 0
        %2035 = vmatprep.subr.bf16.mxu0 0
        %2036 = vmatpush1.bf16.msra.mxu0 0
        %2037 = vmatprep.subr.bf16.mxu0 0
        %2038 = vmatpush1.bf16.msra.mxu0 0
        %2039 = vmatprep.mubr.bf16.mxu0 0
        %2040 = vmatmul.mubr.bf16.gmra.mrb[0].mxu0 %v1960
        %v2041 = vpop.f32.mrb[0].mxu0
        %v2042 = vadd.f32 0.0, %v2041
        %v2043 = vpop.f32.mrb[0].mxu0
        %v2044 = vpop.f32.mrb[0].mxu0
        %v2045 = vadd.f32 0.0, %v2044
        %v2046 = vpop.f32.mrb[0].mxu0
        %2047 = vmatprep.mubr.bf16.mxu0 0
        %2048 = vmatmul.mubr.bf16.gmra.mrb[0].mxu0 %v1963
        %v2049 = vpop.f32.mrb[0].mxu0
        %v2050 = vadd.f32 0.0, %v2049
        %v2051 = vpop.f32.mrb[0].mxu0
        %v2052 = vpop.f32.mrb[0].mxu0
        %v2053 = vadd.f32 0.0, %v2052
        %v2054 = vpop.f32.mrb[0].mxu0
        %2055 = vmatprep.mubr.bf16.mxu0 0
        %2056 = vmatmul.mubr.bf16.gmra.mrb[0].mxu0 %v1966
        %v2057 = vpop.f32.mrb[0].mxu0
        %v2058 = vadd.f32 0.0, %v2057
        %v2059 = vpop.f32.mrb[0].mxu0
        %v2060 = vpop.f32.mrb[0].mxu0
        %v2061 = vadd.f32 0.0, %v2060
        %v2062 = vpop.f32.mrb[0].mxu0
        %2063 = vmatprep.mubr.bf16.mxu0 0
        %2064 = vmatmul.mubr.bf16.gmra.mrb[0].mxu0 %v1969
        %v2065 = vpop.f32.mrb[0].mxu0
        %v2066 = vadd.f32 0.0, %v2065
        %v2067 = vpop.f32.mrb[0].mxu0
        %v2068 = vpop.f32.mrb[0].mxu0
        %v2069 = vadd.f32 0.0, %v2068
        %v2070 = vpop.f32.mrb[0].mxu0
        %2071 = vmatprep.mubr.bf16.mxu0 0
        %2072 = vmatmul.mubr.bf16.gmra.mrb[0].mxu0 %v1972
        %v2073 = vpop.f32.mrb[0].mxu0
        %v2074 = vadd.f32 0.0, %v2073
        %v2075 = vpop.f32.mrb[0].mxu0
        %v2076 = vpop.f32.mrb[0].mxu0
        %v2077 = vadd.f32 0.0, %v2076
        %v2078 = vpop.f32.mrb[0].mxu0
        %2079 = vmatprep.mubr.bf16.mxu0 0
        %2080 = vmatmul.mubr.bf16.gmra.mrb[0].mxu0 %v1975
        %v2081 = vpop.f32.mrb[0].mxu0
        %v2082 = vadd.f32 0.0, %v2081
        %v2083 = vpop.f32.mrb[0].mxu0
        %v2084 = vpop.f32.mrb[0].mxu0
        %v2085 = vadd.f32 0.0, %v2084
        %v2086 = vpop.f32.mrb[0].mxu0
        %2087 = vmatprep.mubr.bf16.mxu0 0
        %2088 = vmatmul.mubr.bf16.gmra.mrb[0].mxu0 %v1978
        %v2089 = vpop.f32.mrb[0].mxu0
        %v2090 = vadd.f32 0.0, %v2089
        %v2091 = vpop.f32.mrb[0].mxu0
        %v2092 = vpop.f32.mrb[0].mxu0
        %v2093 = vadd.f32 0.0, %v2092
        %v2094 = vpop.f32.mrb[0].mxu0
        %2095 = vmatprep.mubr.bf16.mxu0 0
        %2096 = vmatmul.mubr.bf16.gmra.mrb[0].mxu0 %v1981
        %v2097 = vpop.f32.mrb[0].mxu0
        %v2098 = vadd.f32 0.0, %v2097
        %v2099 = vpop.f32.mrb[0].mxu0
        %v2100 = vpop.f32.mrb[0].mxu0
        %v2101 = vadd.f32 0.0, %v2100
        %v2102 = vpop.f32.mrb[0].mxu0
        %2103 = vmatprep.mubr.bf16.mxu0 0
        %2104 = vmatmul.mubr.bf16.gmra.mrb[0].mxu0 %v1984
        %v2105 = vpop.f32.mrb[0].mxu0
        %v2106 = vadd.f32 0.0, %v2105
        %v2107 = vpop.f32.mrb[0].mxu0
        %v2108 = vpop.f32.mrb[0].mxu0
        %v2109 = vadd.f32 0.0, %v2108
        %v2110 = vpop.f32.mrb[0].mxu0
        %2111 = vmatprep.mubr.bf16.mxu0 0
        %2112 = vmatmul.mubr.bf16.gmra.mrb[0].mxu0 %v1987
        %v2113 = vpop.f32.mrb[0].mxu0
        %v2114 = vadd.f32 0.0, %v2113
        %v2115 = vpop.f32.mrb[0].mxu0
        %v2116 = vpop.f32.mrb[0].mxu0
        %v2117 = vadd.f32 0.0, %v2116
        %v2118 = vpop.f32.mrb[0].mxu0
        %2119 = vmatprep.mubr.bf16.mxu0 0
        %2120 = vmatmul.mubr.bf16.gmra.mrb[0].mxu0 %v1990
        %v2121 = vpop.f32.mrb[0].mxu0
        %v2122 = vadd.f32 0.0, %v2121
        %v2123 = vpop.f32.mrb[0].mxu0
        %v2124 = vpop.f32.mrb[0].mxu0
        %v2125 = vadd.f32 0.0, %v2124
        %v2126 = vpop.f32.mrb[0].mxu0
        %2127 = vmatprep.mubr.bf16.mxu0 0
        %2128 = vmatmul.mubr.bf16.gmra.mrb[0].mxu0 %v1993
        %v2129 = vpop.f32.mrb[0].mxu0
        %v2130 = vadd.f32 0.0, %v2129
        %v2131 = vpop.f32.mrb[0].mxu0
        %v2132 = vpop.f32.mrb[0].mxu0
        %v2133 = vadd.f32 0.0, %v2132
        %v2134 = vpop.f32.mrb[0].mxu0
        %2135 = vmatprep.mubr.bf16.mxu0 0
        %2136 = vmatmul.mubr.bf16.gmra.mrb[0].mxu0 %v1996
        %v2137 = vpop.f32.mrb[0].mxu0
        %v2138 = vadd.f32 0.0, %v2137
        %v2139 = vpop.f32.mrb[0].mxu0
        %v2140 = vpop.f32.mrb[0].mxu0
        %v2141 = vadd.f32 0.0, %v2140
        %v2142 = vpop.f32.mrb[0].mxu0
        %2143 = vmatprep.mubr.bf16.mxu0 0
        %2144 = vmatmul.mubr.bf16.gmra.mrb[0].mxu0 %v1999
        %v2145 = vpop.f32.mrb[0].mxu0
        %v2146 = vadd.f32 0.0, %v2145
        %v2147 = vpop.f32.mrb[0].mxu0
        %v2148 = vpop.f32.mrb[0].mxu0
        %v2149 = vadd.f32 0.0, %v2148
        %v2150 = vpop.f32.mrb[0].mxu0
        %2151 = vmatprep.mubr.bf16.mxu0 0
        %2152 = vmatmul.mubr.bf16.gmra.mrb[0].mxu0 %v2002
        %v2153 = vpop.f32.mrb[0].mxu0
        %v2154 = vadd.f32 0.0, %v2153
        %v2155 = vpop.f32.mrb[0].mxu0
        %v2156 = vpop.f32.mrb[0].mxu0
        %v2157 = vadd.f32 0.0, %v2156
        %v2158 = vpop.f32.mrb[0].mxu0
        %2159 = vmatprep.mubr.bf16.mxu0 0
        %2160 = vmatmul.mubr.bf16.gmra.mrb[0].mxu0 %v2005
        %v2161 = vpop.f32.mrb[0].mxu0
        %v2162 = vadd.f32 0.0, %v2161
        %v2163 = vpop.f32.mrb[0].mxu0
        %v2164 = vpop.f32.mrb[0].mxu0
        %v2165 = vadd.f32 0.0, %v2164
        %v2166 = vpop.f32.mrb[0].mxu0
        %2167 = vdwg.mxu0
        %v2168 = vadd.f32 %v1862, %v2042
        %v2169 = vadd.f32 %v1863, %v2045
        %v2170 = vadd.f32 %v1864, %v2050
        %v2171 = vadd.f32 %v1865, %v2053
        %v2172 = vadd.f32 %v1866, %v2058
        %v2173 = vadd.f32 %v1867, %v2061
        %v2174 = vadd.f32 %v1868, %v2066
        %v2175 = vadd.f32 %v1869, %v2069
        %v2176 = vadd.f32 %v1870, %v2074
        %v2177 = vadd.f32 %v1871, %v2077
        %v2178 = vadd.f32 %v1872, %v2082
        %v2179 = vadd.f32 %v1873, %v2085
        %v2180 = vadd.f32 %v1874, %v2090
        %v2181 = vadd.f32 %v1875, %v2093
        %v2182 = vadd.f32 %v1876, %v2098
        %v2183 = vadd.f32 %v1877, %v2101
        %v2184 = vadd.f32 %v1878, %v2106
        %v2185 = vadd.f32 %v1879, %v2109
        %v2186 = vadd.f32 %v1880, %v2114
        %v2187 = vadd.f32 %v1881, %v2117
        %v2188 = vadd.f32 %v1882, %v2122
        %v2189 = vadd.f32 %v1883, %v2125
        %v2190 = vadd.f32 %v1884, %v2130
        %v2191 = vadd.f32 %v1885, %v2133
        %v2192 = vadd.f32 %v1886, %v2138
        %v2193 = vadd.f32 %v1887, %v2141
        %v2194 = vadd.f32 %v1888, %v2146
        %v2195 = vadd.f32 %v1889, %v2149
        %v2196 = vadd.f32 %v1890, %v2154
        %v2197 = vadd.f32 %v1891, %v2157
        %v2198 = vadd.f32 %v1892, %v2162
        %v2199 = vadd.f32 %v1893, %v2165
        %v2200 = vld [vmem:[%s702 + $0x2] sm:$0xff]
        %v2201 = vld [vmem:[%s702 + $0xa] sm:$0xff]
        %v2202 = vld [vmem:[%s702 + $0x1a] sm:$0xff]
        %v2203 = vld [vmem:[%s702 + $0x22] sm:$0xff]
        %v2204 = vld [vmem:[%s702 + $0x32] sm:$0xff]
        %v2205 = vld [vmem:[%s702 + $0x3a] sm:$0xff]
        %v2206 = vld [vmem:[%s702 + $0x4a] sm:$0xff]
        %v2207 = vld [vmem:[%s702 + $0x52] sm:$0xff]
        %v2208 = vld [vmem:[%s702 + $0x62] sm:$0xff]
        %v2209 = vld [vmem:[%s702 + $0x6a] sm:$0xff]
        %v2210 = vld [vmem:[%s702 + $0x7a] sm:$0xff]
        %v2211 = vld [vmem:[%s702 + $0x82] sm:$0xff]
        %v2212 = vld [vmem:[%s702 + $0x92] sm:$0xff]
        %v2213 = vld [vmem:[%s702 + $0x9a] sm:$0xff]
        %v2214 = vld [vmem:[%s702 + $0xaa] sm:$0xff]
        %v2215 = vld [vmem:[%s702 + $0xb2] sm:$0xff]
        %v2216 = vld [vmem:[%s702 + $0xc2] sm:$0xff]
        %v2217 = vld [vmem:[%s702 + $0xca] sm:$0xff]
        %v2218 = vld [vmem:[%s702 + $0xda] sm:$0xff]
        %v2219 = vld [vmem:[%s702 + $0xe2] sm:$0xff]
        %v2220 = vld [vmem:[%s702 + $0xf2] sm:$0xff]
        %v2221 = vld [vmem:[%s702 + $0xfa] sm:$0xff]
        %v2222 = vld [vmem:[%s702 + $0x10a] sm:$0xff]
        %v2223 = vld [vmem:[%s702 + $0x112] sm:$0xff]
        %v2224 = vld [vmem:[%s702 + $0x122] sm:$0xff]
        %v2225 = vld [vmem:[%s702 + $0x12a] sm:$0xff]
        %v2226 = vld [vmem:[%s702 + $0x13a] sm:$0xff]
        %v2227 = vld [vmem:[%s702 + $0x142] sm:$0xff]
        %v2228 = vld [vmem:[%s702 + $0x152] sm:$0xff]
        %v2229 = vld [vmem:[%s702 + $0x15a] sm:$0xff]
        %v2230 = vld [vmem:[%s702 + $0x16a] sm:$0xff]
        %v2231 = vld [vmem:[%s702 + $0x172] sm:$0xff]
        %v2232 = vpack.c.bf16 %v2201, %v2200
        %v2233 = vpack.c.bf16 %v2203, %v2202
        %v2234 = vpack.c.bf16 %v2205, %v2204
        %v2235 = vpack.c.bf16 %v2207, %v2206
        %v2236 = vpack.c.bf16 %v2209, %v2208
        %v2237 = vpack.c.bf16 %v2211, %v2210
        %v2238 = vpack.c.bf16 %v2213, %v2212
        %v2239 = vpack.c.bf16 %v2215, %v2214
        %v2240 = vpack.c.bf16 %v2217, %v2216
        %v2241 = vpack.c.bf16 %v2219, %v2218
        %v2242 = vpack.c.bf16 %v2221, %v2220
        %v2243 = vpack.c.bf16 %v2223, %v2222
        %v2244 = vpack.c.bf16 %v2225, %v2224
        %v2245 = vpack.c.bf16 %v2227, %v2226
        %v2246 = vpack.c.bf16 %v2229, %v2228
        %v2247 = vpack.c.bf16 %v2231, %v2230
        %s2248 = scalar_lea.vmem [#allocation7], 80
        %v2249 = vld [vmem:[%s2248] sm:$0xf]
        %v2250 = vld [vmem:[%s2248 + $0x4] sm:$0xf]
        %v2251 = vld [vmem:[%s2248 + $0x8] sm:$0xf]
        %v2252 = vld [vmem:[%s2248 + $0xc] sm:$0xf]
        %v2257 = vunpack.c.l.b16 %v2249
        %v2258 = vunpack.c.l.b16 %v2250
        %v2259 = vunpack.c.l.b16 %v2251
        %v2260 = vunpack.c.l.b16 %v2252
        %v2261 = vpack.c.b16 %v2258, %v2257
        %v2262 = vpack.c.b16 %v2260, %v2259
        %v2266 = vsel %vm536, %v2232, 0
        %v2269 = vsel %vm536, %v2233, 0
        %v2272 = vsel %vm536, %v2234, 0
        %v2275 = vsel %vm536, %v2235, 0
        %v2278 = vsel %vm536, %v2236, 0
        %v2281 = vsel %vm536, %v2237, 0
        %v2284 = vsel %vm536, %v2238, 0
        %v2287 = vsel %vm536, %v2239, 0
        %v2290 = vsel %vm536, %v2240, 0
        %v2293 = vsel %vm536, %v2241, 0
        %v2296 = vsel %vm536, %v2242, 0
        %v2299 = vsel %vm536, %v2243, 0
        %v2302 = vsel %vm536, %v2244, 0
        %v2305 = vsel %vm536, %v2245, 0
        %v2308 = vsel %vm536, %v2246, 0
        %v2311 = vsel %vm536, %v2247, 0
        %2313 = vmatprep.subr.bf16.mxu0 0
        %2314 = vmatpush1.bf16.msra.mxu0 %v2261
        %2315 = vmatprep.subr.bf16.mxu0 0
        %2316 = vmatpush1.bf16.msra.mxu0 %v2262
        %2317 = vmatprep.subr.bf16.mxu0 0
        %2318 = vmatpush1.bf16.msra.mxu0 0
        %2319 = vmatprep.subr.bf16.mxu0 0
        %2320 = vmatpush1.bf16.msra.mxu0 0
        %2321 = vmatprep.subr.bf16.mxu0 0
        %2322 = vmatpush1.bf16.msra.mxu0 0
        %2323 = vmatprep.subr.bf16.mxu0 0
        %2324 = vmatpush1.bf16.msra.mxu0 0
        %2325 = vmatprep.subr.bf16.mxu0 0
        %2326 = vmatpush1.bf16.msra.mxu0 0
        %2327 = vmatprep.subr.bf16.mxu0 0
        %2328 = vmatpush1.bf16.msra.mxu0 0
        %2329 = vmatprep.subr.bf16.mxu0 0
        %2330 = vmatpush1.bf16.msra.mxu0 0
        %2331 = vmatprep.subr.bf16.mxu0 0
        %2332 = vmatpush1.bf16.msra.mxu0 0
        %2333 = vmatprep.subr.bf16.mxu0 0
        %2334 = vmatpush1.bf16.msra.mxu0 0
        %2335 = vmatprep.subr.bf16.mxu0 0
        %2336 = vmatpush1.bf16.msra.mxu0 0
        %2337 = vmatprep.subr.bf16.mxu0 0
        %2338 = vmatpush1.bf16.msra.mxu0 0
        %2339 = vmatprep.subr.bf16.mxu0 0
        %2340 = vmatpush1.bf16.msra.mxu0 0
        %2341 = vmatprep.subr.bf16.mxu0 0
        %2342 = vmatpush1.bf16.msra.mxu0 0
        %2343 = vmatprep.subr.bf16.mxu0 0
        %2344 = vmatpush1.bf16.msra.mxu0 0
        %2345 = vmatprep.mubr.bf16.mxu0 0
        %2346 = vmatmul.mubr.bf16.gmra.mrb[0].mxu0 %v2266
        %v2347 = vpop.f32.mrb[0].mxu0
        %v2348 = vadd.f32 0.0, %v2347
        %v2349 = vpop.f32.mrb[0].mxu0
        %v2350 = vpop.f32.mrb[0].mxu0
        %v2351 = vadd.f32 0.0, %v2350
        %v2352 = vpop.f32.mrb[0].mxu0
        %2353 = vmatprep.mubr.bf16.mxu0 0
        %2354 = vmatmul.mubr.bf16.gmra.mrb[0].mxu0 %v2269
        %v2355 = vpop.f32.mrb[0].mxu0
        %v2356 = vadd.f32 0.0, %v2355
        %v2357 = vpop.f32.mrb[0].mxu0
        %v2358 = vpop.f32.mrb[0].mxu0
        %v2359 = vadd.f32 0.0, %v2358
        %v2360 = vpop.f32.mrb[0].mxu0
        %2361 = vmatprep.mubr.bf16.mxu0 0
        %2362 = vmatmul.mubr.bf16.gmra.mrb[0].mxu0 %v2272
        %v2363 = vpop.f32.mrb[0].mxu0
        %v2364 = vadd.f32 0.0, %v2363
        %v2365 = vpop.f32.mrb[0].mxu0
        %v2366 = vpop.f32.mrb[0].mxu0
        %v2367 = vadd.f32 0.0, %v2366
        %v2368 = vpop.f32.mrb[0].mxu0
        %2369 = vmatprep.mubr.bf16.mxu0 0
        %2370 = vmatmul.mubr.bf16.gmra.mrb[0].mxu0 %v2275
        %v2371 = vpop.f32.mrb[0].mxu0
        %v2372 = vadd.f32 0.0, %v2371
        %v2373 = vpop.f32.mrb[0].mxu0
        %v2374 = vpop.f32.mrb[0].mxu0
        %v2375 = vadd.f32 0.0, %v2374
        %v2376 = vpop.f32.mrb[0].mxu0
        %2377 = vmatprep.mubr.bf16.mxu0 0
        %2378 = vmatmul.mubr.bf16.gmra.mrb[0].mxu0 %v2278
        %v2379 = vpop.f32.mrb[0].mxu0
        %v2380 = vadd.f32 0.0, %v2379
        %v2381 = vpop.f32.mrb[0].mxu0
        %v2382 = vpop.f32.mrb[0].mxu0
        %v2383 = vadd.f32 0.0, %v2382
        %v2384 = vpop.f32.mrb[0].mxu0
        %2385 = vmatprep.mubr.bf16.mxu0 0
        %2386 = vmatmul.mubr.bf16.gmra.mrb[0].mxu0 %v2281
        %v2387 = vpop.f32.mrb[0].mxu0
        %v2388 = vadd.f32 0.0, %v2387
        %v2389 = vpop.f32.mrb[0].mxu0
        %v2390 = vpop.f32.mrb[0].mxu0
        %v2391 = vadd.f32 0.0, %v2390
        %v2392 = vpop.f32.mrb[0].mxu0
        %2393 = vmatprep.mubr.bf16.mxu0 0
        %2394 = vmatmul.mubr.bf16.gmra.mrb[0].mxu0 %v2284
        %v2395 = vpop.f32.mrb[0].mxu0
        %v2396 = vadd.f32 0.0, %v2395
        %v2397 = vpop.f32.mrb[0].mxu0
        %v2398 = vpop.f32.mrb[0].mxu0
        %v2399 = vadd.f32 0.0, %v2398
        %v2400 = vpop.f32.mrb[0].mxu0
        %2401 = vmatprep.mubr.bf16.mxu0 0
        %2402 = vmatmul.mubr.bf16.gmra.mrb[0].mxu0 %v2287
        %v2403 = vpop.f32.mrb[0].mxu0
        %v2404 = vadd.f32 0.0, %v2403
        %v2405 = vpop.f32.mrb[0].mxu0
        %v2406 = vpop.f32.mrb[0].mxu0
        %v2407 = vadd.f32 0.0, %v2406
        %v2408 = vpop.f32.mrb[0].mxu0
        %2409 = vmatprep.mubr.bf16.mxu0 0
        %2410 = vmatmul.mubr.bf16.gmra.mrb[0].mxu0 %v2290
        %v2411 = vpop.f32.mrb[0].mxu0
        %v2412 = vadd.f32 0.0, %v2411
        %v2413 = vpop.f32.mrb[0].mxu0
        %v2414 = vpop.f32.mrb[0].mxu0
        %v2415 = vadd.f32 0.0, %v2414
        %v2416 = vpop.f32.mrb[0].mxu0
        %2417 = vmatprep.mubr.bf16.mxu0 0
        %2418 = vmatmul.mubr.bf16.gmra.mrb[0].mxu0 %v2293
        %v2419 = vpop.f32.mrb[0].mxu0
        %v2420 = vadd.f32 0.0, %v2419
        %v2421 = vpop.f32.mrb[0].mxu0
        %v2422 = vpop.f32.mrb[0].mxu0
        %v2423 = vadd.f32 0.0, %v2422
        %v2424 = vpop.f32.mrb[0].mxu0
        %2425 = vmatprep.mubr.bf16.mxu0 0
        %2426 = vmatmul.mubr.bf16.gmra.mrb[0].mxu0 %v2296
        %v2427 = vpop.f32.mrb[0].mxu0
        %v2428 = vadd.f32 0.0, %v2427
        %v2429 = vpop.f32.mrb[0].mxu0
        %v2430 = vpop.f32.mrb[0].mxu0
        %v2431 = vadd.f32 0.0, %v2430
        %v2432 = vpop.f32.mrb[0].mxu0
        %2433 = vmatprep.mubr.bf16.mxu0 0
        %2434 = vmatmul.mubr.bf16.gmra.mrb[0].mxu0 %v2299
        %v2435 = vpop.f32.mrb[0].mxu0
        %v2436 = vadd.f32 0.0, %v2435
        %v2437 = vpop.f32.mrb[0].mxu0
        %v2438 = vpop.f32.mrb[0].mxu0
        %v2439 = vadd.f32 0.0, %v2438
        %v2440 = vpop.f32.mrb[0].mxu0
        %2441 = vmatprep.mubr.bf16.mxu0 0
        %2442 = vmatmul.mubr.bf16.gmra.mrb[0].mxu0 %v2302
        %v2443 = vpop.f32.mrb[0].mxu0
        %v2444 = vadd.f32 0.0, %v2443
        %v2445 = vpop.f32.mrb[0].mxu0
        %v2446 = vpop.f32.mrb[0].mxu0
        %v2447 = vadd.f32 0.0, %v2446
        %v2448 = vpop.f32.mrb[0].mxu0
        %2449 = vmatprep.mubr.bf16.mxu0 0
        %2450 = vmatmul.mubr.bf16.gmra.mrb[0].mxu0 %v2305
        %v2451 = vpop.f32.mrb[0].mxu0
        %v2452 = vadd.f32 0.0, %v2451
        %v2453 = vpop.f32.mrb[0].mxu0
        %v2454 = vpop.f32.mrb[0].mxu0
        %v2455 = vadd.f32 0.0, %v2454
        %v2456 = vpop.f32.mrb[0].mxu0
        %2457 = vmatprep.mubr.bf16.mxu0 0
        %2458 = vmatmul.mubr.bf16.gmra.mrb[0].mxu0 %v2308
        %v2459 = vpop.f32.mrb[0].mxu0
        %v2460 = vadd.f32 0.0, %v2459
        %v2461 = vpop.f32.mrb[0].mxu0
        %v2462 = vpop.f32.mrb[0].mxu0
        %v2463 = vadd.f32 0.0, %v2462
        %v2464 = vpop.f32.mrb[0].mxu0
        %2465 = vmatprep.mubr.bf16.mxu0 0
        %2466 = vmatmul.mubr.bf16.gmra.mrb[0].mxu0 %v2311
        %v2467 = vpop.f32.mrb[0].mxu0
        %v2468 = vadd.f32 0.0, %v2467
        %v2469 = vpop.f32.mrb[0].mxu0
        %v2470 = vpop.f32.mrb[0].mxu0
        %v2471 = vadd.f32 0.0, %v2470
        %v2472 = vpop.f32.mrb[0].mxu0
        %2473 = vdwg.mxu0
        %v2474 = vadd.f32 %v2168, %v2348
        %v2475 = vadd.f32 %v2169, %v2351
        %v2476 = vadd.f32 %v2170, %v2356
        %v2477 = vadd.f32 %v2171, %v2359
        %v2478 = vadd.f32 %v2172, %v2364
        %v2479 = vadd.f32 %v2173, %v2367
        %v2480 = vadd.f32 %v2174, %v2372
        %v2481 = vadd.f32 %v2175, %v2375
        %v2482 = vadd.f32 %v2176, %v2380
        %v2483 = vadd.f32 %v2177, %v2383
        %v2484 = vadd.f32 %v2178, %v2388
        %v2485 = vadd.f32 %v2179, %v2391
        %v2486 = vadd.f32 %v2180, %v2396
        %v2487 = vadd.f32 %v2181, %v2399
        %v2488 = vadd.f32 %v2182, %v2404
        %v2489 = vadd.f32 %v2183, %v2407
        %v2490 = vadd.f32 %v2184, %v2412
        %v2491 = vadd.f32 %v2185, %v2415
        %v2492 = vadd.f32 %v2186, %v2420
        %v2493 = vadd.f32 %v2187, %v2423
        %v2494 = vadd.f32 %v2188, %v2428
        %v2495 = vadd.f32 %v2189, %v2431
        %v2496 = vadd.f32 %v2190, %v2436
        %v2497 = vadd.f32 %v2191, %v2439
        %v2498 = vadd.f32 %v2192, %v2444
        %v2499 = vadd.f32 %v2193, %v2447
        %v2500 = vadd.f32 %v2194, %v2452
        %v2501 = vadd.f32 %v2195, %v2455
        %v2502 = vadd.f32 %v2196, %v2460
        %v2503 = vadd.f32 %v2197, %v2463
        %v2504 = vadd.f32 %v2198, %v2468
        %v2505 = vadd.f32 %v2199, %v2471
        %s2506 = scalar_lea.vmem [#allocation2], 48
        %v2507 = vld [vmem:[%s2506] sm:$0xff]
        %v2508 = vld [vmem:[%s2506 + $0x8] sm:$0xff]
        %v2509 = vld [vmem:[%s2506 + $0x18] sm:$0xff]
        %v2510 = vld [vmem:[%s2506 + $0x20] sm:$0xff]
        %v2511 = vld [vmem:[%s2506 + $0x30] sm:$0xff]
        %v2512 = vld [vmem:[%s2506 + $0x38] sm:$0xff]
        %v2513 = vld [vmem:[%s2506 + $0x48] sm:$0xff]
        %v2514 = vld [vmem:[%s2506 + $0x50] sm:$0xff]
        %v2515 = vld [vmem:[%s2506 + $0x60] sm:$0xff]
        %v2516 = vld [vmem:[%s2506 + $0x68] sm:$0xff]
        %v2517 = vld [vmem:[%s2506 + $0x78] sm:$0xff]
        %v2518 = vld [vmem:[%s2506 + $0x80] sm:$0xff]
        %v2519 = vld [vmem:[%s2506 + $0x90] sm:$0xff]
        %v2520 = vld [vmem:[%s2506 + $0x98] sm:$0xff]
        %v2521 = vld [vmem:[%s2506 + $0xa8] sm:$0xff]
        %v2522 = vld [vmem:[%s2506 + $0xb0] sm:$0xff]
        %v2523 = vld [vmem:[%s2506 + $0xc0] sm:$0xff]
        %v2524 = vld [vmem:[%s2506 + $0xc8] sm:$0xff]
        %v2525 = vld [vmem:[%s2506 + $0xd8] sm:$0xff]
        %v2526 = vld [vmem:[%s2506 + $0xe0] sm:$0xff]
        %v2527 = vld [vmem:[%s2506 + $0xf0] sm:$0xff]
        %v2528 = vld [vmem:[%s2506 + $0xf8] sm:$0xff]
        %v2529 = vld [vmem:[%s2506 + $0x108] sm:$0xff]
        %v2530 = vld [vmem:[%s2506 + $0x110] sm:$0xff]
        %v2531 = vld [vmem:[%s2506 + $0x120] sm:$0xff]
        %v2532 = vld [vmem:[%s2506 + $0x128] sm:$0xff]
        %v2533 = vld [vmem:[%s2506 + $0x138] sm:$0xff]
        %v2534 = vld [vmem:[%s2506 + $0x140] sm:$0xff]
        %v2535 = vld [vmem:[%s2506 + $0x150] sm:$0xff]
        %v2536 = vld [vmem:[%s2506 + $0x158] sm:$0xff]
        %v2537 = vld [vmem:[%s2506 + $0x168] sm:$0xff]
        %v2538 = vld [vmem:[%s2506 + $0x170] sm:$0xff]
        %v2539 = vpack.c.bf16 %v2508, %v2507
        %v2540 = vpack.c.bf16 %v2510, %v2509
        %v2541 = vpack.c.bf16 %v2512, %v2511
        %v2542 = vpack.c.bf16 %v2514, %v2513
        %v2543 = vpack.c.bf16 %v2516, %v2515
        %v2544 = vpack.c.bf16 %v2518, %v2517
        %v2545 = vpack.c.bf16 %v2520, %v2519
        %v2546 = vpack.c.bf16 %v2522, %v2521
        %v2547 = vpack.c.bf16 %v2524, %v2523
        %v2548 = vpack.c.bf16 %v2526, %v2525
        %v2549 = vpack.c.bf16 %v2528, %v2527
        %v2550 = vpack.c.bf16 %v2530, %v2529
        %v2551 = vpack.c.bf16 %v2532, %v2531
        %v2552 = vpack.c.bf16 %v2534, %v2533
        %v2553 = vpack.c.bf16 %v2536, %v2535
        %v2554 = vpack.c.bf16 %v2538, %v2537
        %s2555 = scalar_lea.vmem [#allocation7], 96
        %v2556 = vld [vmem:[%s2555] sm:$0xf]
        %v2557 = vld [vmem:[%s2555 + $0x4] sm:$0xf]
        %v2558 = vld [vmem:[%s2555 + $0x8] sm:$0xf]
        %v2559 = vld [vmem:[%s2555 + $0xc] sm:$0xf]
        %v2564 = vunpack.c.l.b16 %v2556
        %v2565 = vunpack.c.l.b16 %v2557
        %v2566 = vunpack.c.l.b16 %v2558
        %v2567 = vunpack.c.l.b16 %v2559
        %v2568 = vpack.c.b16 %v2565, %v2564
        %v2569 = vpack.c.b16 %v2567, %v2566
        %v2573 = vsel %vm536, %v2539, 0
        %v2576 = vsel %vm536, %v2540, 0
        %v2579 = vsel %vm536, %v2541, 0
        %v2582 = vsel %vm536, %v2542, 0
        %v2585 = vsel %vm536, %v2543, 0
        %v2588 = vsel %vm536, %v2544, 0
        %v2591 = vsel %vm536, %v2545, 0
        %v2594 = vsel %vm536, %v2546, 0
        %v2597 = vsel %vm536, %v2547, 0
        %v2600 = vsel %vm536, %v2548, 0
        %v2603 = vsel %vm536, %v2549, 0
        %v2606 = vsel %vm536, %v2550, 0
        %v2609 = vsel %vm536, %v2551, 0
        %v2612 = vsel %vm536, %v2552, 0
        %v2615 = vsel %vm536, %v2553, 0
        %v2618 = vsel %vm536, %v2554, 0
        %2620 = vmatprep.subr.bf16.mxu0 0
        %2621 = vmatpush1.bf16.msra.mxu0 %v2568
        %2622 = vmatprep.subr.bf16.mxu0 0
        %2623 = vmatpush1.bf16.msra.mxu0 %v2569
        %2624 = vmatprep.subr.bf16.mxu0 0
        %2625 = vmatpush1.bf16.msra.mxu0 0
        %2626 = vmatprep.subr.bf16.mxu0 0
        %2627 = vmatpush1.bf16.msra.mxu0 0
        %2628 = vmatprep.subr.bf16.mxu0 0
        %2629 = vmatpush1.bf16.msra.mxu0 0
        %2630 = vmatprep.subr.bf16.mxu0 0
        %2631 = vmatpush1.bf16.msra.mxu0 0
        %2632 = vmatprep.subr.bf16.mxu0 0
        %2633 = vmatpush1.bf16.msra.mxu0 0
        %2634 = vmatprep.subr.bf16.mxu0 0
        %2635 = vmatpush1.bf16.msra.mxu0 0
        %2636 = vmatprep.subr.bf16.mxu0 0
        %2637 = vmatpush1.bf16.msra.mxu0 0
        %2638 = vmatprep.subr.bf16.mxu0 0
        %2639 = vmatpush1.bf16.msra.mxu0 0
        %2640 = vmatprep.subr.bf16.mxu0 0
        %2641 = vmatpush1.bf16.msra.mxu0 0
        %2642 = vmatprep.subr.bf16.mxu0 0
        %2643 = vmatpush1.bf16.msra.mxu0 0
        %2644 = vmatprep.subr.bf16.mxu0 0
        %2645 = vmatpush1.bf16.msra.mxu0 0
        %2646 = vmatprep.subr.bf16.mxu0 0
        %2647 = vmatpush1.bf16.msra.mxu0 0
        %2648 = vmatprep.subr.bf16.mxu0 0
        %2649 = vmatpush1.bf16.msra.mxu0 0
        %2650 = vmatprep.subr.bf16.mxu0 0
        %2651 = vmatpush1.bf16.msra.mxu0 0
        %2652 = vmatprep.mubr.bf16.mxu0 0
        %2653 = vmatmul.mubr.bf16.gmra.mrb[0].mxu0 %v2573
        %v2654 = vpop.f32.mrb[0].mxu0
        %v2655 = vadd.f32 0.0, %v2654
        %v2656 = vpop.f32.mrb[0].mxu0
        %v2657 = vpop.f32.mrb[0].mxu0
        %v2658 = vadd.f32 0.0, %v2657
        %v2659 = vpop.f32.mrb[0].mxu0
        %2660 = vmatprep.mubr.bf16.mxu0 0
        %2661 = vmatmul.mubr.bf16.gmra.mrb[0].mxu0 %v2576
        %v2662 = vpop.f32.mrb[0].mxu0
        %v2663 = vadd.f32 0.0, %v2662
        %v2664 = vpop.f32.mrb[0].mxu0
        %v2665 = vpop.f32.mrb[0].mxu0
        %v2666 = vadd.f32 0.0, %v2665
        %v2667 = vpop.f32.mrb[0].mxu0
        %2668 = vmatprep.mubr.bf16.mxu0 0
        %2669 = vmatmul.mubr.bf16.gmra.mrb[0].mxu0 %v2579
        %v2670 = vpop.f32.mrb[0].mxu0
        %v2671 = vadd.f32 0.0, %v2670
        %v2672 = vpop.f32.mrb[0].mxu0
        %v2673 = vpop.f32.mrb[0].mxu0
        %v2674 = vadd.f32 0.0, %v2673
        %v2675 = vpop.f32.mrb[0].mxu0
        %2676 = vmatprep.mubr.bf16.mxu0 0
        %2677 = vmatmul.mubr.bf16.gmra.mrb[0].mxu0 %v2582
        %v2678 = vpop.f32.mrb[0].mxu0
        %v2679 = vadd.f32 0.0, %v2678
        %v2680 = vpop.f32.mrb[0].mxu0
        %v2681 = vpop.f32.mrb[0].mxu0
        %v2682 = vadd.f32 0.0, %v2681
        %v2683 = vpop.f32.mrb[0].mxu0
        %2684 = vmatprep.mubr.bf16.mxu0 0
        %2685 = vmatmul.mubr.bf16.gmra.mrb[0].mxu0 %v2585
        %v2686 = vpop.f32.mrb[0].mxu0
        %v2687 = vadd.f32 0.0, %v2686
        %v2688 = vpop.f32.mrb[0].mxu0
        %v2689 = vpop.f32.mrb[0].mxu0
        %v2690 = vadd.f32 0.0, %v2689
        %v2691 = vpop.f32.mrb[0].mxu0
        %2692 = vmatprep.mubr.bf16.mxu0 0
        %2693 = vmatmul.mubr.bf16.gmra.mrb[0].mxu0 %v2588
        %v2694 = vpop.f32.mrb[0].mxu0
        %v2695 = vadd.f32 0.0, %v2694
        %v2696 = vpop.f32.mrb[0].mxu0
        %v2697 = vpop.f32.mrb[0].mxu0
        %v2698 = vadd.f32 0.0, %v2697
        %v2699 = vpop.f32.mrb[0].mxu0
        %2700 = vmatprep.mubr.bf16.mxu0 0
        %2701 = vmatmul.mubr.bf16.gmra.mrb[0].mxu0 %v2591
        %v2702 = vpop.f32.mrb[0].mxu0
        %v2703 = vadd.f32 0.0, %v2702
        %v2704 = vpop.f32.mrb[0].mxu0
        %v2705 = vpop.f32.mrb[0].mxu0
        %v2706 = vadd.f32 0.0, %v2705
        %v2707 = vpop.f32.mrb[0].mxu0
        %2708 = vmatprep.mubr.bf16.mxu0 0
        %2709 = vmatmul.mubr.bf16.gmra.mrb[0].mxu0 %v2594
        %v2710 = vpop.f32.mrb[0].mxu0
        %v2711 = vadd.f32 0.0, %v2710
        %v2712 = vpop.f32.mrb[0].mxu0
        %v2713 = vpop.f32.mrb[0].mxu0
        %v2714 = vadd.f32 0.0, %v2713
        %v2715 = vpop.f32.mrb[0].mxu0
        %2716 = vmatprep.mubr.bf16.mxu0 0
        %2717 = vmatmul.mubr.bf16.gmra.mrb[0].mxu0 %v2597
        %v2718 = vpop.f32.mrb[0].mxu0
        %v2719 = vadd.f32 0.0, %v2718
        %v2720 = vpop.f32.mrb[0].mxu0
        %v2721 = vpop.f32.mrb[0].mxu0
        %v2722 = vadd.f32 0.0, %v2721
        %v2723 = vpop.f32.mrb[0].mxu0
        %2724 = vmatprep.mubr.bf16.mxu0 0
        %2725 = vmatmul.mubr.bf16.gmra.mrb[0].mxu0 %v2600
        %v2726 = vpop.f32.mrb[0].mxu0
        %v2727 = vadd.f32 0.0, %v2726
        %v2728 = vpop.f32.mrb[0].mxu0
        %v2729 = vpop.f32.mrb[0].mxu0
        %v2730 = vadd.f32 0.0, %v2729
        %v2731 = vpop.f32.mrb[0].mxu0
        %2732 = vmatprep.mubr.bf16.mxu0 0
        %2733 = vmatmul.mubr.bf16.gmra.mrb[0].mxu0 %v2603
        %v2734 = vpop.f32.mrb[0].mxu0
        %v2735 = vadd.f32 0.0, %v2734
        %v2736 = vpop.f32.mrb[0].mxu0
        %v2737 = vpop.f32.mrb[0].mxu0
        %v2738 = vadd.f32 0.0, %v2737
        %v2739 = vpop.f32.mrb[0].mxu0
        %2740 = vmatprep.mubr.bf16.mxu0 0
        %2741 = vmatmul.mubr.bf16.gmra.mrb[0].mxu0 %v2606
        %v2742 = vpop.f32.mrb[0].mxu0
        %v2743 = vadd.f32 0.0, %v2742
        %v2744 = vpop.f32.mrb[0].mxu0
        %v2745 = vpop.f32.mrb[0].mxu0
        %v2746 = vadd.f32 0.0, %v2745
        %v2747 = vpop.f32.mrb[0].mxu0
        %2748 = vmatprep.mubr.bf16.mxu0 0
        %2749 = vmatmul.mubr.bf16.gmra.mrb[0].mxu0 %v2609
        %v2750 = vpop.f32.mrb[0].mxu0
        %v2751 = vadd.f32 0.0, %v2750
        %v2752 = vpop.f32.mrb[0].mxu0
        %v2753 = vpop.f32.mrb[0].mxu0
        %v2754 = vadd.f32 0.0, %v2753
        %v2755 = vpop.f32.mrb[0].mxu0
        %2756 = vmatprep.mubr.bf16.mxu0 0
        %2757 = vmatmul.mubr.bf16.gmra.mrb[0].mxu0 %v2612
        %v2758 = vpop.f32.mrb[0].mxu0
        %v2759 = vadd.f32 0.0, %v2758
        %v2760 = vpop.f32.mrb[0].mxu0
        %v2761 = vpop.f32.mrb[0].mxu0
        %v2762 = vadd.f32 0.0, %v2761
        %v2763 = vpop.f32.mrb[0].mxu0
        %2764 = vmatprep.mubr.bf16.mxu0 0
        %2765 = vmatmul.mubr.bf16.gmra.mrb[0].mxu0 %v2615
        %v2766 = vpop.f32.mrb[0].mxu0
        %v2767 = vadd.f32 0.0, %v2766
        %v2768 = vpop.f32.mrb[0].mxu0
        %v2769 = vpop.f32.mrb[0].mxu0
        %v2770 = vadd.f32 0.0, %v2769
        %v2771 = vpop.f32.mrb[0].mxu0
        %2772 = vmatprep.mubr.bf16.mxu0 0
        %2773 = vmatmul.mubr.bf16.gmra.mrb[0].mxu0 %v2618
        %v2774 = vpop.f32.mrb[0].mxu0
        %v2775 = vadd.f32 0.0, %v2774
        %v2776 = vpop.f32.mrb[0].mxu0
        %v2777 = vpop.f32.mrb[0].mxu0
        %v2778 = vadd.f32 0.0, %v2777
        %v2779 = vpop.f32.mrb[0].mxu0
        %2780 = vdwg.mxu0
        %v2781 = vadd.f32 %v2474, %v2655
        %v2782 = vadd.f32 %v2475, %v2658
        %v2783 = vadd.f32 %v2476, %v2663
        %v2784 = vadd.f32 %v2477, %v2666
        %v2785 = vadd.f32 %v2478, %v2671
        %v2786 = vadd.f32 %v2479, %v2674
        %v2787 = vadd.f32 %v2480, %v2679
        %v2788 = vadd.f32 %v2481, %v2682
        %v2789 = vadd.f32 %v2482, %v2687
        %v2790 = vadd.f32 %v2483, %v2690
        %v2791 = vadd.f32 %v2484, %v2695
        %v2792 = vadd.f32 %v2485, %v2698
        %v2793 = vadd.f32 %v2486, %v2703
        %v2794 = vadd.f32 %v2487, %v2706
        %v2795 = vadd.f32 %v2488, %v2711
        %v2796 = vadd.f32 %v2489, %v2714
        %v2797 = vadd.f32 %v2490, %v2719
        %v2798 = vadd.f32 %v2491, %v2722
        %v2799 = vadd.f32 %v2492, %v2727
        %v2800 = vadd.f32 %v2493, %v2730
        %v2801 = vadd.f32 %v2494, %v2735
        %v2802 = vadd.f32 %v2495, %v2738
        %v2803 = vadd.f32 %v2496, %v2743
        %v2804 = vadd.f32 %v2497, %v2746
        %v2805 = vadd.f32 %v2498, %v2751
        %v2806 = vadd.f32 %v2499, %v2754
        %v2807 = vadd.f32 %v2500, %v2759
        %v2808 = vadd.f32 %v2501, %v2762
        %v2809 = vadd.f32 %v2502, %v2767
        %v2810 = vadd.f32 %v2503, %v2770
        %v2811 = vadd.f32 %v2504, %v2775
        %v2812 = vadd.f32 %v2505, %v2778
        %v2813 = vld [vmem:[%s2506 + $0x1] sm:$0xff]
        %v2814 = vld [vmem:[%s2506 + $0x9] sm:$0xff]
        %v2815 = vld [vmem:[%s2506 + $0x19] sm:$0xff]
        %v2816 = vld [vmem:[%s2506 + $0x21] sm:$0xff]
        %v2817 = vld [vmem:[%s2506 + $0x31] sm:$0xff]
        %v2818 = vld [vmem:[%s2506 + $0x39] sm:$0xff]
        %v2819 = vld [vmem:[%s2506 + $0x49] sm:$0xff]
        %v2820 = vld [vmem:[%s2506 + $0x51] sm:$0xff]
        %v2821 = vld [vmem:[%s2506 + $0x61] sm:$0xff]
        %v2822 = vld [vmem:[%s2506 + $0x69] sm:$0xff]
        %v2823 = vld [vmem:[%s2506 + $0x79] sm:$0xff]
        %v2824 = vld [vmem:[%s2506 + $0x81] sm:$0xff]
        %v2825 = vld [vmem:[%s2506 + $0x91] sm:$0xff]
        %v2826 = vld [vmem:[%s2506 + $0x99] sm:$0xff]
        %v2827 = vld [vmem:[%s2506 + $0xa9] sm:$0xff]
        %v2828 = vld [vmem:[%s2506 + $0xb1] sm:$0xff]
        %v2829 = vld [vmem:[%s2506 + $0xc1] sm:$0xff]
        %v2830 = vld [vmem:[%s2506 + $0xc9] sm:$0xff]
        %v2831 = vld [vmem:[%s2506 + $0xd9] sm:$0xff]
        %v2832 = vld [vmem:[%s2506 + $0xe1] sm:$0xff]
        %v2833 = vld [vmem:[%s2506 + $0xf1] sm:$0xff]
        %v2834 = vld [vmem:[%s2506 + $0xf9] sm:$0xff]
        %v2835 = vld [vmem:[%s2506 + $0x109] sm:$0xff]
        %v2836 = vld [vmem:[%s2506 + $0x111] sm:$0xff]
        %v2837 = vld [vmem:[%s2506 + $0x121] sm:$0xff]
        %v2838 = vld [vmem:[%s2506 + $0x129] sm:$0xff]
        %v2839 = vld [vmem:[%s2506 + $0x139] sm:$0xff]
        %v2840 = vld [vmem:[%s2506 + $0x141] sm:$0xff]
        %v2841 = vld [vmem:[%s2506 + $0x151] sm:$0xff]
        %v2842 = vld [vmem:[%s2506 + $0x159] sm:$0xff]
        %v2843 = vld [vmem:[%s2506 + $0x169] sm:$0xff]
        %v2844 = vld [vmem:[%s2506 + $0x171] sm:$0xff]
        %v2845 = vpack.c.bf16 %v2814, %v2813
        %v2846 = vpack.c.bf16 %v2816, %v2815
        %v2847 = vpack.c.bf16 %v2818, %v2817
        %v2848 = vpack.c.bf16 %v2820, %v2819
        %v2849 = vpack.c.bf16 %v2822, %v2821
        %v2850 = vpack.c.bf16 %v2824, %v2823
        %v2851 = vpack.c.bf16 %v2826, %v2825
        %v2852 = vpack.c.bf16 %v2828, %v2827
        %v2853 = vpack.c.bf16 %v2830, %v2829
        %v2854 = vpack.c.bf16 %v2832, %v2831
        %v2855 = vpack.c.bf16 %v2834, %v2833
        %v2856 = vpack.c.bf16 %v2836, %v2835
        %v2857 = vpack.c.bf16 %v2838, %v2837
        %v2858 = vpack.c.bf16 %v2840, %v2839
        %v2859 = vpack.c.bf16 %v2842, %v2841
        %v2860 = vpack.c.bf16 %v2844, %v2843
        %s2861 = scalar_lea.vmem [#allocation7], 112
        %v2862 = vld [vmem:[%s2861] sm:$0xf]
        %v2863 = vld [vmem:[%s2861 + $0x4] sm:$0xf]
        %v2864 = vld [vmem:[%s2861 + $0x8] sm:$0xf]
        %v2865 = vld [vmem:[%s2861 + $0xc] sm:$0xf]
        %v2870 = vunpack.c.l.b16 %v2862
        %v2871 = vunpack.c.l.b16 %v2863
        %v2872 = vunpack.c.l.b16 %v2864
        %v2873 = vunpack.c.l.b16 %v2865
        %v2874 = vpack.c.b16 %v2871, %v2870
        %v2875 = vpack.c.b16 %v2873, %v2872
        %v2879 = vsel %vm536, %v2845, 0
        %v2882 = vsel %vm536, %v2846, 0
        %v2885 = vsel %vm536, %v2847, 0
        %v2888 = vsel %vm536, %v2848, 0
        %v2891 = vsel %vm536, %v2849, 0
        %v2894 = vsel %vm536, %v2850, 0
        %v2897 = vsel %vm536, %v2851, 0
        %v2900 = vsel %vm536, %v2852, 0
        %v2903 = vsel %vm536, %v2853, 0
        %v2906 = vsel %vm536, %v2854, 0
        %v2909 = vsel %vm536, %v2855, 0
        %v2912 = vsel %vm536, %v2856, 0
        %v2915 = vsel %vm536, %v2857, 0
        %v2918 = vsel %vm536, %v2858, 0
        %v2921 = vsel %vm536, %v2859, 0
        %v2924 = vsel %vm536, %v2860, 0
        %2926 = vmatprep.subr.bf16.mxu0 0
        %2927 = vmatpush1.bf16.msra.mxu0 %v2874
        %2928 = vmatprep.subr.bf16.mxu0 0
        %2929 = vmatpush1.bf16.msra.mxu0 %v2875
        %2930 = vmatprep.subr.bf16.mxu0 0
        %2931 = vmatpush1.bf16.msra.mxu0 0
        %2932 = vmatprep.subr.bf16.mxu0 0
        %2933 = vmatpush1.bf16.msra.mxu0 0
        %2934 = vmatprep.subr.bf16.mxu0 0
        %2935 = vmatpush1.bf16.msra.mxu0 0
        %2936 = vmatprep.subr.bf16.mxu0 0
        %2937 = vmatpush1.bf16.msra.mxu0 0
        %2938 = vmatprep.subr.bf16.mxu0 0
        %2939 = vmatpush1.bf16.msra.mxu0 0
        %2940 = vmatprep.subr.bf16.mxu0 0
        %2941 = vmatpush1.bf16.msra.mxu0 0
        %2942 = vmatprep.subr.bf16.mxu0 0
        %2943 = vmatpush1.bf16.msra.mxu0 0
        %2944 = vmatprep.subr.bf16.mxu0 0
        %2945 = vmatpush1.bf16.msra.mxu0 0
        %2946 = vmatprep.subr.bf16.mxu0 0
        %2947 = vmatpush1.bf16.msra.mxu0 0
        %2948 = vmatprep.subr.bf16.mxu0 0
        %2949 = vmatpush1.bf16.msra.mxu0 0
        %2950 = vmatprep.subr.bf16.mxu0 0
        %2951 = vmatpush1.bf16.msra.mxu0 0
        %2952 = vmatprep.subr.bf16.mxu0 0
        %2953 = vmatpush1.bf16.msra.mxu0 0
        %2954 = vmatprep.subr.bf16.mxu0 0
        %2955 = vmatpush1.bf16.msra.mxu0 0
        %2956 = vmatprep.subr.bf16.mxu0 0
        %2957 = vmatpush1.bf16.msra.mxu0 0
        %2958 = vmatprep.mubr.bf16.mxu0 0
        %2959 = vmatmul.mubr.bf16.gmra.mrb[0].mxu0 %v2879
        %v2960 = vpop.f32.mrb[0].mxu0
        %v2961 = vadd.f32 0.0, %v2960
        %v2962 = vpop.f32.mrb[0].mxu0
        %v2963 = vpop.f32.mrb[0].mxu0
        %v2964 = vadd.f32 0.0, %v2963
        %v2965 = vpop.f32.mrb[0].mxu0
        %2966 = vmatprep.mubr.bf16.mxu0 0
        %2967 = vmatmul.mubr.bf16.gmra.mrb[0].mxu0 %v2882
        %v2968 = vpop.f32.mrb[0].mxu0
        %v2969 = vadd.f32 0.0, %v2968
        %v2970 = vpop.f32.mrb[0].mxu0
        %v2971 = vpop.f32.mrb[0].mxu0
        %v2972 = vadd.f32 0.0, %v2971
        %v2973 = vpop.f32.mrb[0].mxu0
        %2974 = vmatprep.mubr.bf16.mxu0 0
        %2975 = vmatmul.mubr.bf16.gmra.mrb[0].mxu0 %v2885
        %v2976 = vpop.f32.mrb[0].mxu0
        %v2977 = vadd.f32 0.0, %v2976
        %v2978 = vpop.f32.mrb[0].mxu0
        %v2979 = vpop.f32.mrb[0].mxu0
        %v2980 = vadd.f32 0.0, %v2979
        %v2981 = vpop.f32.mrb[0].mxu0
        %2982 = vmatprep.mubr.bf16.mxu0 0
        %2983 = vmatmul.mubr.bf16.gmra.mrb[0].mxu0 %v2888
        %v2984 = vpop.f32.mrb[0].mxu0
        %v2985 = vadd.f32 0.0, %v2984
        %v2986 = vpop.f32.mrb[0].mxu0
        %v2987 = vpop.f32.mrb[0].mxu0
        %v2988 = vadd.f32 0.0, %v2987
        %v2989 = vpop.f32.mrb[0].mxu0
        %2990 = vmatprep.mubr.bf16.mxu0 0
        %2991 = vmatmul.mubr.bf16.gmra.mrb[0].mxu0 %v2891
        %v2992 = vpop.f32.mrb[0].mxu0
        %v2993 = vadd.f32 0.0, %v2992
        %v2994 = vpop.f32.mrb[0].mxu0
        %v2995 = vpop.f32.mrb[0].mxu0
        %v2996 = vadd.f32 0.0, %v2995
        %v2997 = vpop.f32.mrb[0].mxu0
        %2998 = vmatprep.mubr.bf16.mxu0 0
        %2999 = vmatmul.mubr.bf16.gmra.mrb[0].mxu0 %v2894
        %v3000 = vpop.f32.mrb[0].mxu0
        %v3001 = vadd.f32 0.0, %v3000
        %v3002 = vpop.f32.mrb[0].mxu0
        %v3003 = vpop.f32.mrb[0].mxu0
        %v3004 = vadd.f32 0.0, %v3003
        %v3005 = vpop.f32.mrb[0].mxu0
        %3006 = vmatprep.mubr.bf16.mxu0 0
        %3007 = vmatmul.mubr.bf16.gmra.mrb[0].mxu0 %v2897
        %v3008 = vpop.f32.mrb[0].mxu0
        %v3009 = vadd.f32 0.0, %v3008
        %v3010 = vpop.f32.mrb[0].mxu0
        %v3011 = vpop.f32.mrb[0].mxu0
        %v3012 = vadd.f32 0.0, %v3011
        %v3013 = vpop.f32.mrb[0].mxu0
        %3014 = vmatprep.mubr.bf16.mxu0 0
        %3015 = vmatmul.mubr.bf16.gmra.mrb[0].mxu0 %v2900
        %v3016 = vpop.f32.mrb[0].mxu0
        %v3017 = vadd.f32 0.0, %v3016
        %v3018 = vpop.f32.mrb[0].mxu0
        %v3019 = vpop.f32.mrb[0].mxu0
        %v3020 = vadd.f32 0.0, %v3019
        %v3021 = vpop.f32.mrb[0].mxu0
        %3022 = vmatprep.mubr.bf16.mxu0 0
        %3023 = vmatmul.mubr.bf16.gmra.mrb[0].mxu0 %v2903
        %v3024 = vpop.f32.mrb[0].mxu0
        %v3025 = vadd.f32 0.0, %v3024
        %v3026 = vpop.f32.mrb[0].mxu0
        %v3027 = vpop.f32.mrb[0].mxu0
        %v3028 = vadd.f32 0.0, %v3027
        %v3029 = vpop.f32.mrb[0].mxu0
        %3030 = vmatprep.mubr.bf16.mxu0 0
        %3031 = vmatmul.mubr.bf16.gmra.mrb[0].mxu0 %v2906
        %v3032 = vpop.f32.mrb[0].mxu0
        %v3033 = vadd.f32 0.0, %v3032
        %v3034 = vpop.f32.mrb[0].mxu0
        %v3035 = vpop.f32.mrb[0].mxu0
        %v3036 = vadd.f32 0.0, %v3035
        %v3037 = vpop.f32.mrb[0].mxu0
        %3038 = vmatprep.mubr.bf16.mxu0 0
        %3039 = vmatmul.mubr.bf16.gmra.mrb[0].mxu0 %v2909
        %v3040 = vpop.f32.mrb[0].mxu0
        %v3041 = vadd.f32 0.0, %v3040
        %v3042 = vpop.f32.mrb[0].mxu0
        %v3043 = vpop.f32.mrb[0].mxu0
        %v3044 = vadd.f32 0.0, %v3043
        %v3045 = vpop.f32.mrb[0].mxu0
        %3046 = vmatprep.mubr.bf16.mxu0 0
        %3047 = vmatmul.mubr.bf16.gmra.mrb[0].mxu0 %v2912
        %v3048 = vpop.f32.mrb[0].mxu0
        %v3049 = vadd.f32 0.0, %v3048
        %v3050 = vpop.f32.mrb[0].mxu0
        %v3051 = vpop.f32.mrb[0].mxu0
        %v3052 = vadd.f32 0.0, %v3051
        %v3053 = vpop.f32.mrb[0].mxu0
        %3054 = vmatprep.mubr.bf16.mxu0 0
        %3055 = vmatmul.mubr.bf16.gmra.mrb[0].mxu0 %v2915
        %v3056 = vpop.f32.mrb[0].mxu0
        %v3057 = vadd.f32 0.0, %v3056
        %v3058 = vpop.f32.mrb[0].mxu0
        %v3059 = vpop.f32.mrb[0].mxu0
        %v3060 = vadd.f32 0.0, %v3059
        %v3061 = vpop.f32.mrb[0].mxu0
        %3062 = vmatprep.mubr.bf16.mxu0 0
        %3063 = vmatmul.mubr.bf16.gmra.mrb[0].mxu0 %v2918
        %v3064 = vpop.f32.mrb[0].mxu0
        %v3065 = vadd.f32 0.0, %v3064
        %v3066 = vpop.f32.mrb[0].mxu0
        %v3067 = vpop.f32.mrb[0].mxu0
        %v3068 = vadd.f32 0.0, %v3067
        %v3069 = vpop.f32.mrb[0].mxu0
        %3070 = vmatprep.mubr.bf16.mxu0 0
        %3071 = vmatmul.mubr.bf16.gmra.mrb[0].mxu0 %v2921
        %v3072 = vpop.f32.mrb[0].mxu0
        %v3073 = vadd.f32 0.0, %v3072
        %v3074 = vpop.f32.mrb[0].mxu0
        %v3075 = vpop.f32.mrb[0].mxu0
        %v3076 = vadd.f32 0.0, %v3075
        %v3077 = vpop.f32.mrb[0].mxu0
        %3078 = vmatprep.mubr.bf16.mxu0 0
        %3079 = vmatmul.mubr.bf16.gmra.mrb[0].mxu0 %v2924
        %v3080 = vpop.f32.mrb[0].mxu0
        %v3081 = vadd.f32 0.0, %v3080
        %v3082 = vpop.f32.mrb[0].mxu0
        %v3083 = vpop.f32.mrb[0].mxu0
        %v3084 = vadd.f32 0.0, %v3083
        %v3085 = vpop.f32.mrb[0].mxu0
        %3086 = vdwg.mxu0
        %v3087 = vadd.f32 %v2781, %v2961
        %v3088 = vadd.f32 %v2782, %v2964
        %v3089 = vadd.f32 %v2783, %v2969
        %v3090 = vadd.f32 %v2784, %v2972
        %v3091 = vadd.f32 %v2785, %v2977
        %v3092 = vadd.f32 %v2786, %v2980
        %v3093 = vadd.f32 %v2787, %v2985
        %v3094 = vadd.f32 %v2788, %v2988
        %v3095 = vadd.f32 %v2789, %v2993
        %v3096 = vadd.f32 %v2790, %v2996
        %v3097 = vadd.f32 %v2791, %v3001
        %v3098 = vadd.f32 %v2792, %v3004
        %v3099 = vadd.f32 %v2793, %v3009
        %v3100 = vadd.f32 %v2794, %v3012
        %v3101 = vadd.f32 %v2795, %v3017
        %v3102 = vadd.f32 %v2796, %v3020
        %v3103 = vadd.f32 %v2797, %v3025
        %v3104 = vadd.f32 %v2798, %v3028
        %v3105 = vadd.f32 %v2799, %v3033
        %v3106 = vadd.f32 %v2800, %v3036
        %v3107 = vadd.f32 %v2801, %v3041
        %v3108 = vadd.f32 %v2802, %v3044
        %v3109 = vadd.f32 %v2803, %v3049
        %v3110 = vadd.f32 %v2804, %v3052
        %v3111 = vadd.f32 %v2805, %v3057
        %v3112 = vadd.f32 %v2806, %v3060
        %v3113 = vadd.f32 %v2807, %v3065
        %v3114 = vadd.f32 %v2808, %v3068
        %v3115 = vadd.f32 %v2809, %v3073
        %v3116 = vadd.f32 %v2810, %v3076
        %v3117 = vadd.f32 %v2811, %v3081
        %v3118 = vadd.f32 %v2812, %v3084
        %v3119 = vld [vmem:[%s2506 + $0x2] sm:$0xff]
        %v3120 = vld [vmem:[%s2506 + $0xa] sm:$0xff]
        %v3121 = vld [vmem:[%s2506 + $0x1a] sm:$0xff]
        %v3122 = vld [vmem:[%s2506 + $0x22] sm:$0xff]
        %v3123 = vld [vmem:[%s2506 + $0x32] sm:$0xff]
        %v3124 = vld [vmem:[%s2506 + $0x3a] sm:$0xff]
        %v3125 = vld [vmem:[%s2506 + $0x4a] sm:$0xff]
        %v3126 = vld [vmem:[%s2506 + $0x52] sm:$0xff]
        %v3127 = vld [vmem:[%s2506 + $0x62] sm:$0xff]
        %v3128 = vld [vmem:[%s2506 + $0x6a] sm:$0xff]
        %v3129 = vld [vmem:[%s2506 + $0x7a] sm:$0xff]
        %v3130 = vld [vmem:[%s2506 + $0x82] sm:$0xff]
        %v3131 = vld [vmem:[%s2506 + $0x92] sm:$0xff]
        %v3132 = vld [vmem:[%s2506 + $0x9a] sm:$0xff]
        %v3133 = vld [vmem:[%s2506 + $0xaa] sm:$0xff]
        %v3134 = vld [vmem:[%s2506 + $0xb2] sm:$0xff]
        %v3135 = vld [vmem:[%s2506 + $0xc2] sm:$0xff]
        %v3136 = vld [vmem:[%s2506 + $0xca] sm:$0xff]
        %v3137 = vld [vmem:[%s2506 + $0xda] sm:$0xff]
        %v3138 = vld [vmem:[%s2506 + $0xe2] sm:$0xff]
        %v3139 = vld [vmem:[%s2506 + $0xf2] sm:$0xff]
        %v3140 = vld [vmem:[%s2506 + $0xfa] sm:$0xff]
        %v3141 = vld [vmem:[%s2506 + $0x10a] sm:$0xff]
        %v3142 = vld [vmem:[%s2506 + $0x112] sm:$0xff]
        %v3143 = vld [vmem:[%s2506 + $0x122] sm:$0xff]
        %v3144 = vld [vmem:[%s2506 + $0x12a] sm:$0xff]
        %v3145 = vld [vmem:[%s2506 + $0x13a] sm:$0xff]
        %v3146 = vld [vmem:[%s2506 + $0x142] sm:$0xff]
        %v3147 = vld [vmem:[%s2506 + $0x152] sm:$0xff]
        %v3148 = vld [vmem:[%s2506 + $0x15a] sm:$0xff]
        %v3149 = vld [vmem:[%s2506 + $0x16a] sm:$0xff]
        %v3150 = vld [vmem:[%s2506 + $0x172] sm:$0xff]
        %v3151 = vpack.c.bf16 %v3120, %v3119
        %v3152 = vpack.c.bf16 %v3122, %v3121
        %v3153 = vpack.c.bf16 %v3124, %v3123
        %v3154 = vpack.c.bf16 %v3126, %v3125
        %v3155 = vpack.c.bf16 %v3128, %v3127
        %v3156 = vpack.c.bf16 %v3130, %v3129
        %v3157 = vpack.c.bf16 %v3132, %v3131
        %v3158 = vpack.c.bf16 %v3134, %v3133
        %v3159 = vpack.c.bf16 %v3136, %v3135
        %v3160 = vpack.c.bf16 %v3138, %v3137
        %v3161 = vpack.c.bf16 %v3140, %v3139
        %v3162 = vpack.c.bf16 %v3142, %v3141
        %v3163 = vpack.c.bf16 %v3144, %v3143
        %v3164 = vpack.c.bf16 %v3146, %v3145
        %v3165 = vpack.c.bf16 %v3148, %v3147
        %v3166 = vpack.c.bf16 %v3150, %v3149
        %s3167 = scalar_lea.vmem [#allocation7], 128
        %v3168 = vld [vmem:[%s3167] sm:$0xf]
        %v3169 = vld [vmem:[%s3167 + $0x4] sm:$0xf]
        %v3170 = vld [vmem:[%s3167 + $0x8] sm:$0xf]
        %v3171 = vld [vmem:[%s3167 + $0xc] sm:$0xf]
        %v3176 = vunpack.c.l.b16 %v3168
        %v3177 = vunpack.c.l.b16 %v3169
        %v3178 = vunpack.c.l.b16 %v3170
        %v3179 = vunpack.c.l.b16 %v3171
        %v3180 = vpack.c.b16 %v3177, %v3176
        %v3181 = vpack.c.b16 %v3179, %v3178
        %v3185 = vsel %vm536, %v3151, 0
        %v3188 = vsel %vm536, %v3152, 0
        %v3191 = vsel %vm536, %v3153, 0
        %v3194 = vsel %vm536, %v3154, 0
        %v3197 = vsel %vm536, %v3155, 0
        %v3200 = vsel %vm536, %v3156, 0
        %v3203 = vsel %vm536, %v3157, 0
        %v3206 = vsel %vm536, %v3158, 0
        %v3209 = vsel %vm536, %v3159, 0
        %v3212 = vsel %vm536, %v3160, 0
        %v3215 = vsel %vm536, %v3161, 0
        %v3218 = vsel %vm536, %v3162, 0
        %v3221 = vsel %vm536, %v3163, 0
        %v3224 = vsel %vm536, %v3164, 0
        %v3227 = vsel %vm536, %v3165, 0
        %v3230 = vsel %vm536, %v3166, 0
        %3232 = vmatprep.subr.bf16.mxu0 0
        %3233 = vmatpush1.bf16.msra.mxu0 %v3180
        %3234 = vmatprep.subr.bf16.mxu0 0
        %3235 = vmatpush1.bf16.msra.mxu0 %v3181
        %3236 = vmatprep.subr.bf16.mxu0 0
        %3237 = vmatpush1.bf16.msra.mxu0 0
        %3238 = vmatprep.subr.bf16.mxu0 0
        %3239 = vmatpush1.bf16.msra.mxu0 0
        %3240 = vmatprep.subr.bf16.mxu0 0
        %3241 = vmatpush1.bf16.msra.mxu0 0
        %3242 = vmatprep.subr.bf16.mxu0 0
        %3243 = vmatpush1.bf16.msra.mxu0 0
        %3244 = vmatprep.subr.bf16.mxu0 0
        %3245 = vmatpush1.bf16.msra.mxu0 0
        %3246 = vmatprep.subr.bf16.mxu0 0
        %3247 = vmatpush1.bf16.msra.mxu0 0
        %3248 = vmatprep.subr.bf16.mxu0 0
        %3249 = vmatpush1.bf16.msra.mxu0 0
        %3250 = vmatprep.subr.bf16.mxu0 0
        %3251 = vmatpush1.bf16.msra.mxu0 0
        %3252 = vmatprep.subr.bf16.mxu0 0
        %3253 = vmatpush1.bf16.msra.mxu0 0
        %3254 = vmatprep.subr.bf16.mxu0 0
        %3255 = vmatpush1.bf16.msra.mxu0 0
        %3256 = vmatprep.subr.bf16.mxu0 0
        %3257 = vmatpush1.bf16.msra.mxu0 0
        %3258 = vmatprep.subr.bf16.mxu0 0
        %3259 = vmatpush1.bf16.msra.mxu0 0
        %3260 = vmatprep.subr.bf16.mxu0 0
        %3261 = vmatpush1.bf16.msra.mxu0 0
        %3262 = vmatprep.subr.bf16.mxu0 0
        %3263 = vmatpush1.bf16.msra.mxu0 0
        %3264 = vmatprep.mubr.bf16.mxu0 0
        %3265 = vmatmul.mubr.bf16.gmra.mrb[0].mxu0 %v3185
        %v3266 = vpop.f32.mrb[0].mxu0
        %v3267 = vadd.f32 0.0, %v3266
        %v3268 = vpop.f32.mrb[0].mxu0
        %v3269 = vpop.f32.mrb[0].mxu0
        %v3270 = vadd.f32 0.0, %v3269
        %v3271 = vpop.f32.mrb[0].mxu0
        %3272 = vmatprep.mubr.bf16.mxu0 0
        %3273 = vmatmul.mubr.bf16.gmra.mrb[0].mxu0 %v3188
        %v3274 = vpop.f32.mrb[0].mxu0
        %v3275 = vadd.f32 0.0, %v3274
        %v3276 = vpop.f32.mrb[0].mxu0
        %v3277 = vpop.f32.mrb[0].mxu0
        %v3278 = vadd.f32 0.0, %v3277
        %v3279 = vpop.f32.mrb[0].mxu0
        %3280 = vmatprep.mubr.bf16.mxu0 0
        %3281 = vmatmul.mubr.bf16.gmra.mrb[0].mxu0 %v3191
        %v3282 = vpop.f32.mrb[0].mxu0
        %v3283 = vadd.f32 0.0, %v3282
        %v3284 = vpop.f32.mrb[0].mxu0
        %v3285 = vpop.f32.mrb[0].mxu0
        %v3286 = vadd.f32 0.0, %v3285
        %v3287 = vpop.f32.mrb[0].mxu0
        %3288 = vmatprep.mubr.bf16.mxu0 0
        %3289 = vmatmul.mubr.bf16.gmra.mrb[0].mxu0 %v3194
        %v3290 = vpop.f32.mrb[0].mxu0
        %v3291 = vadd.f32 0.0, %v3290
        %v3292 = vpop.f32.mrb[0].mxu0
        %v3293 = vpop.f32.mrb[0].mxu0
        %v3294 = vadd.f32 0.0, %v3293
        %v3295 = vpop.f32.mrb[0].mxu0
        %3296 = vmatprep.mubr.bf16.mxu0 0
        %3297 = vmatmul.mubr.bf16.gmra.mrb[0].mxu0 %v3197
        %v3298 = vpop.f32.mrb[0].mxu0
        %v3299 = vadd.f32 0.0, %v3298
        %v3300 = vpop.f32.mrb[0].mxu0
        %v3301 = vpop.f32.mrb[0].mxu0
        %v3302 = vadd.f32 0.0, %v3301
        %v3303 = vpop.f32.mrb[0].mxu0
        %3304 = vmatprep.mubr.bf16.mxu0 0
        %3305 = vmatmul.mubr.bf16.gmra.mrb[0].mxu0 %v3200
        %v3306 = vpop.f32.mrb[0].mxu0
        %v3307 = vadd.f32 0.0, %v3306
        %v3308 = vpop.f32.mrb[0].mxu0
        %v3309 = vpop.f32.mrb[0].mxu0
        %v3310 = vadd.f32 0.0, %v3309
        %v3311 = vpop.f32.mrb[0].mxu0
        %3312 = vmatprep.mubr.bf16.mxu0 0
        %3313 = vmatmul.mubr.bf16.gmra.mrb[0].mxu0 %v3203
        %v3314 = vpop.f32.mrb[0].mxu0
        %v3315 = vadd.f32 0.0, %v3314
        %v3316 = vpop.f32.mrb[0].mxu0
        %v3317 = vpop.f32.mrb[0].mxu0
        %v3318 = vadd.f32 0.0, %v3317
        %v3319 = vpop.f32.mrb[0].mxu0
        %3320 = vmatprep.mubr.bf16.mxu0 0
        %3321 = vmatmul.mubr.bf16.gmra.mrb[0].mxu0 %v3206
        %v3322 = vpop.f32.mrb[0].mxu0
        %v3323 = vadd.f32 0.0, %v3322
        %v3324 = vpop.f32.mrb[0].mxu0
        %v3325 = vpop.f32.mrb[0].mxu0
        %v3326 = vadd.f32 0.0, %v3325
        %v3327 = vpop.f32.mrb[0].mxu0
        %3328 = vmatprep.mubr.bf16.mxu0 0
        %3329 = vmatmul.mubr.bf16.gmra.mrb[0].mxu0 %v3209
        %v3330 = vpop.f32.mrb[0].mxu0
        %v3331 = vadd.f32 0.0, %v3330
        %v3332 = vpop.f32.mrb[0].mxu0
        %v3333 = vpop.f32.mrb[0].mxu0
        %v3334 = vadd.f32 0.0, %v3333
        %v3335 = vpop.f32.mrb[0].mxu0
        %3336 = vmatprep.mubr.bf16.mxu0 0
        %3337 = vmatmul.mubr.bf16.gmra.mrb[0].mxu0 %v3212
        %v3338 = vpop.f32.mrb[0].mxu0
        %v3339 = vadd.f32 0.0, %v3338
        %v3340 = vpop.f32.mrb[0].mxu0
        %v3341 = vpop.f32.mrb[0].mxu0
        %v3342 = vadd.f32 0.0, %v3341
        %v3343 = vpop.f32.mrb[0].mxu0
        %3344 = vmatprep.mubr.bf16.mxu0 0
        %3345 = vmatmul.mubr.bf16.gmra.mrb[0].mxu0 %v3215
        %v3346 = vpop.f32.mrb[0].mxu0
        %v3347 = vadd.f32 0.0, %v3346
        %v3348 = vpop.f32.mrb[0].mxu0
        %v3349 = vpop.f32.mrb[0].mxu0
        %v3350 = vadd.f32 0.0, %v3349
        %v3351 = vpop.f32.mrb[0].mxu0
        %3352 = vmatprep.mubr.bf16.mxu0 0
        %3353 = vmatmul.mubr.bf16.gmra.mrb[0].mxu0 %v3218
        %v3354 = vpop.f32.mrb[0].mxu0
        %v3355 = vadd.f32 0.0, %v3354
        %v3356 = vpop.f32.mrb[0].mxu0
        %v3357 = vpop.f32.mrb[0].mxu0
        %v3358 = vadd.f32 0.0, %v3357
        %v3359 = vpop.f32.mrb[0].mxu0
        %3360 = vmatprep.mubr.bf16.mxu0 0
        %3361 = vmatmul.mubr.bf16.gmra.mrb[0].mxu0 %v3221
        %v3362 = vpop.f32.mrb[0].mxu0
        %v3363 = vadd.f32 0.0, %v3362
        %v3364 = vpop.f32.mrb[0].mxu0
        %v3365 = vpop.f32.mrb[0].mxu0
        %v3366 = vadd.f32 0.0, %v3365
        %v3367 = vpop.f32.mrb[0].mxu0
        %3368 = vmatprep.mubr.bf16.mxu0 0
        %3369 = vmatmul.mubr.bf16.gmra.mrb[0].mxu0 %v3224
        %v3370 = vpop.f32.mrb[0].mxu0
        %v3371 = vadd.f32 0.0, %v3370
        %v3372 = vpop.f32.mrb[0].mxu0
        %v3373 = vpop.f32.mrb[0].mxu0
        %v3374 = vadd.f32 0.0, %v3373
        %v3375 = vpop.f32.mrb[0].mxu0
        %3376 = vmatprep.mubr.bf16.mxu0 0
        %3377 = vmatmul.mubr.bf16.gmra.mrb[0].mxu0 %v3227
        %v3378 = vpop.f32.mrb[0].mxu0
        %v3379 = vadd.f32 0.0, %v3378
        %v3380 = vpop.f32.mrb[0].mxu0
        %v3381 = vpop.f32.mrb[0].mxu0
        %v3382 = vadd.f32 0.0, %v3381
        %v3383 = vpop.f32.mrb[0].mxu0
        %3384 = vmatprep.mubr.bf16.mxu0 0
        %3385 = vmatmul.mubr.bf16.gmra.mrb[0].mxu0 %v3230
        %v3386 = vpop.f32.mrb[0].mxu0
        %v3387 = vadd.f32 0.0, %v3386
        %v3388 = vpop.f32.mrb[0].mxu0
        %v3389 = vpop.f32.mrb[0].mxu0
        %v3390 = vadd.f32 0.0, %v3389
        %v3391 = vpop.f32.mrb[0].mxu0
        %3392 = vdwg.mxu0
        %v3393 = vadd.f32 %v3087, %v3267
        %v3394 = vadd.f32 %v3088, %v3270
        %v3395 = vadd.f32 %v3089, %v3275
        %v3396 = vadd.f32 %v3090, %v3278
        %v3397 = vadd.f32 %v3091, %v3283
        %v3398 = vadd.f32 %v3092, %v3286
        %v3399 = vadd.f32 %v3093, %v3291
        %v3400 = vadd.f32 %v3094, %v3294
        %v3401 = vadd.f32 %v3095, %v3299
        %v3402 = vadd.f32 %v3096, %v3302
        %v3403 = vadd.f32 %v3097, %v3307
        %v3404 = vadd.f32 %v3098, %v3310
        %v3405 = vadd.f32 %v3099, %v3315
        %v3406 = vadd.f32 %v3100, %v3318
        %v3407 = vadd.f32 %v3101, %v3323
        %v3408 = vadd.f32 %v3102, %v3326
        %v3409 = vadd.f32 %v3103, %v3331
        %v3410 = vadd.f32 %v3104, %v3334
        %v3411 = vadd.f32 %v3105, %v3339
        %v3412 = vadd.f32 %v3106, %v3342
        %v3413 = vadd.f32 %v3107, %v3347
        %v3414 = vadd.f32 %v3108, %v3350
        %v3415 = vadd.f32 %v3109, %v3355
        %v3416 = vadd.f32 %v3110, %v3358
        %v3417 = vadd.f32 %v3111, %v3363
        %v3418 = vadd.f32 %v3112, %v3366
        %v3419 = vadd.f32 %v3113, %v3371
        %v3420 = vadd.f32 %v3114, %v3374
        %v3421 = vadd.f32 %v3115, %v3379
        %v3422 = vadd.f32 %v3116, %v3382
        %v3423 = vadd.f32 %v3117, %v3387
        %v3424 = vadd.f32 %v3118, %v3390
        %v3425 = vld [vmem:[%s5] sm:$0x1]
        %vm3426 = vcmp.gt.f32.partialorder %v3393, 0.0
        %vm3427 = vcmp.gt.f32.partialorder %v3394, 0.0
        %vm3428 = vcmp.gt.f32.partialorder %v3395, 0.0
        %vm3429 = vcmp.gt.f32.partialorder %v3396, 0.0
        %vm3430 = vcmp.gt.f32.partialorder %v3397, 0.0
        %vm3431 = vcmp.gt.f32.partialorder %v3398, 0.0
        %vm3432 = vcmp.gt.f32.partialorder %v3399, 0.0
        %vm3433 = vcmp.gt.f32.partialorder %v3400, 0.0
        %vm3434 = vcmp.gt.f32.partialorder %v3401, 0.0
        %vm3435 = vcmp.gt.f32.partialorder %v3402, 0.0
        %vm3436 = vcmp.gt.f32.partialorder %v3403, 0.0
        %vm3437 = vcmp.gt.f32.partialorder %v3404, 0.0
        %vm3438 = vcmp.gt.f32.partialorder %v3405, 0.0
        %vm3439 = vcmp.gt.f32.partialorder %v3406, 0.0
        %vm3440 = vcmp.gt.f32.partialorder %v3407, 0.0
        %vm3441 = vcmp.gt.f32.partialorder %v3408, 0.0
        %vm3442 = vcmp.gt.f32.partialorder %v3409, 0.0
        %vm3443 = vcmp.gt.f32.partialorder %v3410, 0.0
        %vm3444 = vcmp.gt.f32.partialorder %v3411, 0.0
        %vm3445 = vcmp.gt.f32.partialorder %v3412, 0.0
        %vm3446 = vcmp.gt.f32.partialorder %v3413, 0.0
        %vm3447 = vcmp.gt.f32.partialorder %v3414, 0.0
        %vm3448 = vcmp.gt.f32.partialorder %v3415, 0.0
        %vm3449 = vcmp.gt.f32.partialorder %v3416, 0.0
        %vm3450 = vcmp.gt.f32.partialorder %v3417, 0.0
        %vm3451 = vcmp.gt.f32.partialorder %v3418, 0.0
        %vm3452 = vcmp.gt.f32.partialorder %v3419, 0.0
        %vm3453 = vcmp.gt.f32.partialorder %v3420, 0.0
        %vm3454 = vcmp.gt.f32.partialorder %v3421, 0.0
        %vm3455 = vcmp.gt.f32.partialorder %v3422, 0.0
        %vm3456 = vcmp.gt.f32.partialorder %v3423, 0.0
        %vm3457 = vcmp.gt.f32.partialorder %v3424, 0.0
        %v3459 = vlaneseq
        %v3460 = vshrl.u32 %v3459, 7
        %v3461 = vsub.s32 0, %v3460
        %v3462 = vrot.slane %v3425, %v3461
        %v3464 = vmul.f32 %v3393, %v3462
        %v3465 = vmul.f32 %v3394, %v3462
        %v3466 = vmul.f32 %v3395, %v3462
        %v3467 = vmul.f32 %v3396, %v3462
        %v3468 = vmul.f32 %v3397, %v3462
        %v3469 = vmul.f32 %v3398, %v3462
        %v3470 = vmul.f32 %v3399, %v3462
        %v3471 = vmul.f32 %v3400, %v3462
        %v3472 = vmul.f32 %v3401, %v3462
        %v3473 = vmul.f32 %v3402, %v3462
        %v3474 = vmul.f32 %v3403, %v3462
        %v3475 = vmul.f32 %v3404, %v3462
        %v3476 = vmul.f32 %v3405, %v3462
        %v3477 = vmul.f32 %v3406, %v3462
        %v3478 = vmul.f32 %v3407, %v3462
        %v3479 = vmul.f32 %v3408, %v3462
        %v3480 = vmul.f32 %v3409, %v3462
        %v3481 = vmul.f32 %v3410, %v3462
        %v3482 = vmul.f32 %v3411, %v3462
        %v3483 = vmul.f32 %v3412, %v3462
        %v3484 = vmul.f32 %v3413, %v3462
        %v3485 = vmul.f32 %v3414, %v3462
        %v3486 = vmul.f32 %v3415, %v3462
        %v3487 = vmul.f32 %v3416, %v3462
        %v3488 = vmul.f32 %v3417, %v3462
        %v3489 = vmul.f32 %v3418, %v3462
        %v3490 = vmul.f32 %v3419, %v3462
        %v3491 = vmul.f32 %v3420, %v3462
        %v3492 = vmul.f32 %v3421, %v3462
        %v3493 = vmul.f32 %v3422, %v3462
        %v3494 = vmul.f32 %v3423, %v3462
        %v3495 = vmul.f32 %v3424, %v3462
        %v3496 = vsel %vm3426, %v3393, %v3464
        %v3497 = vsel %vm3427, %v3394, %v3465
        %v3498 = vsel %vm3428, %v3395, %v3466
        %v3499 = vsel %vm3429, %v3396, %v3467
        %v3500 = vsel %vm3430, %v3397, %v3468
        %v3501 = vsel %vm3431, %v3398, %v3469
        %v3502 = vsel %vm3432, %v3399, %v3470
        %v3503 = vsel %vm3433, %v3400, %v3471
        %v3504 = vsel %vm3434, %v3401, %v3472
        %v3505 = vsel %vm3435, %v3402, %v3473
        %v3506 = vsel %vm3436, %v3403, %v3474
        %v3507 = vsel %vm3437, %v3404, %v3475
        %v3508 = vsel %vm3438, %v3405, %v3476
        %v3509 = vsel %vm3439, %v3406, %v3477
        %v3510 = vsel %vm3440, %v3407, %v3478
        %v3511 = vsel %vm3441, %v3408, %v3479
        %v3512 = vsel %vm3442, %v3409, %v3480
        %v3513 = vsel %vm3443, %v3410, %v3481
        %v3514 = vsel %vm3444, %v3411, %v3482
        %v3515 = vsel %vm3445, %v3412, %v3483
        %v3516 = vsel %vm3446, %v3413, %v3484
        %v3517 = vsel %vm3447, %v3414, %v3485
        %v3518 = vsel %vm3448, %v3415, %v3486
        %v3519 = vsel %vm3449, %v3416, %v3487
        %v3520 = vsel %vm3450, %v3417, %v3488
        %v3521 = vsel %vm3451, %v3418, %v3489
        %v3522 = vsel %vm3452, %v3419, %v3490
        %v3523 = vsel %vm3453, %v3420, %v3491
        %v3524 = vsel %vm3454, %v3421, %v3492
        %v3525 = vsel %vm3455, %v3422, %v3493
        %v3526 = vsel %vm3456, %v3423, %v3494
        %v3527 = vsel %vm3457, %v3424, %v3495
        %vm3528 = vcmask 523264
        %3529 = vst.msk [vmem:[#allocation3] sm:$0xff] %vm3528, 0.0
        %3530 = vst.msk [vmem:[#allocation3 + $0x8] sm:$0xff] %vm3528, 0.0
        %vm3531 = vcmask 517120
        %3532 = vst.msk [vmem:[#allocation3 + $0x10] sm:$0x3] %vm3531, 0.0
        %3533 = vst.msk [vmem:[#allocation3 + $0x18] sm:$0xff] %vm3528, 0.0
        %3534 = vst.msk [vmem:[#allocation3 + $0x20] sm:$0xff] %vm3528, 0.0
        %3535 = vst.msk [vmem:[#allocation3 + $0x28] sm:$0x3] %vm3531, 0.0
        %3536 = vst.msk [vmem:[#allocation3 + $0x30] sm:$0xff] %vm3528, 0.0
        %3537 = vst.msk [vmem:[#allocation3 + $0x38] sm:$0xff] %vm3528, 0.0
        %3538 = vst.msk [vmem:[#allocation3 + $0x40] sm:$0x3] %vm3531, 0.0
        %3539 = vst.msk [vmem:[#allocation3 + $0x48] sm:$0xff] %vm3528, 0.0
        %3540 = vst.msk [vmem:[#allocation3 + $0x50] sm:$0xff] %vm3528, 0.0
        %3541 = vst.msk [vmem:[#allocation3 + $0x58] sm:$0x3] %vm3531, 0.0
        %3542 = vst.msk [vmem:[#allocation3 + $0x60] sm:$0xff] %vm3528, 0.0
        %3543 = vst.msk [vmem:[#allocation3 + $0x68] sm:$0xff] %vm3528, 0.0
        %3544 = vst.msk [vmem:[#allocation3 + $0x70] sm:$0x3] %vm3531, 0.0
        %3545 = vst.msk [vmem:[#allocation3 + $0x78] sm:$0xff] %vm3528, 0.0
        %3546 = vst.msk [vmem:[#allocation3 + $0x80] sm:$0xff] %vm3528, 0.0
        %3547 = vst.msk [vmem:[#allocation3 + $0x88] sm:$0x3] %vm3531, 0.0
        %3548 = vst.msk [vmem:[#allocation3 + $0x90] sm:$0xff] %vm3528, 0.0
        %3549 = vst.msk [vmem:[#allocation3 + $0x98] sm:$0xff] %vm3528, 0.0
        %3550 = vst.msk [vmem:[#allocation3 + $0xa0] sm:$0x3] %vm3531, 0.0
        %3551 = vst.msk [vmem:[#allocation3 + $0xa8] sm:$0xff] %vm3528, 0.0
        %3552 = vst.msk [vmem:[#allocation3 + $0xb0] sm:$0xff] %vm3528, 0.0
        %3553 = vst.msk [vmem:[#allocation3 + $0xb8] sm:$0x3] %vm3531, 0.0
        %3554 = vst.msk [vmem:[#allocation3 + $0xc0] sm:$0xff] %vm3528, 0.0
        %3555 = vst.msk [vmem:[#allocation3 + $0xc8] sm:$0xff] %vm3528, 0.0
        %3556 = vst.msk [vmem:[#allocation3 + $0xd0] sm:$0x3] %vm3531, 0.0
        %3557 = vst.msk [vmem:[#allocation3 + $0xd8] sm:$0xff] %vm3528, 0.0
        %3558 = vst.msk [vmem:[#allocation3 + $0xe0] sm:$0xff] %vm3528, 0.0
        %3559 = vst.msk [vmem:[#allocation3 + $0xe8] sm:$0x3] %vm3531, 0.0
        %3560 = vst.msk [vmem:[#allocation3 + $0xf0] sm:$0xff] %vm3528, 0.0
        %3561 = vst.msk [vmem:[#allocation3 + $0xf8] sm:$0xff] %vm3528, 0.0
        %3562 = vst.msk [vmem:[#allocation3 + $0x100] sm:$0x3] %vm3531, 0.0
        %3563 = vst.msk [vmem:[#allocation3 + $0x108] sm:$0xff] %vm3528, 0.0
        %3564 = vst.msk [vmem:[#allocation3 + $0x110] sm:$0xff] %vm3528, 0.0
        %3565 = vst.msk [vmem:[#allocation3 + $0x118] sm:$0x3] %vm3531, 0.0
        %3566 = vst.msk [vmem:[#allocation3 + $0x120] sm:$0xff] %vm3528, 0.0
        %3567 = vst.msk [vmem:[#allocation3 + $0x128] sm:$0xff] %vm3528, 0.0
        %3568 = vst.msk [vmem:[#allocation3 + $0x130] sm:$0x3] %vm3531, 0.0
        %3569 = vst.msk [vmem:[#allocation3 + $0x138] sm:$0xff] %vm3528, 0.0
        %3570 = vst.msk [vmem:[#allocation3 + $0x140] sm:$0xff] %vm3528, 0.0
        %3571 = vst.msk [vmem:[#allocation3 + $0x148] sm:$0x3] %vm3531, 0.0
        %3572 = vst.msk [vmem:[#allocation3 + $0x150] sm:$0xff] %vm3528, 0.0
        %3573 = vst.msk [vmem:[#allocation3 + $0x158] sm:$0xff] %vm3528, 0.0
        %3574 = vst.msk [vmem:[#allocation3 + $0x160] sm:$0x3] %vm3531, 0.0
        %3575 = vst.msk [vmem:[#allocation3 + $0x168] sm:$0xff] %vm3528, 0.0
        %3576 = vst.msk [vmem:[#allocation3 + $0x170] sm:$0xff] %vm3528, 0.0
        %3577 = vst.msk [vmem:[#allocation3 + $0x178] sm:$0x3] %vm3531, 0.0
        %3578 = vst.msk [vmem:[#allocation3 + $0x180] sm:$0xff] %vm3528, 0.0
        %3579 = vst.msk [vmem:[#allocation3 + $0x188] sm:$0xff] %vm3528, 0.0
        %3580 = vst.msk [vmem:[#allocation3 + $0x190] sm:$0x3] %vm3531, 0.0
        %3581 = vst.msk [vmem:[#allocation3 + $0x198] sm:$0xff] %vm3528, 0.0
        %3582 = vst.msk [vmem:[#allocation3 + $0x1a0] sm:$0xff] %vm3528, 0.0
        %3583 = vst.msk [vmem:[#allocation3 + $0x1a8] sm:$0x3] %vm3531, 0.0
        %s3584 = scalar_lea.vmem [#allocation3], 24
        %3585 = vst.msk [vmem:[%s3584 + $0x1] sm:$0xff] %vm3528, %v3496
        %3586 = vst.msk [vmem:[%s3584 + $0x9] sm:$0xff] %vm3528, %v3497
        %3587 = vst.msk [vmem:[%s3584 + $0x19] sm:$0xff] %vm3528, %v3498
        %3588 = vst.msk [vmem:[%s3584 + $0x21] sm:$0xff] %vm3528, %v3499
        %3589 = vst.msk [vmem:[%s3584 + $0x31] sm:$0xff] %vm3528, %v3500
        %3590 = vst.msk [vmem:[%s3584 + $0x39] sm:$0xff] %vm3528, %v3501
        %3591 = vst.msk [vmem:[%s3584 + $0x49] sm:$0xff] %vm3528, %v3502
        %3592 = vst.msk [vmem:[%s3584 + $0x51] sm:$0xff] %vm3528, %v3503
        %3593 = vst.msk [vmem:[%s3584 + $0x61] sm:$0xff] %vm3528, %v3504
        %3594 = vst.msk [vmem:[%s3584 + $0x69] sm:$0xff] %vm3528, %v3505
        %3595 = vst.msk [vmem:[%s3584 + $0x79] sm:$0xff] %vm3528, %v3506
        %3596 = vst.msk [vmem:[%s3584 + $0x81] sm:$0xff] %vm3528, %v3507
        %3597 = vst.msk [vmem:[%s3584 + $0x91] sm:$0xff] %vm3528, %v3508
        %3598 = vst.msk [vmem:[%s3584 + $0x99] sm:$0xff] %vm3528, %v3509
        %3599 = vst.msk [vmem:[%s3584 + $0xa9] sm:$0xff] %vm3528, %v3510
        %3600 = vst.msk [vmem:[%s3584 + $0xb1] sm:$0xff] %vm3528, %v3511
        %3601 = vst.msk [vmem:[%s3584 + $0xc1] sm:$0xff] %vm3528, %v3512
        %3602 = vst.msk [vmem:[%s3584 + $0xc9] sm:$0xff] %vm3528, %v3513
        %3603 = vst.msk [vmem:[%s3584 + $0xd9] sm:$0xff] %vm3528, %v3514
        %3604 = vst.msk [vmem:[%s3584 + $0xe1] sm:$0xff] %vm3528, %v3515
        %3605 = vst.msk [vmem:[%s3584 + $0xf1] sm:$0xff] %vm3528, %v3516
        %3606 = vst.msk [vmem:[%s3584 + $0xf9] sm:$0xff] %vm3528, %v3517
        %3607 = vst.msk [vmem:[%s3584 + $0x109] sm:$0xff] %vm3528, %v3518
        %3608 = vst.msk [vmem:[%s3584 + $0x111] sm:$0xff] %vm3528, %v3519
        %3609 = vst.msk [vmem:[%s3584 + $0x121] sm:$0xff] %vm3528, %v3520
        %3610 = vst.msk [vmem:[%s3584 + $0x129] sm:$0xff] %vm3528, %v3521
        %3611 = vst.msk [vmem:[%s3584 + $0x139] sm:$0xff] %vm3528, %v3522
        %3612 = vst.msk [vmem:[%s3584 + $0x141] sm:$0xff] %vm3528, %v3523
        %3613 = vst.msk [vmem:[%s3584 + $0x151] sm:$0xff] %vm3528, %v3524
        %3614 = vst.msk [vmem:[%s3584 + $0x159] sm:$0xff] %vm3528, %v3525
        %3615 = vst.msk [vmem:[%s3584 + $0x169] sm:$0xff] %vm3528, %v3526
        %3616 = vst.msk [vmem:[%s3584 + $0x171] sm:$0xff] %vm3528, %v3527
        %v3617 = vld [vmem:[#allocation3] ss:$2 sm:$0xff]
        %s3618 = scalar_lea.vmem [#allocation3], 48
        %v3619 = vld [vmem:[%s3618] ss:$2 sm:$0xff]
        %s3620 = scalar_lea.vmem [#allocation3], 96
        %v3621 = vld [vmem:[%s3620] ss:$2 sm:$0xff]
        %s3622 = scalar_lea.vmem [#allocation3], 144
        %v3623 = vld [vmem:[%s3622] ss:$2 sm:$0xff]
        %s3624 = scalar_lea.vmem [#allocation3], 192
        %v3625 = vld [vmem:[%s3624] ss:$2 sm:$0xff]
        %s3626 = scalar_lea.vmem [#allocation3], 240
        %v3627 = vld [vmem:[%s3626] ss:$2 sm:$0xff]
        %s3628 = scalar_lea.vmem [#allocation3], 288
        %v3629 = vld [vmem:[%s3628] ss:$2 sm:$0xff]
        %s3630 = scalar_lea.vmem [#allocation3], 336
        %v3631 = vld [vmem:[%s3630] ss:$2 sm:$0xff]
        %v3632 = vpack.c.bf16 %v3619, %v3617
        %v3633 = vpack.c.bf16 %v3623, %v3621
        %v3634 = vpack.c.bf16 %v3627, %v3625
        %v3635 = vpack.c.bf16 %v3631, %v3629
        %v3636 = vld [vmem:[%s6] sm:$0xf]
        %v3637 = vld [vmem:[%s6 + $0x4] sm:$0xf]
        %v3638 = vld [vmem:[%s6 + $0x8] sm:$0xf]
        %v3639 = vld [vmem:[%s6 + $0xc] sm:$0xf]
        %v3640 = vld [vmem:[%s6 + $0x10] sm:$0xf]
        %v3641 = vld [vmem:[%s6 + $0x14] sm:$0xf]
        %v3642 = vld [vmem:[%s6 + $0x18] sm:$0xf]
        %v3643 = vld [vmem:[%s6 + $0x1c] sm:$0xf]
        %s3644 = scalar_lea.vmem [#allocation3], 1
        %v3645 = vld [vmem:[%s3644] ss:$2 sm:$0xff]
        %s3646 = scalar_lea.vmem [#allocation3], 49
        %v3647 = vld [vmem:[%s3646] ss:$2 sm:$0xff]
        %s3648 = scalar_lea.vmem [#allocation3], 97
        %v3649 = vld [vmem:[%s3648] ss:$2 sm:$0xff]
        %s3650 = scalar_lea.vmem [#allocation3], 145
        %v3651 = vld [vmem:[%s3650] ss:$2 sm:$0xff]
        %s3652 = scalar_lea.vmem [#allocation3], 193
        %v3653 = vld [vmem:[%s3652] ss:$2 sm:$0xff]
        %s3654 = scalar_lea.vmem [#allocation3], 241
        %v3655 = vld [vmem:[%s3654] ss:$2 sm:$0xff]
        %s3656 = scalar_lea.vmem [#allocation3], 289
        %v3657 = vld [vmem:[%s3656] ss:$2 sm:$0xff]
        %s3658 = scalar_lea.vmem [#allocation3], 337
        %v3659 = vld [vmem:[%s3658] ss:$2 sm:$0xff]
        %v3660 = vpack.c.bf16 %v3647, %v3645
        %v3661 = vpack.c.bf16 %v3651, %v3649
        %v3662 = vpack.c.bf16 %v3655, %v3653
        %v3663 = vpack.c.bf16 %v3659, %v3657
        %s3664 = scalar_lea.vmem %s6, 32
        %v3665 = vld [vmem:[%s3664] sm:$0xf]
        %v3666 = vld [vmem:[%s3664 + $0x4] sm:$0xf]
        %v3667 = vld [vmem:[%s3664 + $0x8] sm:$0xf]
        %v3668 = vld [vmem:[%s3664 + $0xc] sm:$0xf]
        %v3669 = vld [vmem:[%s3664 + $0x10] sm:$0xf]
        %v3670 = vld [vmem:[%s3664 + $0x14] sm:$0xf]
        %v3671 = vld [vmem:[%s3664 + $0x18] sm:$0xf]
        %v3672 = vld [vmem:[%s3664 + $0x1c] sm:$0xf]
        %v3681 = vunpack.c.l.b16 %v3665
        %v3682 = vunpack.c.l.b16 %v3666
        %v3683 = vunpack.c.l.b16 %v3667
        %v3684 = vunpack.c.l.b16 %v3668
        %v3685 = vunpack.c.l.b16 %v3669
        %v3686 = vunpack.c.l.b16 %v3670
        %v3687 = vunpack.c.l.b16 %v3671
        %v3688 = vunpack.c.l.b16 %v3672
        %v3689 = vpack.c.b16 %v3682, %v3681
        %v3690 = vpack.c.b16 %v3684, %v3683
        %v3691 = vpack.c.b16 %v3686, %v3685
        %v3692 = vpack.c.b16 %v3688, %v3687
        %v3698 = vsel %vm3528, %v3660, 0
        %v3701 = vsel %vm3528, %v3661, 0
        %v3704 = vsel %vm3528, %v3662, 0
        %v3707 = vsel %vm3528, %v3663, 0
        %3709 = vmatprep.subr.bf16.mxu0 0
        %3710 = vmatpush1.bf16.msra.mxu0 %v3689
        %3711 = vmatprep.subr.bf16.mxu0 0
        %3712 = vmatpush1.bf16.msra.mxu0 %v3690
        %3713 = vmatprep.subr.bf16.mxu0 0
        %3714 = vmatpush1.bf16.msra.mxu0 %v3691
        %3715 = vmatprep.subr.bf16.mxu0 0
        %3716 = vmatpush1.bf16.msra.mxu0 %v3692
        %3717 = vmatprep.subr.bf16.mxu0 0
        %3718 = vmatpush1.bf16.msra.mxu0 0
        %3719 = vmatprep.subr.bf16.mxu0 0
        %3720 = vmatpush1.bf16.msra.mxu0 0
        %3721 = vmatprep.subr.bf16.mxu0 0
        %3722 = vmatpush1.bf16.msra.mxu0 0
        %3723 = vmatprep.subr.bf16.mxu0 0
        %3724 = vmatpush1.bf16.msra.mxu0 0
        %3725 = vmatprep.subr.bf16.mxu0 0
        %3726 = vmatpush1.bf16.msra.mxu0 0
        %3727 = vmatprep.subr.bf16.mxu0 0
        %3728 = vmatpush1.bf16.msra.mxu0 0
        %3729 = vmatprep.subr.bf16.mxu0 0
        %3730 = vmatpush1.bf16.msra.mxu0 0
        %3731 = vmatprep.subr.bf16.mxu0 0
        %3732 = vmatpush1.bf16.msra.mxu0 0
        %3733 = vmatprep.subr.bf16.mxu0 0
        %3734 = vmatpush1.bf16.msra.mxu0 0
        %3735 = vmatprep.subr.bf16.mxu0 0
        %3736 = vmatpush1.bf16.msra.mxu0 0
        %3737 = vmatprep.subr.bf16.mxu0 0
        %3738 = vmatpush1.bf16.msra.mxu0 0
        %3739 = vmatprep.subr.bf16.mxu0 0
        %3740 = vmatpush1.bf16.msra.mxu0 0
        %3741 = vmatprep.mubr.bf16.mxu0 0
        %3742 = vmatmul.mubr.bf16.gmra.mrb[0].mxu0 %v3698
        %v3743 = vpop.f32.mrb[0].mxu0
        %v3744 = vadd.f32 0.0, %v3743
        %v3745 = vpop.f32.mrb[0].mxu0
        %v3746 = vpop.f32.mrb[0].mxu0
        %v3747 = vadd.f32 0.0, %v3746
        %v3748 = vpop.f32.mrb[0].mxu0
        %3749 = vmatprep.mubr.bf16.mxu0 0
        %3750 = vmatmul.mubr.bf16.gmra.mrb[0].mxu0 %v3701
        %v3751 = vpop.f32.mrb[0].mxu0
        %v3752 = vadd.f32 0.0, %v3751
        %v3753 = vpop.f32.mrb[0].mxu0
        %v3754 = vpop.f32.mrb[0].mxu0
        %v3755 = vadd.f32 0.0, %v3754
        %v3756 = vpop.f32.mrb[0].mxu0
        %3757 = vmatprep.mubr.bf16.mxu0 0
        %3758 = vmatmul.mubr.bf16.gmra.mrb[0].mxu0 %v3704
        %v3759 = vpop.f32.mrb[0].mxu0
        %v3760 = vadd.f32 0.0, %v3759
        %v3761 = vpop.f32.mrb[0].mxu0
        %v3762 = vpop.f32.mrb[0].mxu0
        %v3763 = vadd.f32 0.0, %v3762
        %v3764 = vpop.f32.mrb[0].mxu0
        %3765 = vmatprep.mubr.bf16.mxu0 0
        %3766 = vmatmul.mubr.bf16.gmra.mrb[0].mxu0 %v3707
        %v3767 = vpop.f32.mrb[0].mxu0
        %v3768 = vadd.f32 0.0, %v3767
        %v3769 = vpop.f32.mrb[0].mxu0
        %v3770 = vpop.f32.mrb[0].mxu0
        %v3771 = vadd.f32 0.0, %v3770
        %v3772 = vpop.f32.mrb[0].mxu0
        %3773 = vdwg.mxu0
        %v3782 = vunpack.c.l.b16 %v3636
        %v3783 = vunpack.c.l.b16 %v3637
        %v3784 = vunpack.c.l.b16 %v3638
        %v3785 = vunpack.c.l.b16 %v3639
        %v3786 = vunpack.c.l.b16 %v3640
        %v3787 = vunpack.c.l.b16 %v3641
        %v3788 = vunpack.c.l.b16 %v3642
        %v3789 = vunpack.c.l.b16 %v3643
        %v3790 = vpack.c.b16 %v3783, %v3782
        %v3791 = vpack.c.b16 %v3785, %v3784
        %v3792 = vpack.c.b16 %v3787, %v3786
        %v3793 = vpack.c.b16 %v3789, %v3788
        %v3799 = vsel %vm3528, %v3632, 0
        %v3802 = vsel %vm3528, %v3633, 0
        %v3805 = vsel %vm3528, %v3634, 0
        %v3808 = vsel %vm3528, %v3635, 0
        %3810 = vmatprep.subr.bf16.mxu0 0
        %3811 = vmatpush1.bf16.msra.mxu0 %v3790
        %3812 = vmatprep.subr.bf16.mxu0 0
        %3813 = vmatpush1.bf16.msra.mxu0 %v3791
        %3814 = vmatprep.subr.bf16.mxu0 0
        %3815 = vmatpush1.bf16.msra.mxu0 %v3792
        %3816 = vmatprep.subr.bf16.mxu0 0
        %3817 = vmatpush1.bf16.msra.mxu0 %v3793
        %3818 = vmatprep.subr.bf16.mxu0 0
        %3819 = vmatpush1.bf16.msra.mxu0 0
        %3820 = vmatprep.subr.bf16.mxu0 0
        %3821 = vmatpush1.bf16.msra.mxu0 0
        %3822 = vmatprep.subr.bf16.mxu0 0
        %3823 = vmatpush1.bf16.msra.mxu0 0
        %3824 = vmatprep.subr.bf16.mxu0 0
        %3825 = vmatpush1.bf16.msra.mxu0 0
        %3826 = vmatprep.subr.bf16.mxu0 0
        %3827 = vmatpush1.bf16.msra.mxu0 0
        %3828 = vmatprep.subr.bf16.mxu0 0
        %3829 = vmatpush1.bf16.msra.mxu0 0
        %3830 = vmatprep.subr.bf16.mxu0 0
        %3831 = vmatpush1.bf16.msra.mxu0 0
        %3832 = vmatprep.subr.bf16.mxu0 0
        %3833 = vmatpush1.bf16.msra.mxu0 0
        %3834 = vmatprep.subr.bf16.mxu0 0
        %3835 = vmatpush1.bf16.msra.mxu0 0
        %3836 = vmatprep.subr.bf16.mxu0 0
        %3837 = vmatpush1.bf16.msra.mxu0 0
        %3838 = vmatprep.subr.bf16.mxu0 0
        %3839 = vmatpush1.bf16.msra.mxu0 0
        %3840 = vmatprep.subr.bf16.mxu0 0
        %3841 = vmatpush1.bf16.msra.mxu0 0
        %3842 = vmatprep.mubr.bf16.mxu0 0
        %3843 = vmatmul.mubr.bf16.gmra.mrb[0].mxu0 %v3799
        %v3844 = vpop.f32.mrb[0].mxu0
        %v3845 = vadd.f32 %v3744, %v3844
        %v3846 = vpop.f32.mrb[0].mxu0
        %v3847 = vpop.f32.mrb[0].mxu0
        %v3848 = vadd.f32 %v3747, %v3847
        %v3849 = vpop.f32.mrb[0].mxu0
        %3850 = vmatprep.mubr.bf16.mxu0 0
        %3851 = vmatmul.mubr.bf16.gmra.mrb[0].mxu0 %v3802
        %v3852 = vpop.f32.mrb[0].mxu0
        %v3853 = vadd.f32 %v3752, %v3852
        %v3854 = vpop.f32.mrb[0].mxu0
        %v3855 = vpop.f32.mrb[0].mxu0
        %v3856 = vadd.f32 %v3755, %v3855
        %v3857 = vpop.f32.mrb[0].mxu0
        %3858 = vmatprep.mubr.bf16.mxu0 0
        %3859 = vmatmul.mubr.bf16.gmra.mrb[0].mxu0 %v3805
        %v3860 = vpop.f32.mrb[0].mxu0
        %v3861 = vadd.f32 %v3760, %v3860
        %v3862 = vpop.f32.mrb[0].mxu0
        %v3863 = vpop.f32.mrb[0].mxu0
        %v3864 = vadd.f32 %v3763, %v3863
        %v3865 = vpop.f32.mrb[0].mxu0
        %3866 = vmatprep.mubr.bf16.mxu0 0
        %3867 = vmatmul.mubr.bf16.gmra.mrb[0].mxu0 %v3808
        %v3868 = vpop.f32.mrb[0].mxu0
        %v3869 = vadd.f32 %v3768, %v3868
        %v3870 = vpop.f32.mrb[0].mxu0
        %v3871 = vpop.f32.mrb[0].mxu0
        %v3872 = vadd.f32 %v3771, %v3871
        %v3873 = vpop.f32.mrb[0].mxu0
        %3874 = vdwg.mxu0
        %s3875 = scalar_lea.vmem [#allocation3], 2
        %v3876 = vld [vmem:[%s3875] ss:$2 sm:$0xff]
        %s3877 = scalar_lea.vmem [#allocation3], 50
        %v3878 = vld [vmem:[%s3877] ss:$2 sm:$0xff]
        %s3879 = scalar_lea.vmem [#allocation3], 98
        %v3880 = vld [vmem:[%s3879] ss:$2 sm:$0xff]
        %s3881 = scalar_lea.vmem [#allocation3], 146
        %v3882 = vld [vmem:[%s3881] ss:$2 sm:$0xff]
        %s3883 = scalar_lea.vmem [#allocation3], 194
        %v3884 = vld [vmem:[%s3883] ss:$2 sm:$0xff]
        %s3885 = scalar_lea.vmem [#allocation3], 242
        %v3886 = vld [vmem:[%s3885] ss:$2 sm:$0xff]
        %s3887 = scalar_lea.vmem [#allocation3], 290
        %v3888 = vld [vmem:[%s3887] ss:$2 sm:$0xff]
        %s3889 = scalar_lea.vmem [#allocation3], 338
        %v3890 = vld [vmem:[%s3889] ss:$2 sm:$0xff]
        %v3891 = vpack.c.bf16 %v3878, %v3876
        %v3892 = vpack.c.bf16 %v3882, %v3880
        %v3893 = vpack.c.bf16 %v3886, %v3884
        %v3894 = vpack.c.bf16 %v3890, %v3888
        %s3895 = scalar_lea.vmem %s6, 64
        %v3896 = vld [vmem:[%s3895] sm:$0xf]
        %v3897 = vld [vmem:[%s3895 + $0x4] sm:$0xf]
        %v3898 = vld [vmem:[%s3895 + $0x8] sm:$0xf]
        %v3899 = vld [vmem:[%s3895 + $0xc] sm:$0xf]
        %v3900 = vld [vmem:[%s3895 + $0x10] sm:$0xf]
        %v3901 = vld [vmem:[%s3895 + $0x14] sm:$0xf]
        %v3902 = vld [vmem:[%s3895 + $0x18] sm:$0xf]
        %v3903 = vld [vmem:[%s3895 + $0x1c] sm:$0xf]
        %v3912 = vunpack.c.l.b16 %v3896
        %v3913 = vunpack.c.l.b16 %v3897
        %v3914 = vunpack.c.l.b16 %v3898
        %v3915 = vunpack.c.l.b16 %v3899
        %v3916 = vunpack.c.l.b16 %v3900
        %v3917 = vunpack.c.l.b16 %v3901
        %v3918 = vunpack.c.l.b16 %v3902
        %v3919 = vunpack.c.l.b16 %v3903
        %v3920 = vpack.c.b16 %v3913, %v3912
        %v3921 = vpack.c.b16 %v3915, %v3914
        %v3922 = vpack.c.b16 %v3917, %v3916
        %v3923 = vpack.c.b16 %v3919, %v3918
        %v3929 = vsel %vm3528, %v3891, 0
        %v3932 = vsel %vm3528, %v3892, 0
        %v3935 = vsel %vm3528, %v3893, 0
        %v3938 = vsel %vm3528, %v3894, 0
        %3940 = vmatprep.subr.bf16.mxu0 0
        %3941 = vmatpush1.bf16.msra.mxu0 %v3920
        %3942 = vmatprep.subr.bf16.mxu0 0
        %3943 = vmatpush1.bf16.msra.mxu0 %v3921
        %3944 = vmatprep.subr.bf16.mxu0 0
        %3945 = vmatpush1.bf16.msra.mxu0 %v3922
        %3946 = vmatprep.subr.bf16.mxu0 0
        %3947 = vmatpush1.bf16.msra.mxu0 %v3923
        %3948 = vmatprep.subr.bf16.mxu0 0
        %3949 = vmatpush1.bf16.msra.mxu0 0
        %3950 = vmatprep.subr.bf16.mxu0 0
        %3951 = vmatpush1.bf16.msra.mxu0 0
        %3952 = vmatprep.subr.bf16.mxu0 0
        %3953 = vmatpush1.bf16.msra.mxu0 0
        %3954 = vmatprep.subr.bf16.mxu0 0
        %3955 = vmatpush1.bf16.msra.mxu0 0
        %3956 = vmatprep.subr.bf16.mxu0 0
        %3957 = vmatpush1.bf16.msra.mxu0 0
        %3958 = vmatprep.subr.bf16.mxu0 0
        %3959 = vmatpush1.bf16.msra.mxu0 0
        %3960 = vmatprep.subr.bf16.mxu0 0
        %3961 = vmatpush1.bf16.msra.mxu0 0
        %3962 = vmatprep.subr.bf16.mxu0 0
        %3963 = vmatpush1.bf16.msra.mxu0 0
        %3964 = vmatprep.subr.bf16.mxu0 0
        %3965 = vmatpush1.bf16.msra.mxu0 0
        %3966 = vmatprep.subr.bf16.mxu0 0
        %3967 = vmatpush1.bf16.msra.mxu0 0
        %3968 = vmatprep.subr.bf16.mxu0 0
        %3969 = vmatpush1.bf16.msra.mxu0 0
        %3970 = vmatprep.subr.bf16.mxu0 0
        %3971 = vmatpush1.bf16.msra.mxu0 0
        %3972 = vmatprep.mubr.bf16.mxu0 0
        %3973 = vmatmul.mubr.bf16.gmra.mrb[0].mxu0 %v3929
        %v3974 = vpop.f32.mrb[0].mxu0
        %v3975 = vadd.f32 0.0, %v3974
        %v3976 = vpop.f32.mrb[0].mxu0
        %v3977 = vpop.f32.mrb[0].mxu0
        %v3978 = vadd.f32 0.0, %v3977
        %v3979 = vpop.f32.mrb[0].mxu0
        %3980 = vmatprep.mubr.bf16.mxu0 0
        %3981 = vmatmul.mubr.bf16.gmra.mrb[0].mxu0 %v3932
        %v3982 = vpop.f32.mrb[0].mxu0
        %v3983 = vadd.f32 0.0, %v3982
        %v3984 = vpop.f32.mrb[0].mxu0
        %v3985 = vpop.f32.mrb[0].mxu0
        %v3986 = vadd.f32 0.0, %v3985
        %v3987 = vpop.f32.mrb[0].mxu0
        %3988 = vmatprep.mubr.bf16.mxu0 0
        %3989 = vmatmul.mubr.bf16.gmra.mrb[0].mxu0 %v3935
        %v3990 = vpop.f32.mrb[0].mxu0
        %v3991 = vadd.f32 0.0, %v3990
        %v3992 = vpop.f32.mrb[0].mxu0
        %v3993 = vpop.f32.mrb[0].mxu0
        %v3994 = vadd.f32 0.0, %v3993
        %v3995 = vpop.f32.mrb[0].mxu0
        %3996 = vmatprep.mubr.bf16.mxu0 0
        %3997 = vmatmul.mubr.bf16.gmra.mrb[0].mxu0 %v3938
        %v3998 = vpop.f32.mrb[0].mxu0
        %v3999 = vadd.f32 0.0, %v3998
        %v4000 = vpop.f32.mrb[0].mxu0
        %v4001 = vpop.f32.mrb[0].mxu0
        %v4002 = vadd.f32 0.0, %v4001
        %v4003 = vpop.f32.mrb[0].mxu0
        %4004 = vdwg.mxu0
        %v4005 = vadd.f32 %v3845, %v3975
        %v4006 = vadd.f32 %v3848, %v3978
        %v4007 = vadd.f32 %v3853, %v3983
        %v4008 = vadd.f32 %v3856, %v3986
        %v4009 = vadd.f32 %v3861, %v3991
        %v4010 = vadd.f32 %v3864, %v3994
        %v4011 = vadd.f32 %v3869, %v3999
        %v4012 = vadd.f32 %v3872, %v4002
        %v4013 = vld [vmem:[%s3584] ss:$2 sm:$0xff]
        %s4014 = scalar_lea.vmem %s3584, 48 [#allocation3]
        %v4015 = vld [vmem:[%s4014] ss:$2 sm:$0xff]
        %s4016 = scalar_lea.vmem %s3584, 96 [#allocation3]
        %v4017 = vld [vmem:[%s4016] ss:$2 sm:$0xff]
        %s4018 = scalar_lea.vmem %s3584, 144 [#allocation3]
        %v4019 = vld [vmem:[%s4018] ss:$2 sm:$0xff]
        %s4020 = scalar_lea.vmem %s3584, 192 [#allocation3]
        %v4021 = vld [vmem:[%s4020] ss:$2 sm:$0xff]
        %s4022 = scalar_lea.vmem %s3584, 240 [#allocation3]
        %v4023 = vld [vmem:[%s4022] ss:$2 sm:$0xff]
        %s4024 = scalar_lea.vmem %s3584, 288 [#allocation3]
        %v4025 = vld [vmem:[%s4024] ss:$2 sm:$0xff]
        %s4026 = scalar_lea.vmem %s3584, 336 [#allocation3]
        %v4027 = vld [vmem:[%s4026] ss:$2 sm:$0xff]
        %v4028 = vpack.c.bf16 %v4015, %v4013
        %v4029 = vpack.c.bf16 %v4019, %v4017
        %v4030 = vpack.c.bf16 %v4023, %v4021
        %v4031 = vpack.c.bf16 %v4027, %v4025
        %s4032 = scalar_lea.vmem %s6, 96
        %v4033 = vld [vmem:[%s4032] sm:$0xf]
        %v4034 = vld [vmem:[%s4032 + $0x4] sm:$0xf]
        %v4035 = vld [vmem:[%s4032 + $0x8] sm:$0xf]
        %v4036 = vld [vmem:[%s4032 + $0xc] sm:$0xf]
        %v4037 = vld [vmem:[%s4032 + $0x10] sm:$0xf]
        %v4038 = vld [vmem:[%s4032 + $0x14] sm:$0xf]
        %v4039 = vld [vmem:[%s4032 + $0x18] sm:$0xf]
        %v4040 = vld [vmem:[%s4032 + $0x1c] sm:$0xf]
        %v4049 = vunpack.c.l.b16 %v4033
        %v4050 = vunpack.c.l.b16 %v4034
        %v4051 = vunpack.c.l.b16 %v4035
        %v4052 = vunpack.c.l.b16 %v4036
        %v4053 = vunpack.c.l.b16 %v4037
        %v4054 = vunpack.c.l.b16 %v4038
        %v4055 = vunpack.c.l.b16 %v4039
        %v4056 = vunpack.c.l.b16 %v4040
        %v4057 = vpack.c.b16 %v4050, %v4049
        %v4058 = vpack.c.b16 %v4052, %v4051
        %v4059 = vpack.c.b16 %v4054, %v4053
        %v4060 = vpack.c.b16 %v4056, %v4055
        %v4066 = vsel %vm3528, %v4028, 0
        %v4069 = vsel %vm3528, %v4029, 0
        %v4072 = vsel %vm3528, %v4030, 0
        %v4075 = vsel %vm3528, %v4031, 0
        %4077 = vmatprep.subr.bf16.mxu0 0
        %4078 = vmatpush1.bf16.msra.mxu0 %v4057
        %4079 = vmatprep.subr.bf16.mxu0 0
        %4080 = vmatpush1.bf16.msra.mxu0 %v4058
        %4081 = vmatprep.subr.bf16.mxu0 0
        %4082 = vmatpush1.bf16.msra.mxu0 %v4059
        %4083 = vmatprep.subr.bf16.mxu0 0
        %4084 = vmatpush1.bf16.msra.mxu0 %v4060
        %4085 = vmatprep.subr.bf16.mxu0 0
        %4086 = vmatpush1.bf16.msra.mxu0 0
        %4087 = vmatprep.subr.bf16.mxu0 0
        %4088 = vmatpush1.bf16.msra.mxu0 0
        %4089 = vmatprep.subr.bf16.mxu0 0
        %4090 = vmatpush1.bf16.msra.mxu0 0
        %4091 = vmatprep.subr.bf16.mxu0 0
        %4092 = vmatpush1.bf16.msra.mxu0 0
        %4093 = vmatprep.subr.bf16.mxu0 0
        %4094 = vmatpush1.bf16.msra.mxu0 0
        %4095 = vmatprep.subr.bf16.mxu0 0
        %4096 = vmatpush1.bf16.msra.mxu0 0
        %4097 = vmatprep.subr.bf16.mxu0 0
        %4098 = vmatpush1.bf16.msra.mxu0 0
        %4099 = vmatprep.subr.bf16.mxu0 0
        %4100 = vmatpush1.bf16.msra.mxu0 0
        %4101 = vmatprep.subr.bf16.mxu0 0
        %4102 = vmatpush1.bf16.msra.mxu0 0
        %4103 = vmatprep.subr.bf16.mxu0 0
        %4104 = vmatpush1.bf16.msra.mxu0 0
        %4105 = vmatprep.subr.bf16.mxu0 0
        %4106 = vmatpush1.bf16.msra.mxu0 0
        %4107 = vmatprep.subr.bf16.mxu0 0
        %4108 = vmatpush1.bf16.msra.mxu0 0
        %4109 = vmatprep.mubr.bf16.mxu0 0
        %4110 = vmatmul.mubr.bf16.gmra.mrb[0].mxu0 %v4066
        %v4111 = vpop.f32.mrb[0].mxu0
        %v4112 = vadd.f32 0.0, %v4111
        %v4113 = vpop.f32.mrb[0].mxu0
        %v4114 = vpop.f32.mrb[0].mxu0
        %v4115 = vadd.f32 0.0, %v4114
        %v4116 = vpop.f32.mrb[0].mxu0
        %4117 = vmatprep.mubr.bf16.mxu0 0
        %4118 = vmatmul.mubr.bf16.gmra.mrb[0].mxu0 %v4069
        %v4119 = vpop.f32.mrb[0].mxu0
        %v4120 = vadd.f32 0.0, %v4119
        %v4121 = vpop.f32.mrb[0].mxu0
        %v4122 = vpop.f32.mrb[0].mxu0
        %v4123 = vadd.f32 0.0, %v4122
        %v4124 = vpop.f32.mrb[0].mxu0
        %4125 = vmatprep.mubr.bf16.mxu0 0
        %4126 = vmatmul.mubr.bf16.gmra.mrb[0].mxu0 %v4072
        %v4127 = vpop.f32.mrb[0].mxu0
        %v4128 = vadd.f32 0.0, %v4127
        %v4129 = vpop.f32.mrb[0].mxu0
        %v4130 = vpop.f32.mrb[0].mxu0
        %v4131 = vadd.f32 0.0, %v4130
        %v4132 = vpop.f32.mrb[0].mxu0
        %4133 = vmatprep.mubr.bf16.mxu0 0
        %4134 = vmatmul.mubr.bf16.gmra.mrb[0].mxu0 %v4075
        %v4135 = vpop.f32.mrb[0].mxu0
        %v4136 = vadd.f32 0.0, %v4135
        %v4137 = vpop.f32.mrb[0].mxu0
        %v4138 = vpop.f32.mrb[0].mxu0
        %v4139 = vadd.f32 0.0, %v4138
        %v4140 = vpop.f32.mrb[0].mxu0
        %4141 = vdwg.mxu0
        %v4142 = vadd.f32 %v4005, %v4112
        %v4143 = vadd.f32 %v4006, %v4115
        %v4144 = vadd.f32 %v4007, %v4120
        %v4145 = vadd.f32 %v4008, %v4123
        %v4146 = vadd.f32 %v4009, %v4128
        %v4147 = vadd.f32 %v4010, %v4131
        %v4148 = vadd.f32 %v4011, %v4136
        %v4149 = vadd.f32 %v4012, %v4139
        %s4150 = scalar_lea.vmem %s3584, 1 [#allocation3]
        %v4151 = vld [vmem:[%s4150] ss:$2 sm:$0xff]
        %s4152 = scalar_lea.vmem %s3584, 49 [#allocation3]
        %v4153 = vld [vmem:[%s4152] ss:$2 sm:$0xff]
        %s4154 = scalar_lea.vmem %s3584, 97 [#allocation3]
        %v4155 = vld [vmem:[%s4154] ss:$2 sm:$0xff]
        %s4156 = scalar_lea.vmem %s3584, 145 [#allocation3]
        %v4157 = vld [vmem:[%s4156] ss:$2 sm:$0xff]
        %s4158 = scalar_lea.vmem %s3584, 193 [#allocation3]
        %v4159 = vld [vmem:[%s4158] ss:$2 sm:$0xff]
        %s4160 = scalar_lea.vmem %s3584, 241 [#allocation3]
        %v4161 = vld [vmem:[%s4160] ss:$2 sm:$0xff]
        %s4162 = scalar_lea.vmem %s3584, 289 [#allocation3]
        %v4163 = vld [vmem:[%s4162] ss:$2 sm:$0xff]
        %s4164 = scalar_lea.vmem %s3584, 337 [#allocation3]
        %v4165 = vld [vmem:[%s4164] ss:$2 sm:$0xff]
        %v4166 = vpack.c.bf16 %v4153, %v4151
        %v4167 = vpack.c.bf16 %v4157, %v4155
        %v4168 = vpack.c.bf16 %v4161, %v4159
        %v4169 = vpack.c.bf16 %v4165, %v4163
        %s4170 = scalar_lea.vmem %s6, 128
        %v4171 = vld [vmem:[%s4170] sm:$0xf]
        %v4172 = vld [vmem:[%s4170 + $0x4] sm:$0xf]
        %v4173 = vld [vmem:[%s4170 + $0x8] sm:$0xf]
        %v4174 = vld [vmem:[%s4170 + $0xc] sm:$0xf]
        %v4175 = vld [vmem:[%s4170 + $0x10] sm:$0xf]
        %v4176 = vld [vmem:[%s4170 + $0x14] sm:$0xf]
        %v4177 = vld [vmem:[%s4170 + $0x18] sm:$0xf]
        %v4178 = vld [vmem:[%s4170 + $0x1c] sm:$0xf]
        %v4187 = vunpack.c.l.b16 %v4171
        %v4188 = vunpack.c.l.b16 %v4172
        %v4189 = vunpack.c.l.b16 %v4173
        %v4190 = vunpack.c.l.b16 %v4174
        %v4191 = vunpack.c.l.b16 %v4175
        %v4192 = vunpack.c.l.b16 %v4176
        %v4193 = vunpack.c.l.b16 %v4177
        %v4194 = vunpack.c.l.b16 %v4178
        %v4195 = vpack.c.b16 %v4188, %v4187
        %v4196 = vpack.c.b16 %v4190, %v4189
        %v4197 = vpack.c.b16 %v4192, %v4191
        %v4198 = vpack.c.b16 %v4194, %v4193
        %v4204 = vsel %vm3528, %v4166, 0
        %v4207 = vsel %vm3528, %v4167, 0
        %v4210 = vsel %vm3528, %v4168, 0
        %v4213 = vsel %vm3528, %v4169, 0
        %4215 = vmatprep.subr.bf16.mxu0 0
        %4216 = vmatpush1.bf16.msra.mxu0 %v4195
        %4217 = vmatprep.subr.bf16.mxu0 0
        %4218 = vmatpush1.bf16.msra.mxu0 %v4196
        %4219 = vmatprep.subr.bf16.mxu0 0
        %4220 = vmatpush1.bf16.msra.mxu0 %v4197
        %4221 = vmatprep.subr.bf16.mxu0 0
        %4222 = vmatpush1.bf16.msra.mxu0 %v4198
        %4223 = vmatprep.subr.bf16.mxu0 0
        %4224 = vmatpush1.bf16.msra.mxu0 0
        %4225 = vmatprep.subr.bf16.mxu0 0
        %4226 = vmatpush1.bf16.msra.mxu0 0
        %4227 = vmatprep.subr.bf16.mxu0 0
        %4228 = vmatpush1.bf16.msra.mxu0 0
        %4229 = vmatprep.subr.bf16.mxu0 0
        %4230 = vmatpush1.bf16.msra.mxu0 0
        %4231 = vmatprep.subr.bf16.mxu0 0
        %4232 = vmatpush1.bf16.msra.mxu0 0
        %4233 = vmatprep.subr.bf16.mxu0 0
        %4234 = vmatpush1.bf16.msra.mxu0 0
        %4235 = vmatprep.subr.bf16.mxu0 0
        %4236 = vmatpush1.bf16.msra.mxu0 0
        %4237 = vmatprep.subr.bf16.mxu0 0
        %4238 = vmatpush1.bf16.msra.mxu0 0
        %4239 = vmatprep.subr.bf16.mxu0 0
        %4240 = vmatpush1.bf16.msra.mxu0 0
        %4241 = vmatprep.subr.bf16.mxu0 0
        %4242 = vmatpush1.bf16.msra.mxu0 0
        %4243 = vmatprep.subr.bf16.mxu0 0
        %4244 = vmatpush1.bf16.msra.mxu0 0
        %4245 = vmatprep.subr.bf16.mxu0 0
        %4246 = vmatpush1.bf16.msra.mxu0 0
        %4247 = vmatprep.mubr.bf16.mxu0 0
        %4248 = vmatmul.mubr.bf16.gmra.mrb[0].mxu0 %v4204
        %v4249 = vpop.f32.mrb[0].mxu0
        %v4250 = vadd.f32 0.0, %v4249
        %v4251 = vpop.f32.mrb[0].mxu0
        %v4252 = vpop.f32.mrb[0].mxu0
        %v4253 = vadd.f32 0.0, %v4252
        %v4254 = vpop.f32.mrb[0].mxu0
        %4255 = vmatprep.mubr.bf16.mxu0 0
        %4256 = vmatmul.mubr.bf16.gmra.mrb[0].mxu0 %v4207
        %v4257 = vpop.f32.mrb[0].mxu0
        %v4258 = vadd.f32 0.0, %v4257
        %v4259 = vpop.f32.mrb[0].mxu0
        %v4260 = vpop.f32.mrb[0].mxu0
        %v4261 = vadd.f32 0.0, %v4260
        %v4262 = vpop.f32.mrb[0].mxu0
        %4263 = vmatprep.mubr.bf16.mxu0 0
        %4264 = vmatmul.mubr.bf16.gmra.mrb[0].mxu0 %v4210
        %v4265 = vpop.f32.mrb[0].mxu0
        %v4266 = vadd.f32 0.0, %v4265
        %v4267 = vpop.f32.mrb[0].mxu0
        %v4268 = vpop.f32.mrb[0].mxu0
        %v4269 = vadd.f32 0.0, %v4268
        %v4270 = vpop.f32.mrb[0].mxu0
        %4271 = vmatprep.mubr.bf16.mxu0 0
        %4272 = vmatmul.mubr.bf16.gmra.mrb[0].mxu0 %v4213
        %v4273 = vpop.f32.mrb[0].mxu0
        %v4274 = vadd.f32 0.0, %v4273
        %v4275 = vpop.f32.mrb[0].mxu0
        %v4276 = vpop.f32.mrb[0].mxu0
        %v4277 = vadd.f32 0.0, %v4276
        %v4278 = vpop.f32.mrb[0].mxu0
        %4279 = vdwg.mxu0
        %v4280 = vadd.f32 %v4142, %v4250
        %v4281 = vadd.f32 %v4143, %v4253
        %v4282 = vadd.f32 %v4144, %v4258
        %v4283 = vadd.f32 %v4145, %v4261
        %v4284 = vadd.f32 %v4146, %v4266
        %v4285 = vadd.f32 %v4147, %v4269
        %v4286 = vadd.f32 %v4148, %v4274
        %v4287 = vadd.f32 %v4149, %v4277
        %s4288 = scalar_lea.vmem %s3584, 2 [#allocation3]
        %v4289 = vld [vmem:[%s4288] ss:$2 sm:$0xff]
        %s4290 = scalar_lea.vmem %s3584, 50 [#allocation3]
        %v4291 = vld [vmem:[%s4290] ss:$2 sm:$0xff]
        %s4292 = scalar_lea.vmem %s3584, 98 [#allocation3]
        %v4293 = vld [vmem:[%s4292] ss:$2 sm:$0xff]
        %s4294 = scalar_lea.vmem %s3584, 146 [#allocation3]
        %v4295 = vld [vmem:[%s4294] ss:$2 sm:$0xff]
        %s4296 = scalar_lea.vmem %s3584, 194 [#allocation3]
        %v4297 = vld [vmem:[%s4296] ss:$2 sm:$0xff]
        %s4298 = scalar_lea.vmem %s3584, 242 [#allocation3]
        %v4299 = vld [vmem:[%s4298] ss:$2 sm:$0xff]
        %s4300 = scalar_lea.vmem %s3584, 290 [#allocation3]
        %v4301 = vld [vmem:[%s4300] ss:$2 sm:$0xff]
        %s4302 = scalar_lea.vmem %s3584, 338 [#allocation3]
        %v4303 = vld [vmem:[%s4302] ss:$2 sm:$0xff]
        %v4304 = vpack.c.bf16 %v4291, %v4289
        %v4305 = vpack.c.bf16 %v4295, %v4293
        %v4306 = vpack.c.bf16 %v4299, %v4297
        %v4307 = vpack.c.bf16 %v4303, %v4301
        %s4308 = scalar_lea.vmem %s6, 160
        %v4309 = vld [vmem:[%s4308] sm:$0xf]
        %v4310 = vld [vmem:[%s4308 + $0x4] sm:$0xf]
        %v4311 = vld [vmem:[%s4308 + $0x8] sm:$0xf]
        %v4312 = vld [vmem:[%s4308 + $0xc] sm:$0xf]
        %v4313 = vld [vmem:[%s4308 + $0x10] sm:$0xf]
        %v4314 = vld [vmem:[%s4308 + $0x14] sm:$0xf]
        %v4315 = vld [vmem:[%s4308 + $0x18] sm:$0xf]
        %v4316 = vld [vmem:[%s4308 + $0x1c] sm:$0xf]
        %v4325 = vunpack.c.l.b16 %v4309
        %v4326 = vunpack.c.l.b16 %v4310
        %v4327 = vunpack.c.l.b16 %v4311
        %v4328 = vunpack.c.l.b16 %v4312
        %v4329 = vunpack.c.l.b16 %v4313
        %v4330 = vunpack.c.l.b16 %v4314
        %v4331 = vunpack.c.l.b16 %v4315
        %v4332 = vunpack.c.l.b16 %v4316
        %v4333 = vpack.c.b16 %v4326, %v4325
        %v4334 = vpack.c.b16 %v4328, %v4327
        %v4335 = vpack.c.b16 %v4330, %v4329
        %v4336 = vpack.c.b16 %v4332, %v4331
        %v4342 = vsel %vm3528, %v4304, 0
        %v4345 = vsel %vm3528, %v4305, 0
        %v4348 = vsel %vm3528, %v4306, 0
        %v4351 = vsel %vm3528, %v4307, 0
        %4353 = vmatprep.subr.bf16.mxu0 0
        %4354 = vmatpush1.bf16.msra.mxu0 %v4333
        %4355 = vmatprep.subr.bf16.mxu0 0
        %4356 = vmatpush1.bf16.msra.mxu0 %v4334
        %4357 = vmatprep.subr.bf16.mxu0 0
        %4358 = vmatpush1.bf16.msra.mxu0 %v4335
        %4359 = vmatprep.subr.bf16.mxu0 0
        %4360 = vmatpush1.bf16.msra.mxu0 %v4336
        %4361 = vmatprep.subr.bf16.mxu0 0
        %4362 = vmatpush1.bf16.msra.mxu0 0
        %4363 = vmatprep.subr.bf16.mxu0 0
        %4364 = vmatpush1.bf16.msra.mxu0 0
        %4365 = vmatprep.subr.bf16.mxu0 0
        %4366 = vmatpush1.bf16.msra.mxu0 0
        %4367 = vmatprep.subr.bf16.mxu0 0
        %4368 = vmatpush1.bf16.msra.mxu0 0
        %4369 = vmatprep.subr.bf16.mxu0 0
        %4370 = vmatpush1.bf16.msra.mxu0 0
        %4371 = vmatprep.subr.bf16.mxu0 0
        %4372 = vmatpush1.bf16.msra.mxu0 0
        %4373 = vmatprep.subr.bf16.mxu0 0
        %4374 = vmatpush1.bf16.msra.mxu0 0
        %4375 = vmatprep.subr.bf16.mxu0 0
        %4376 = vmatpush1.bf16.msra.mxu0 0
        %4377 = vmatprep.subr.bf16.mxu0 0
        %4378 = vmatpush1.bf16.msra.mxu0 0
        %4379 = vmatprep.subr.bf16.mxu0 0
        %4380 = vmatpush1.bf16.msra.mxu0 0
        %4381 = vmatprep.subr.bf16.mxu0 0
        %4382 = vmatpush1.bf16.msra.mxu0 0
        %4383 = vmatprep.subr.bf16.mxu0 0
        %4384 = vmatpush1.bf16.msra.mxu0 0
        %4385 = vmatprep.mubr.bf16.mxu0 0
        %4386 = vmatmul.mubr.bf16.gmra.mrb[0].mxu0 %v4342
        %v4387 = vpop.f32.mrb[0].mxu0
        %v4388 = vadd.f32 0.0, %v4387
        %v4389 = vpop.f32.mrb[0].mxu0
        %v4390 = vpop.f32.mrb[0].mxu0
        %v4391 = vadd.f32 0.0, %v4390
        %v4392 = vpop.f32.mrb[0].mxu0
        %4393 = vmatprep.mubr.bf16.mxu0 0
        %4394 = vmatmul.mubr.bf16.gmra.mrb[0].mxu0 %v4345
        %v4395 = vpop.f32.mrb[0].mxu0
        %v4396 = vadd.f32 0.0, %v4395
        %v4397 = vpop.f32.mrb[0].mxu0
        %v4398 = vpop.f32.mrb[0].mxu0
        %v4399 = vadd.f32 0.0, %v4398
        %v4400 = vpop.f32.mrb[0].mxu0
        %4401 = vmatprep.mubr.bf16.mxu0 0
        %4402 = vmatmul.mubr.bf16.gmra.mrb[0].mxu0 %v4348
        %v4403 = vpop.f32.mrb[0].mxu0
        %v4404 = vadd.f32 0.0, %v4403
        %v4405 = vpop.f32.mrb[0].mxu0
        %v4406 = vpop.f32.mrb[0].mxu0
        %v4407 = vadd.f32 0.0, %v4406
        %v4408 = vpop.f32.mrb[0].mxu0
        %4409 = vmatprep.mubr.bf16.mxu0 0
        %4410 = vmatmul.mubr.bf16.gmra.mrb[0].mxu0 %v4351
        %v4411 = vpop.f32.mrb[0].mxu0
        %v4412 = vadd.f32 0.0, %v4411
        %v4413 = vpop.f32.mrb[0].mxu0
        %v4414 = vpop.f32.mrb[0].mxu0
        %v4415 = vadd.f32 0.0, %v4414
        %v4416 = vpop.f32.mrb[0].mxu0
        %4417 = vdwg.mxu0
        %v4418 = vadd.f32 %v4280, %v4388
        %v4419 = vadd.f32 %v4281, %v4391
        %v4420 = vadd.f32 %v4282, %v4396
        %v4421 = vadd.f32 %v4283, %v4399
        %v4422 = vadd.f32 %v4284, %v4404
        %v4423 = vadd.f32 %v4285, %v4407
        %v4424 = vadd.f32 %v4286, %v4412
        %v4425 = vadd.f32 %v4287, %v4415
        %s4426 = scalar_lea.vmem [#allocation3], 48
        %v4427 = vld [vmem:[%s4426] ss:$2 sm:$0xff]
        %s4428 = scalar_lea.vmem %s4426, 48 [#allocation3]
        %v4429 = vld [vmem:[%s4428] ss:$2 sm:$0xff]
        %s4430 = scalar_lea.vmem %s4426, 96 [#allocation3]
        %v4431 = vld [vmem:[%s4430] ss:$2 sm:$0xff]
        %s4432 = scalar_lea.vmem %s4426, 144 [#allocation3]
        %v4433 = vld [vmem:[%s4432] ss:$2 sm:$0xff]
        %s4434 = scalar_lea.vmem %s4426, 192 [#allocation3]
        %v4435 = vld [vmem:[%s4434] ss:$2 sm:$0xff]
        %s4436 = scalar_lea.vmem %s4426, 240 [#allocation3]
        %v4437 = vld [vmem:[%s4436] ss:$2 sm:$0xff]
        %s4438 = scalar_lea.vmem %s4426, 288 [#allocation3]
        %v4439 = vld [vmem:[%s4438] ss:$2 sm:$0xff]
        %s4440 = scalar_lea.vmem %s4426, 336 [#allocation3]
        %v4441 = vld [vmem:[%s4440] ss:$2 sm:$0xff]
        %v4442 = vpack.c.bf16 %v4429, %v4427
        %v4443 = vpack.c.bf16 %v4433, %v4431
        %v4444 = vpack.c.bf16 %v4437, %v4435
        %v4445 = vpack.c.bf16 %v4441, %v4439
        %s4446 = scalar_lea.vmem %s6, 192
        %v4447 = vld [vmem:[%s4446] sm:$0xf]
        %v4448 = vld [vmem:[%s4446 + $0x4] sm:$0xf]
        %v4449 = vld [vmem:[%s4446 + $0x8] sm:$0xf]
        %v4450 = vld [vmem:[%s4446 + $0xc] sm:$0xf]
        %v4451 = vld [vmem:[%s4446 + $0x10] sm:$0xf]
        %v4452 = vld [vmem:[%s4446 + $0x14] sm:$0xf]
        %v4453 = vld [vmem:[%s4446 + $0x18] sm:$0xf]
        %v4454 = vld [vmem:[%s4446 + $0x1c] sm:$0xf]
        %v4463 = vunpack.c.l.b16 %v4447
        %v4464 = vunpack.c.l.b16 %v4448
        %v4465 = vunpack.c.l.b16 %v4449
        %v4466 = vunpack.c.l.b16 %v4450
        %v4467 = vunpack.c.l.b16 %v4451
        %v4468 = vunpack.c.l.b16 %v4452
        %v4469 = vunpack.c.l.b16 %v4453
        %v4470 = vunpack.c.l.b16 %v4454
        %v4471 = vpack.c.b16 %v4464, %v4463
        %v4472 = vpack.c.b16 %v4466, %v4465
        %v4473 = vpack.c.b16 %v4468, %v4467
        %v4474 = vpack.c.b16 %v4470, %v4469
        %v4480 = vsel %vm3528, %v4442, 0
        %v4483 = vsel %vm3528, %v4443, 0
        %v4486 = vsel %vm3528, %v4444, 0
        %v4489 = vsel %vm3528, %v4445, 0
        %4491 = vmatprep.subr.bf16.mxu0 0
        %4492 = vmatpush1.bf16.msra.mxu0 %v4471
        %4493 = vmatprep.subr.bf16.mxu0 0
        %4494 = vmatpush1.bf16.msra.mxu0 %v4472
        %4495 = vmatprep.subr.bf16.mxu0 0
        %4496 = vmatpush1.bf16.msra.mxu0 %v4473
        %4497 = vmatprep.subr.bf16.mxu0 0
        %4498 = vmatpush1.bf16.msra.mxu0 %v4474
        %4499 = vmatprep.subr.bf16.mxu0 0
        %4500 = vmatpush1.bf16.msra.mxu0 0
        %4501 = vmatprep.subr.bf16.mxu0 0
        %4502 = vmatpush1.bf16.msra.mxu0 0
        %4503 = vmatprep.subr.bf16.mxu0 0
        %4504 = vmatpush1.bf16.msra.mxu0 0
        %4505 = vmatprep.subr.bf16.mxu0 0
        %4506 = vmatpush1.bf16.msra.mxu0 0
        %4507 = vmatprep.subr.bf16.mxu0 0
        %4508 = vmatpush1.bf16.msra.mxu0 0
        %4509 = vmatprep.subr.bf16.mxu0 0
        %4510 = vmatpush1.bf16.msra.mxu0 0
        %4511 = vmatprep.subr.bf16.mxu0 0
        %4512 = vmatpush1.bf16.msra.mxu0 0
        %4513 = vmatprep.subr.bf16.mxu0 0
        %4514 = vmatpush1.bf16.msra.mxu0 0
        %4515 = vmatprep.subr.bf16.mxu0 0
        %4516 = vmatpush1.bf16.msra.mxu0 0
        %4517 = vmatprep.subr.bf16.mxu0 0
        %4518 = vmatpush1.bf16.msra.mxu0 0
        %4519 = vmatprep.subr.bf16.mxu0 0
        %4520 = vmatpush1.bf16.msra.mxu0 0
        %4521 = vmatprep.subr.bf16.mxu0 0
        %4522 = vmatpush1.bf16.msra.mxu0 0
        %4523 = vmatprep.mubr.bf16.mxu0 0
        %4524 = vmatmul.mubr.bf16.gmra.mrb[0].mxu0 %v4480
        %v4525 = vpop.f32.mrb[0].mxu0
        %v4526 = vadd.f32 0.0, %v4525
        %v4527 = vpop.f32.mrb[0].mxu0
        %v4528 = vpop.f32.mrb[0].mxu0
        %v4529 = vadd.f32 0.0, %v4528
        %v4530 = vpop.f32.mrb[0].mxu0
        %4531 = vmatprep.mubr.bf16.mxu0 0
        %4532 = vmatmul.mubr.bf16.gmra.mrb[0].mxu0 %v4483
        %v4533 = vpop.f32.mrb[0].mxu0
        %v4534 = vadd.f32 0.0, %v4533
        %v4535 = vpop.f32.mrb[0].mxu0
        %v4536 = vpop.f32.mrb[0].mxu0
        %v4537 = vadd.f32 0.0, %v4536
        %v4538 = vpop.f32.mrb[0].mxu0
        %4539 = vmatprep.mubr.bf16.mxu0 0
        %4540 = vmatmul.mubr.bf16.gmra.mrb[0].mxu0 %v4486
        %v4541 = vpop.f32.mrb[0].mxu0
        %v4542 = vadd.f32 0.0, %v4541
        %v4543 = vpop.f32.mrb[0].mxu0
        %v4544 = vpop.f32.mrb[0].mxu0
        %v4545 = vadd.f32 0.0, %v4544
        %v4546 = vpop.f32.mrb[0].mxu0
        %4547 = vmatprep.mubr.bf16.mxu0 0
        %4548 = vmatmul.mubr.bf16.gmra.mrb[0].mxu0 %v4489
        %v4549 = vpop.f32.mrb[0].mxu0
        %v4550 = vadd.f32 0.0, %v4549
        %v4551 = vpop.f32.mrb[0].mxu0
        %v4552 = vpop.f32.mrb[0].mxu0
        %v4553 = vadd.f32 0.0, %v4552
        %v4554 = vpop.f32.mrb[0].mxu0
        %4555 = vdwg.mxu0
        %v4556 = vadd.f32 %v4418, %v4526
        %v4557 = vadd.f32 %v4419, %v4529
        %v4558 = vadd.f32 %v4420, %v4534
        %v4559 = vadd.f32 %v4421, %v4537
        %v4560 = vadd.f32 %v4422, %v4542
        %v4561 = vadd.f32 %v4423, %v4545
        %v4562 = vadd.f32 %v4424, %v4550
        %v4563 = vadd.f32 %v4425, %v4553
        %s4564 = scalar_lea.vmem %s4426, 1 [#allocation3]
        %v4565 = vld [vmem:[%s4564] ss:$2 sm:$0xff]
        %s4566 = scalar_lea.vmem %s4426, 49 [#allocation3]
        %v4567 = vld [vmem:[%s4566] ss:$2 sm:$0xff]
        %s4568 = scalar_lea.vmem %s4426, 97 [#allocation3]
        %v4569 = vld [vmem:[%s4568] ss:$2 sm:$0xff]
        %s4570 = scalar_lea.vmem %s4426, 145 [#allocation3]
        %v4571 = vld [vmem:[%s4570] ss:$2 sm:$0xff]
        %s4572 = scalar_lea.vmem %s4426, 193 [#allocation3]
        %v4573 = vld [vmem:[%s4572] ss:$2 sm:$0xff]
        %s4574 = scalar_lea.vmem %s4426, 241 [#allocation3]
        %v4575 = vld [vmem:[%s4574] ss:$2 sm:$0xff]
        %s4576 = scalar_lea.vmem %s4426, 289 [#allocation3]
        %v4577 = vld [vmem:[%s4576] ss:$2 sm:$0xff]
        %s4578 = scalar_lea.vmem %s4426, 337 [#allocation3]
        %v4579 = vld [vmem:[%s4578] ss:$2 sm:$0xff]
        %v4580 = vpack.c.bf16 %v4567, %v4565
        %v4581 = vpack.c.bf16 %v4571, %v4569
        %v4582 = vpack.c.bf16 %v4575, %v4573
        %v4583 = vpack.c.bf16 %v4579, %v4577
        %s4584 = scalar_lea.vmem %s6, 224
        %v4585 = vld [vmem:[%s4584] sm:$0xf]
        %v4586 = vld [vmem:[%s4584 + $0x4] sm:$0xf]
        %v4587 = vld [vmem:[%s4584 + $0x8] sm:$0xf]
        %v4588 = vld [vmem:[%s4584 + $0xc] sm:$0xf]
        %v4589 = vld [vmem:[%s4584 + $0x10] sm:$0xf]
        %v4590 = vld [vmem:[%s4584 + $0x14] sm:$0xf]
        %v4591 = vld [vmem:[%s4584 + $0x18] sm:$0xf]
        %v4592 = vld [vmem:[%s4584 + $0x1c] sm:$0xf]
        %v4601 = vunpack.c.l.b16 %v4585
        %v4602 = vunpack.c.l.b16 %v4586
        %v4603 = vunpack.c.l.b16 %v4587
        %v4604 = vunpack.c.l.b16 %v4588
        %v4605 = vunpack.c.l.b16 %v4589
        %v4606 = vunpack.c.l.b16 %v4590
        %v4607 = vunpack.c.l.b16 %v4591
        %v4608 = vunpack.c.l.b16 %v4592
        %v4609 = vpack.c.b16 %v4602, %v4601
        %v4610 = vpack.c.b16 %v4604, %v4603
        %v4611 = vpack.c.b16 %v4606, %v4605
        %v4612 = vpack.c.b16 %v4608, %v4607
        %v4618 = vsel %vm3528, %v4580, 0
        %v4621 = vsel %vm3528, %v4581, 0
        %v4624 = vsel %vm3528, %v4582, 0
        %v4627 = vsel %vm3528, %v4583, 0
        %4629 = vmatprep.subr.bf16.mxu0 0
        %4630 = vmatpush1.bf16.msra.mxu0 %v4609
        %4631 = vmatprep.subr.bf16.mxu0 0
        %4632 = vmatpush1.bf16.msra.mxu0 %v4610
        %4633 = vmatprep.subr.bf16.mxu0 0
        %4634 = vmatpush1.bf16.msra.mxu0 %v4611
        %4635 = vmatprep.subr.bf16.mxu0 0
        %4636 = vmatpush1.bf16.msra.mxu0 %v4612
        %4637 = vmatprep.subr.bf16.mxu0 0
        %4638 = vmatpush1.bf16.msra.mxu0 0
        %4639 = vmatprep.subr.bf16.mxu0 0
        %4640 = vmatpush1.bf16.msra.mxu0 0
        %4641 = vmatprep.subr.bf16.mxu0 0
        %4642 = vmatpush1.bf16.msra.mxu0 0
        %4643 = vmatprep.subr.bf16.mxu0 0
        %4644 = vmatpush1.bf16.msra.mxu0 0
        %4645 = vmatprep.subr.bf16.mxu0 0
        %4646 = vmatpush1.bf16.msra.mxu0 0
        %4647 = vmatprep.subr.bf16.mxu0 0
        %4648 = vmatpush1.bf16.msra.mxu0 0
        %4649 = vmatprep.subr.bf16.mxu0 0
        %4650 = vmatpush1.bf16.msra.mxu0 0
        %4651 = vmatprep.subr.bf16.mxu0 0
        %4652 = vmatpush1.bf16.msra.mxu0 0
        %4653 = vmatprep.subr.bf16.mxu0 0
        %4654 = vmatpush1.bf16.msra.mxu0 0
        %4655 = vmatprep.subr.bf16.mxu0 0
        %4656 = vmatpush1.bf16.msra.mxu0 0
        %4657 = vmatprep.subr.bf16.mxu0 0
        %4658 = vmatpush1.bf16.msra.mxu0 0
        %4659 = vmatprep.subr.bf16.mxu0 0
        %4660 = vmatpush1.bf16.msra.mxu0 0
        %4661 = vmatprep.mubr.bf16.mxu0 0
        %4662 = vmatmul.mubr.bf16.gmra.mrb[0].mxu0 %v4618
        %v4663 = vpop.f32.mrb[0].mxu0
        %v4664 = vadd.f32 0.0, %v4663
        %v4665 = vpop.f32.mrb[0].mxu0
        %v4666 = vpop.f32.mrb[0].mxu0
        %v4667 = vadd.f32 0.0, %v4666
        %v4668 = vpop.f32.mrb[0].mxu0
        %4669 = vmatprep.mubr.bf16.mxu0 0
        %4670 = vmatmul.mubr.bf16.gmra.mrb[0].mxu0 %v4621
        %v4671 = vpop.f32.mrb[0].mxu0
        %v4672 = vadd.f32 0.0, %v4671
        %v4673 = vpop.f32.mrb[0].mxu0
        %v4674 = vpop.f32.mrb[0].mxu0
        %v4675 = vadd.f32 0.0, %v4674
        %v4676 = vpop.f32.mrb[0].mxu0
        %4677 = vmatprep.mubr.bf16.mxu0 0
        %4678 = vmatmul.mubr.bf16.gmra.mrb[0].mxu0 %v4624
        %v4679 = vpop.f32.mrb[0].mxu0
        %v4680 = vadd.f32 0.0, %v4679
        %v4681 = vpop.f32.mrb[0].mxu0
        %v4682 = vpop.f32.mrb[0].mxu0
        %v4683 = vadd.f32 0.0, %v4682
        %v4684 = vpop.f32.mrb[0].mxu0
        %4685 = vmatprep.mubr.bf16.mxu0 0
        %4686 = vmatmul.mubr.bf16.gmra.mrb[0].mxu0 %v4627
        %v4687 = vpop.f32.mrb[0].mxu0
        %v4688 = vadd.f32 0.0, %v4687
        %v4689 = vpop.f32.mrb[0].mxu0
        %v4690 = vpop.f32.mrb[0].mxu0
        %v4691 = vadd.f32 0.0, %v4690
        %v4692 = vpop.f32.mrb[0].mxu0
        %4693 = vdwg.mxu0
        %v4694 = vadd.f32 %v4556, %v4664
        %v4695 = vadd.f32 %v4557, %v4667
        %v4696 = vadd.f32 %v4558, %v4672
        %v4697 = vadd.f32 %v4559, %v4675
        %v4698 = vadd.f32 %v4560, %v4680
        %v4699 = vadd.f32 %v4561, %v4683
        %v4700 = vadd.f32 %v4562, %v4688
        %v4701 = vadd.f32 %v4563, %v4691
        %s4702 = scalar_lea.vmem %s4426, 2 [#allocation3]
        %v4703 = vld [vmem:[%s4702] ss:$2 sm:$0xff]
        %s4704 = scalar_lea.vmem %s4426, 50 [#allocation3]
        %v4705 = vld [vmem:[%s4704] ss:$2 sm:$0xff]
        %s4706 = scalar_lea.vmem %s4426, 98 [#allocation3]
        %v4707 = vld [vmem:[%s4706] ss:$2 sm:$0xff]
        %s4708 = scalar_lea.vmem %s4426, 146 [#allocation3]
        %v4709 = vld [vmem:[%s4708] ss:$2 sm:$0xff]
        %s4710 = scalar_lea.vmem %s4426, 194 [#allocation3]
        %v4711 = vld [vmem:[%s4710] ss:$2 sm:$0xff]
        %s4712 = scalar_lea.vmem %s4426, 242 [#allocation3]
        %v4713 = vld [vmem:[%s4712] ss:$2 sm:$0xff]
        %s4714 = scalar_lea.vmem %s4426, 290 [#allocation3]
        %v4715 = vld [vmem:[%s4714] ss:$2 sm:$0xff]
        %s4716 = scalar_lea.vmem %s4426, 338 [#allocation3]
        %v4717 = vld [vmem:[%s4716] ss:$2 sm:$0xff]
        %v4718 = vpack.c.bf16 %v4705, %v4703
        %v4719 = vpack.c.bf16 %v4709, %v4707
        %v4720 = vpack.c.bf16 %v4713, %v4711
        %v4721 = vpack.c.bf16 %v4717, %v4715
        %s4722 = scalar_lea.vmem %s6, 256
        %v4723 = vld [vmem:[%s4722] sm:$0xf]
        %v4724 = vld [vmem:[%s4722 + $0x4] sm:$0xf]
        %v4725 = vld [vmem:[%s4722 + $0x8] sm:$0xf]
        %v4726 = vld [vmem:[%s4722 + $0xc] sm:$0xf]
        %v4727 = vld [vmem:[%s4722 + $0x10] sm:$0xf]
        %v4728 = vld [vmem:[%s4722 + $0x14] sm:$0xf]
        %v4729 = vld [vmem:[%s4722 + $0x18] sm:$0xf]
        %v4730 = vld [vmem:[%s4722 + $0x1c] sm:$0xf]
        %v4739 = vunpack.c.l.b16 %v4723
        %v4740 = vunpack.c.l.b16 %v4724
        %v4741 = vunpack.c.l.b16 %v4725
        %v4742 = vunpack.c.l.b16 %v4726
        %v4743 = vunpack.c.l.b16 %v4727
        %v4744 = vunpack.c.l.b16 %v4728
        %v4745 = vunpack.c.l.b16 %v4729
        %v4746 = vunpack.c.l.b16 %v4730
        %v4747 = vpack.c.b16 %v4740, %v4739
        %v4748 = vpack.c.b16 %v4742, %v4741
        %v4749 = vpack.c.b16 %v4744, %v4743
        %v4750 = vpack.c.b16 %v4746, %v4745
        %v4756 = vsel %vm3528, %v4718, 0
        %v4759 = vsel %vm3528, %v4719, 0
        %v4762 = vsel %vm3528, %v4720, 0
        %v4765 = vsel %vm3528, %v4721, 0
        %4767 = vmatprep.subr.bf16.mxu0 0
        %4768 = vmatpush1.bf16.msra.mxu0 %v4747
        %4769 = vmatprep.subr.bf16.mxu0 0
        %4770 = vmatpush1.bf16.msra.mxu0 %v4748
        %4771 = vmatprep.subr.bf16.mxu0 0
        %4772 = vmatpush1.bf16.msra.mxu0 %v4749
        %4773 = vmatprep.subr.bf16.mxu0 0
        %4774 = vmatpush1.bf16.msra.mxu0 %v4750
        %4775 = vmatprep.subr.bf16.mxu0 0
        %4776 = vmatpush1.bf16.msra.mxu0 0
        %4777 = vmatprep.subr.bf16.mxu0 0
        %4778 = vmatpush1.bf16.msra.mxu0 0
        %4779 = vmatprep.subr.bf16.mxu0 0
        %4780 = vmatpush1.bf16.msra.mxu0 0
        %4781 = vmatprep.subr.bf16.mxu0 0
        %4782 = vmatpush1.bf16.msra.mxu0 0
        %4783 = vmatprep.subr.bf16.mxu0 0
        %4784 = vmatpush1.bf16.msra.mxu0 0
        %4785 = vmatprep.subr.bf16.mxu0 0
        %4786 = vmatpush1.bf16.msra.mxu0 0
        %4787 = vmatprep.subr.bf16.mxu0 0
        %4788 = vmatpush1.bf16.msra.mxu0 0
        %4789 = vmatprep.subr.bf16.mxu0 0
        %4790 = vmatpush1.bf16.msra.mxu0 0
        %4791 = vmatprep.subr.bf16.mxu0 0
        %4792 = vmatpush1.bf16.msra.mxu0 0
        %4793 = vmatprep.subr.bf16.mxu0 0
        %4794 = vmatpush1.bf16.msra.mxu0 0
        %4795 = vmatprep.subr.bf16.mxu0 0
        %4796 = vmatpush1.bf16.msra.mxu0 0
        %4797 = vmatprep.subr.bf16.mxu0 0
        %4798 = vmatpush1.bf16.msra.mxu0 0
        %4799 = vmatprep.mubr.bf16.mxu0 0
        %4800 = vmatmul.mubr.bf16.gmra.mrb[0].mxu0 %v4756
        %v4801 = vpop.f32.mrb[0].mxu0
        %v4802 = vadd.f32 0.0, %v4801
        %v4803 = vpop.f32.mrb[0].mxu0
        %v4804 = vpop.f32.mrb[0].mxu0
        %v4805 = vadd.f32 0.0, %v4804
        %v4806 = vpop.f32.mrb[0].mxu0
        %4807 = vmatprep.mubr.bf16.mxu0 0
        %4808 = vmatmul.mubr.bf16.gmra.mrb[0].mxu0 %v4759
        %v4809 = vpop.f32.mrb[0].mxu0
        %v4810 = vadd.f32 0.0, %v4809
        %v4811 = vpop.f32.mrb[0].mxu0
        %v4812 = vpop.f32.mrb[0].mxu0
        %v4813 = vadd.f32 0.0, %v4812
        %v4814 = vpop.f32.mrb[0].mxu0
        %4815 = vmatprep.mubr.bf16.mxu0 0
        %4816 = vmatmul.mubr.bf16.gmra.mrb[0].mxu0 %v4762
        %v4817 = vpop.f32.mrb[0].mxu0
        %v4818 = vadd.f32 0.0, %v4817
        %v4819 = vpop.f32.mrb[0].mxu0
        %v4820 = vpop.f32.mrb[0].mxu0
        %v4821 = vadd.f32 0.0, %v4820
        %v4822 = vpop.f32.mrb[0].mxu0
        %4823 = vmatprep.mubr.bf16.mxu0 0
        %4824 = vmatmul.mubr.bf16.gmra.mrb[0].mxu0 %v4765
        %v4825 = vpop.f32.mrb[0].mxu0
        %v4826 = vadd.f32 0.0, %v4825
        %v4827 = vpop.f32.mrb[0].mxu0
        %v4828 = vpop.f32.mrb[0].mxu0
        %v4829 = vadd.f32 0.0, %v4828
        %v4830 = vpop.f32.mrb[0].mxu0
        %4831 = vdwg.mxu0
        %v4832 = vadd.f32 %v4694, %v4802
        %v4833 = vadd.f32 %v4695, %v4805
        %v4834 = vadd.f32 %v4696, %v4810
        %v4835 = vadd.f32 %v4697, %v4813
        %v4836 = vadd.f32 %v4698, %v4818
        %v4837 = vadd.f32 %v4699, %v4821
        %v4838 = vadd.f32 %v4700, %v4826
        %v4839 = vadd.f32 %v4701, %v4829
        %v4840 = vld [vmem:[%s7] sm:$0x1]
        %v4842 = vlaneseq
        %v4843 = vshrl.u32 %v4842, 7
        %v4844 = vsub.s32 0, %v4843
        %v4845 = vrot.slane %v4840, %v4844
        %v4847 = vmul.f32 %v4832, %v4845
        %v4848 = vmul.f32 %v4833, %v4845
        %v4849 = vmul.f32 %v4834, %v4845
        %v4850 = vmul.f32 %v4835, %v4845
        %v4851 = vmul.f32 %v4836, %v4845
        %v4852 = vmul.f32 %v4837, %v4845
        %v4853 = vmul.f32 %v4838, %v4845
        %v4854 = vmul.f32 %v4839, %v4845
        %v4855 = vld [vmem:[%s8] sm:$0x1]
        %v4857 = vlaneseq
        %v4858 = vshrl.u32 %v4857, 7
        %v4859 = vsub.s32 0, %v4858
        %v4860 = vrot.slane %v4855, %v4859
        %v4862 = vadd.f32 %v4847, %v4860
        %v4863 = vadd.f32 %v4848, %v4860
        %v4864 = vadd.f32 %v4849, %v4860
        %v4865 = vadd.f32 %v4850, %v4860
        %v4866 = vadd.f32 %v4851, %v4860
        %v4867 = vadd.f32 %v4852, %v4860
        %v4868 = vadd.f32 %v4853, %v4860
        %v4869 = vadd.f32 %v4854, %v4860
        %v4870 = vsel %vm3528, %v4862, 0.0
        %v4871 = vsel %vm3528, %v4863, 0.0
        %v4872 = vadd.f32 %v4870, %v4871
        %v4873 = vsel %vm3528, %v4864, 0.0
        %v4874 = vadd.f32 %v4872, %v4873
        %v4875 = vsel %vm3528, %v4865, 0.0
        %v4876 = vadd.f32 %v4874, %v4875
        %v4877 = vsel %vm3528, %v4866, 0.0
        %v4878 = vadd.f32 %v4876, %v4877
        %v4879 = vsel %vm3528, %v4867, 0.0
        %v4880 = vadd.f32 %v4878, %v4879
        %v4881 = vsel %vm3528, %v4868, 0.0
        %v4882 = vadd.f32 %v4880, %v4881
        %v4883 = vsel %vm3528, %v4869, 0.0
        %v4884 = vadd.f32 %v4882, %v4883
        %v4885 = vrot.slane %v4884, 4
        %v4886 = vadd.f32 %v4884, %v4885
        %v4887 = vrot.slane %v4886, 2
        %v4888 = vadd.f32 %v4886, %v4887
        %v4889 = vrot.slane %v4888, 1
        %v4890 = vadd.f32 %v4888, %v4889
        %v4891 = vrcp.pop 64.0
        %v4892 = vmul.f32 %v4890, %v4891
        %v4893 = vld [vmem:[#allocation9] sm:$0xff]
        %v4894 = vld [vmem:[#allocation9 + $0x8] sm:$0xff]
        %v4895 = vld [vmem:[#allocation9 + $0x10] sm:$0xff]
        %v4896 = vld [vmem:[#allocation9 + $0x18] sm:$0xff]
        %v4897 = vld [vmem:[#allocation9 + $0x20] sm:$0xff]
        %v4898 = vld [vmem:[#allocation9 + $0x28] sm:$0xff]
        %v4899 = vld [vmem:[#allocation9 + $0x30] sm:$0xff]
        %v4900 = vld [vmem:[#allocation9 + $0x38] sm:$0xff]
        %v4902 = vsel %vm3528, %v4892, 0
        %4904 = vmatprep.subr.mxu0 0.0
        %4905 = vmatpush1.msra.mxu0 %v4893
        %4906 = vmatprep.subr.mxu0 0.0
        %4907 = vmatpush1.msra.mxu0 %v4894
        %4908 = vmatprep.subr.mxu0 0.0
        %4909 = vmatpush1.msra.mxu0 %v4895
        %4910 = vmatprep.subr.mxu0 0.0
        %4911 = vmatpush1.msra.mxu0 %v4896
        %4912 = vmatprep.subr.mxu0 0.0
        %4913 = vmatpush1.msra.mxu0 %v4897
        %4914 = vmatprep.subr.mxu0 0.0
        %4915 = vmatpush1.msra.mxu0 %v4898
        %4916 = vmatprep.subr.mxu0 0.0
        %4917 = vmatpush1.msra.mxu0 %v4899
        %4918 = vmatprep.subr.mxu0 0.0
        %4919 = vmatpush1.msra.mxu0 %v4900
        %4920 = vmatprep.subr.mxu0 0.0
        %4921 = vmatpush1.msra.mxu0 0.0
        %4922 = vmatprep.subr.mxu0 0.0
        %4923 = vmatpush1.msra.mxu0 0.0
        %4924 = vmatprep.subr.mxu0 0.0
        %4925 = vmatpush1.msra.mxu0 0.0
        %4926 = vmatprep.subr.mxu0 0.0
        %4927 = vmatpush1.msra.mxu0 0.0
        %4928 = vmatprep.subr.mxu0 0.0
        %4929 = vmatpush1.msra.mxu0 0.0
        %4930 = vmatprep.subr.mxu0 0.0
        %4931 = vmatpush1.msra.mxu0 0.0
        %4932 = vmatprep.subr.mxu0 0.0
        %4933 = vmatpush1.msra.mxu0 0.0
        %4934 = vmatprep.subr.mxu0 0.0
        %4935 = vmatpush1.msra.mxu0 0.0
        %4936 = vmatprep.subr.mxu0 0.0
        %4937 = vmatpush1.msra.mxu0 0.0
        %4938 = vmatprep.subr.mxu0 0.0
        %4939 = vmatpush1.msra.mxu0 0.0
        %4940 = vmatprep.subr.mxu0 0.0
        %4941 = vmatpush1.msra.mxu0 0.0
        %4942 = vmatprep.subr.mxu0 0.0
        %4943 = vmatpush1.msra.mxu0 0.0
        %4944 = vmatprep.subr.mxu0 0.0
        %4945 = vmatpush1.msra.mxu0 0.0
        %4946 = vmatprep.subr.mxu0 0.0
        %4947 = vmatpush1.msra.mxu0 0.0
        %4948 = vmatprep.subr.mxu0 0.0
        %4949 = vmatpush1.msra.mxu0 0.0
        %4950 = vmatprep.subr.mxu0 0.0
        %4951 = vmatpush1.msra.mxu0 0.0
        %4952 = vmatprep.subr.mxu0 0.0
        %4953 = vmatpush1.msra.mxu0 0.0
        %4954 = vmatprep.subr.mxu0 0.0
        %4955 = vmatpush1.msra.mxu0 0.0
        %4956 = vmatprep.subr.mxu0 0.0
        %4957 = vmatpush1.msra.mxu0 0.0
        %4958 = vmatprep.subr.mxu0 0.0
        %4959 = vmatpush1.msra.mxu0 0.0
        %4960 = vmatprep.subr.mxu0 0.0
        %4961 = vmatpush1.msra.mxu0 0.0
        %4962 = vmatprep.subr.mxu0 0.0
        %4963 = vmatpush1.msra.mxu0 0.0
        %4964 = vmatprep.subr.mxu0 0.0
        %4965 = vmatpush1.msra.mxu0 0.0
        %4966 = vmatprep.subr.mxu0 0.0
        %4967 = vmatpush1.msra.mxu0 0.0
        %4968 = vmatprep.mubr.f32.mxu0 0.0
        %4969 = vmatmul.mubr.f32.gmra.mrb[0].mxu0 %v4902
        %v4970 = vpop.f32.mrb[0].mxu0
        %v4971 = vadd.f32 0.0, %v4970
        %v4972 = vpop.f32.mrb[0].mxu0
        %4973 = vdwg.mxu0
        %v4974 = vmax.f32 %v4971, 0.0
        %v4975 = vld [vmem:[%s10] sm:$0xf]
        %vm4976 = vcmask 31744
        %v4978 = vsel %vm4976, %v4974, 0
        %vm4980 = vcmask 1043456
        %v4982 = vsel %vm4980, %v4975, 0
        %4984 = vmatprep.subr.mxu0 0.0
        %4985 = vmatpush1.msra.mxu0 %v4982
        %4986 = vmatprep.subr.mxu0 0.0
        %4987 = vmatpush1.msra.mxu0 0.0
        %4988 = vmatprep.subr.mxu0 0.0
        %4989 = vmatpush1.msra.mxu0 0.0
        %4990 = vmatprep.subr.mxu0 0.0
        %4991 = vmatpush1.msra.mxu0 0.0
        %4992 = vmatprep.subr.mxu0 0.0
        %4993 = vmatpush1.msra.mxu0 0.0
        %4994 = vmatprep.subr.mxu0 0.0
        %4995 = vmatpush1.msra.mxu0 0.0
        %4996 = vmatprep.subr.mxu0 0.0
        %4997 = vmatpush1.msra.mxu0 0.0
        %4998 = vmatprep.subr.mxu0 0.0
        %4999 = vmatpush1.msra.mxu0 0.0
        %5000 = vmatprep.subr.mxu0 0.0
        %5001 = vmatpush1.msra.mxu0 0.0
        %5002 = vmatprep.subr.mxu0 0.0
        %5003 = vmatpush1.msra.mxu0 0.0
        %5004 = vmatprep.subr.mxu0 0.0
        %5005 = vmatpush1.msra.mxu0 0.0
        %5006 = vmatprep.subr.mxu0 0.0
        %5007 = vmatpush1.msra.mxu0 0.0
        %5008 = vmatprep.subr.mxu0 0.0
        %5009 = vmatpush1.msra.mxu0 0.0
        %5010 = vmatprep.subr.mxu0 0.0
        %5011 = vmatpush1.msra.mxu0 0.0
        %5012 = vmatprep.subr.mxu0 0.0
        %5013 = vmatpush1.msra.mxu0 0.0
        %5014 = vmatprep.subr.mxu0 0.0
        %5015 = vmatpush1.msra.mxu0 0.0
        %5016 = vmatprep.subr.mxu0 0.0
        %5017 = vmatpush1.msra.mxu0 0.0
        %5018 = vmatprep.subr.mxu0 0.0
        %5019 = vmatpush1.msra.mxu0 0.0
        %5020 = vmatprep.subr.mxu0 0.0
        %5021 = vmatpush1.msra.mxu0 0.0
        %5022 = vmatprep.subr.mxu0 0.0
        %5023 = vmatpush1.msra.mxu0 0.0
        %5024 = vmatprep.subr.mxu0 0.0
        %5025 = vmatpush1.msra.mxu0 0.0
        %5026 = vmatprep.subr.mxu0 0.0
        %5027 = vmatpush1.msra.mxu0 0.0
        %5028 = vmatprep.subr.mxu0 0.0
        %5029 = vmatpush1.msra.mxu0 0.0
        %5030 = vmatprep.subr.mxu0 0.0
        %5031 = vmatpush1.msra.mxu0 0.0
        %5032 = vmatprep.subr.mxu0 0.0
        %5033 = vmatpush1.msra.mxu0 0.0
        %5034 = vmatprep.subr.mxu0 0.0
        %5035 = vmatpush1.msra.mxu0 0.0
        %5036 = vmatprep.subr.mxu0 0.0
        %5037 = vmatpush1.msra.mxu0 0.0
        %5038 = vmatprep.subr.mxu0 0.0
        %5039 = vmatpush1.msra.mxu0 0.0
        %5040 = vmatprep.subr.mxu0 0.0
        %5041 = vmatpush1.msra.mxu0 0.0
        %5042 = vmatprep.subr.mxu0 0.0
        %5043 = vmatpush1.msra.mxu0 0.0
        %5044 = vmatprep.subr.mxu0 0.0
        %5045 = vmatpush1.msra.mxu0 0.0
        %5046 = vmatprep.subr.mxu0 0.0
        %5047 = vmatpush1.msra.mxu0 0.0
        %5048 = vmatprep.mubr.f32.mxu0 0.0
        %5049 = vmatmul.mubr.f32.gmra.mrb[0].mxu0 %v4978
        %v5050 = vpop.f32.mrb[0].mxu0
        %v5051 = vadd.f32 0.0, %v5050
        %v5052 = vpop.f32.mrb[0].mxu0
        %5053 = vdwg.mxu0
        %v5054 = vxor.u32 %v5051, 2147483648
        %v5055 = vmul.f32 %v5054, 1.442695
        %v5056 = vpow.pop %v5055
        %v5057 = vadd.f32 %v5056, 1.0
        %v5058 = vrcp.pop %v5057
        %v5059 = vmul.f32 1.0, %v5058
        %v5060 = vld [vmem:[%s534] sm:$0xff]
        %v5061 = vld [vmem:[%s534 + $0x8] sm:$0xff]
        %v5062 = vld [vmem:[%s534 + $0x10] sm:$0xff]
        %v5063 = vld [vmem:[%s534 + $0x18] sm:$0xff]
        %v5064 = vld [vmem:[%s534 + $0x20] sm:$0xff]
        %v5065 = vld [vmem:[%s534 + $0x28] sm:$0xff]
        %v5066 = vld [vmem:[%s534 + $0x30] sm:$0xff]
        %v5067 = vld [vmem:[%s534 + $0x38] sm:$0xff]
        %v5068 = vpack.c.bf16 %v5061, %v5060
        %v5069 = vpack.c.bf16 %v5063, %v5062
        %v5070 = vpack.c.bf16 %v5065, %v5064
        %v5071 = vpack.c.bf16 %v5067, %v5066
        %v5072 = vld [vmem:[%s11] sm:$0xf]
        %v5073 = vld [vmem:[%s11 + $0x4] sm:$0xf]
        %v5074 = vld [vmem:[%s11 + $0x8] sm:$0xf]
        %v5075 = vld [vmem:[%s11 + $0xc] sm:$0xf]
        %v5080 = vunpack.c.l.b16 %v5072
        %v5081 = vunpack.c.l.b16 %v5073
        %v5082 = vunpack.c.l.b16 %v5074
        %v5083 = vunpack.c.l.b16 %v5075
        %v5084 = vpack.c.b16 %v5081, %v5080
        %v5085 = vpack.c.b16 %v5083, %v5082
        %v5089 = vsel %vm536, %v5068, 0
        %v5092 = vsel %vm536, %v5069, 0
        %v5095 = vsel %vm536, %v5070, 0
        %v5098 = vsel %vm536, %v5071, 0
        %5100 = vmatprep.subr.bf16.mxu0 0
        %5101 = vmatpush1.bf16.msra.mxu0 %v5084
        %5102 = vmatprep.subr.bf16.mxu0 0
        %5103 = vmatpush1.bf16.msra.mxu0 %v5085
        %5104 = vmatprep.subr.bf16.mxu0 0
        %5105 = vmatpush1.bf16.msra.mxu0 0
        %5106 = vmatprep.subr.bf16.mxu0 0
        %5107 = vmatpush1.bf16.msra.mxu0 0
        %5108 = vmatprep.subr.bf16.mxu0 0
        %5109 = vmatpush1.bf16.msra.mxu0 0
        %5110 = vmatprep.subr.bf16.mxu0 0
        %5111 = vmatpush1.bf16.msra.mxu0 0
        %5112 = vmatprep.subr.bf16.mxu0 0
        %5113 = vmatpush1.bf16.msra.mxu0 0
        %5114 = vmatprep.subr.bf16.mxu0 0
        %5115 = vmatpush1.bf16.msra.mxu0 0
        %5116 = vmatprep.subr.bf16.mxu0 0
        %5117 = vmatpush1.bf16.msra.mxu0 0
        %5118 = vmatprep.subr.bf16.mxu0 0
        %5119 = vmatpush1.bf16.msra.mxu0 0
        %5120 = vmatprep.subr.bf16.mxu0 0
        %5121 = vmatpush1.bf16.msra.mxu0 0
        %5122 = vmatprep.subr.bf16.mxu0 0
        %5123 = vmatpush1.bf16.msra.mxu0 0
        %5124 = vmatprep.subr.bf16.mxu0 0
        %5125 = vmatpush1.bf16.msra.mxu0 0
        %5126 = vmatprep.subr.bf16.mxu0 0
        %5127 = vmatpush1.bf16.msra.mxu0 0
        %5128 = vmatprep.subr.bf16.mxu0 0
        %5129 = vmatpush1.bf16.msra.mxu0 0
        %5130 = vmatprep.subr.bf16.mxu0 0
        %5131 = vmatpush1.bf16.msra.mxu0 0
        %5132 = vmatprep.mubr.bf16.mxu0 0
        %5133 = vmatmul.mubr.bf16.gmra.mrb[0].mxu0 %v5089
        %v5134 = vpop.f32.mrb[0].mxu0
        %v5135 = vadd.f32 0.0, %v5134
        %v5136 = vpop.f32.mrb[0].mxu0
        %v5137 = vpop.f32.mrb[0].mxu0
        %v5138 = vadd.f32 0.0, %v5137
        %v5139 = vpop.f32.mrb[0].mxu0
        %5140 = vmatprep.mubr.bf16.mxu0 0
        %5141 = vmatmul.mubr.bf16.gmra.mrb[0].mxu0 %v5092
        %v5142 = vpop.f32.mrb[0].mxu0
        %v5143 = vadd.f32 0.0, %v5142
        %v5144 = vpop.f32.mrb[0].mxu0
        %v5145 = vpop.f32.mrb[0].mxu0
        %v5146 = vadd.f32 0.0, %v5145
        %v5147 = vpop.f32.mrb[0].mxu0
        %5148 = vmatprep.mubr.bf16.mxu0 0
        %5149 = vmatmul.mubr.bf16.gmra.mrb[0].mxu0 %v5095
        %v5150 = vpop.f32.mrb[0].mxu0
        %v5151 = vadd.f32 0.0, %v5150
        %v5152 = vpop.f32.mrb[0].mxu0
        %v5153 = vpop.f32.mrb[0].mxu0
        %v5154 = vadd.f32 0.0, %v5153
        %v5155 = vpop.f32.mrb[0].mxu0
        %5156 = vmatprep.mubr.bf16.mxu0 0
        %5157 = vmatmul.mubr.bf16.gmra.mrb[0].mxu0 %v5098
        %v5158 = vpop.f32.mrb[0].mxu0
        %v5159 = vadd.f32 0.0, %v5158
        %v5160 = vpop.f32.mrb[0].mxu0
        %v5161 = vpop.f32.mrb[0].mxu0
        %v5162 = vadd.f32 0.0, %v5161
        %v5163 = vpop.f32.mrb[0].mxu0
        %5164 = vdwg.mxu0
        %v5165 = vld [vmem:[%s12] sm:$0x1]
        %v5167 = vlaneseq
        %v5168 = vshrl.u32 %v5167, 7
        %v5169 = vsub.s32 0, %v5168
        %v5170 = vrot.slane %v5165, %v5169
        %v5172 = vmul.f32 %v5135, %v5170
        %v5173 = vmul.f32 %v5138, %v5170
        %v5174 = vmul.f32 %v5143, %v5170
        %v5175 = vmul.f32 %v5146, %v5170
        %v5176 = vmul.f32 %v5151, %v5170
        %v5177 = vmul.f32 %v5154, %v5170
        %v5178 = vmul.f32 %v5159, %v5170
        %v5179 = vmul.f32 %v5162, %v5170
        %v5180 = vld [vmem:[%s13] sm:$0x1]
        %v5182 = vlaneseq
        %v5183 = vshrl.u32 %v5182, 7
        %v5184 = vsub.s32 0, %v5183
        %v5185 = vrot.slane %v5180, %v5184
        %v5187 = vadd.f32 %v5172, %v5185
        %v5188 = vadd.f32 %v5173, %v5185
        %v5189 = vadd.f32 %v5174, %v5185
        %v5190 = vadd.f32 %v5175, %v5185
        %v5191 = vadd.f32 %v5176, %v5185
        %v5192 = vadd.f32 %v5177, %v5185
        %v5193 = vadd.f32 %v5178, %v5185
        %v5194 = vadd.f32 %v5179, %v5185
        %v5195 = vlaneseq
        %v5196 = vshrl.u32 %v5195, 7
        %v5197 = vsub.s32 0, %v5196
        %v5198 = vrot.slane %v5059, %v5197
        %v5199 = vmul.f32 %v4862, %v5198
        %v5200 = vmul.f32 %v4863, %v5198
        %v5201 = vmul.f32 %v4864, %v5198
        %v5202 = vmul.f32 %v4865, %v5198
        %v5203 = vmul.f32 %v4866, %v5198
        %v5204 = vmul.f32 %v4867, %v5198
        %v5205 = vmul.f32 %v4868, %v5198
        %v5206 = vmul.f32 %v4869, %v5198
        %v5207 = vadd.f32 %v5199, %v5187
        %v5208 = vadd.f32 %v5200, %v5188
        %v5209 = vadd.f32 %v5201, %v5189
        %v5210 = vadd.f32 %v5202, %v5190
        %v5211 = vadd.f32 %v5203, %v5191
        %v5212 = vadd.f32 %v5204, %v5192
        %v5213 = vadd.f32 %v5205, %v5193
        %v5214 = vadd.f32 %v5206, %v5194
        %5215 = vst.msk [vmem:[%s529] sm:$0xff] %vm3528, %v5207
        %5216 = vst.msk [vmem:[%s529 + $0x8] sm:$0xff] %vm3528, %v5208
        %5217 = vst.msk [vmem:[%s529 + $0x10] sm:$0xff] %vm3528, %v5209
        %5218 = vst.msk [vmem:[%s529 + $0x18] sm:$0xff] %vm3528, %v5210
        %5219 = vst.msk [vmem:[%s529 + $0x20] sm:$0xff] %vm3528, %v5211
        %5220 = vst.msk [vmem:[%s529 + $0x28] sm:$0xff] %vm3528, %v5212
        %5221 = vst.msk [vmem:[%s529 + $0x30] sm:$0xff] %vm3528, %v5213
        %5222 = vst.msk [vmem:[%s529 + $0x38] sm:$0xff] %vm3528, %v5214
        %s5223 = sand.u32 %s344, 1
        %s5224 = scalar_lea.sflag [#allocation6], %s5223
        %s5225 = sand.u32 %s344, 1
        %s5226 = smul.addr %s5225, 64
        %s5227 = scalar_lea.vmem [#allocation10], %s5226
        // Predicated region
        $region89: #{_lambda_.1} parent=75 // pred_check
          %p5228 = pneg %p354
        $region90: #{_lambda_.1} parent=75 // pred_check_branch
          %5230 = sbr.rel (%p5228) target = $region92
        $region91: #{_lambda_.1} parent=75 // pred_region
          %s5232 = ssub.s32 1024, 1024
          %5233 = vsyncadd %s5224, %s5232
          %s5234 = smul.addr %s32, 8
          %s5235 = smul.addr %s5234, 128
          %s5236 = scalar_lea.hbm %s14, %s5235
          %s5237 = sshll.u32 %s5227, 4
          %s5238 = int_to_ptr.vmem [resolvable:$true] %s5237
          %5243 = dma.vmem_to_hbm [thread:$0]  %s5238, 1024, %s5236, %s5224, 128, 128, 8
        $region92: #{_lambda_.1} parent=75 // pred_fallthru
          _
      $region76: #{_lambda_.1} parent=5 // pred_fallthru
        _
      %p5244 = scmp.le.s32.totalorder 2, %s27
      // Predicated region
      $region93: #{_lambda_.1} parent=5 // pred_check
        %p5245 = pneg %p5244
      $region94: #{_lambda_.1} parent=5 // pred_check_branch
        %5247 = sbr.rel (%p5245) target = $region96
      $region95: #{_lambda_.1} parent=5 // pred_region
        %s5248 = ssub.s32 %s27, 2
        // Predicated region
        $region97: #{_lambda_.1} parent=95 // pred_check
          %p5249 = pneg %p360
        $region98: #{_lambda_.1} parent=95 // pred_check_branch
          %5251 = sbr.rel (%p5249) target = $region100
        $region99: #{_lambda_.1} parent=95 // pred_region
          %s5252 = sand.u32 %s345, 1
          %s5253 = scalar_lea.sflag [#allocation6], %s5252
          %s5254 = sand.u32 %s345, 1
          %s5255 = smul.addr %s5254, 64
          %s5256 = scalar_lea.vmem [#allocation10], %s5255
          %5257 = dma.done %s5253, 1024
        $region100: #{_lambda_.1} parent=95 // pred_fallthru
          _
      $region96: #{_lambda_.1} parent=5 // pred_fallthru
        _
    $region6: #{_lambda_.1} parent=1 // loop_footer
      %s31 = sadd.s32 1, %s27
    $region7: #{_lambda_.1} parent=1 // loop_footer_branch
      %26 = sbr.rel target = $region3
    $region8: #{_lambda_.1} parent=1 // loop_exit
      _
    %5258 = vsyncpa [#allocation5], 1
    %s5259 = scalar_lea.sflag [#allocation5], 1
    %5260 = vsyncpa %s5259, 1
    %5261 = vsyncpa [#allocation8], 1
    %5262 = vsyncpa [#allocation6], 1
    %s5263 = scalar_lea.sflag [#allocation6], 1
    %5264 = vsyncpa %s5263, 1

</llo_original>
